<compile_context>
chip_gen: v5e
topology: v5e:2x2
jax: 0.10.0
libtpu: 0.0.40
codegen_flags: <defaults>
</compile_context>

<pallas_src>
import jax
import jax.numpy as jnp
from jax import lax
from jax.experimental import pallas as pl
from jax.experimental.pallas import tpu as pltpu

FEATURES = 22
HIDDEN = 64
HP = 128                 # hidden padded to one 128-lane tile
G = 2 * HP               # packed gates: [r|z] in lanes 0..127, [n|pad] in 128..255
NUM_LAYERS = 3
FC_PAD = 128             # fc head padded to 128 lanes (dense, unmasked stores)
BN_EPS = 1e-3

# ----------------------------------------------------------------------------
# Kernel
# ----------------------------------------------------------------------------


def gru_kernel(x_ref,
               wih0_ref, whh0_ref, bgx0_ref, bhn0_ref,
               wih1_ref, whh1_ref, bgx1_ref, bhn1_ref,
               wih2_ref, whh2_ref, bgx2_ref, bhn2_ref,
               w1_ref, b1_ref, w2_ref, b2_ref, w3_ref, b3_ref,
               out_ref,
               gx_ref):
    """x_ref: (T*Nb, 22) bf16; gx_ref: (T*Nb, 256) f32 scratch; out_ref: (Nb, 128)."""
    f32, bf16 = jnp.float32, jnp.bfloat16
    Nb = out_ref.shape[0]
    T = gx_ref.shape[0] // Nb
    unroll = min(T, 8)                    # cap unroll to bound i-mem / vreg pressure

    # ---- layer-0 input matmul for ALL timesteps in one flattened bf16 call
    # (off the serial chain; streams the MXU; bias row broadcasts implicitly).
    gx_ref[...] = jnp.dot(x_ref[...], wih0_ref[...],
                          preferred_element_type=f32) + bgx0_ref[...]

    def recurrence(whh_ref, bhn_ref, wih_next_ref=None, bgx_next_ref=None):
        """Serial GRU recurrence; optionally fuses the NEXT layer's input
        matmul into each step (independent work hides the h@whh chain)."""
        whh = whh_ref[...]                     # bf16 (HP, G)
        bhn = bhn_ref[...]                     # f32  (1, HP)
        if wih_next_ref is not None:
            wih_next = wih_next_ref[...]       # bf16 (HP, G)
            bgx_next = bgx_next_ref[...]       # f32  (1, G)

        def body(t, h):
            row = pl.multiple_of(t * Nb, 8)
            gx = gx_ref[pl.ds(row, Nb), :]                       # f32 (Nb, G)
            gh = jnp.dot(h.astype(bf16), whh,
                         preferred_element_type=f32)             # f32 (Nb, G)
            # [r|z] packed in one lane tile -> single 128-lane sigmoid (EUP)
            rz = jax.nn.sigmoid(gx[:, 0:HP] + gh[:, 0:HP])
            z = pltpu.roll(rz, HIDDEN, 1)                        # z -> lanes 0..63 (XLU)
            # r stays in lanes 0..63 of rz; its z-half multiplies zero-padded cols
            n = jnp.tanh(gx[:, HP:G] + rz * (gh[:, HP:G] + bhn))
            h_new = (1.0 - z) * n + z * h                        # padded lanes stay 0
            if wih_next_ref is not None:
                # slot t was just consumed -> overwrite in place with next layer's gx
                gx_ref[pl.ds(row, Nb), :] = jnp.dot(
                    h_new.astype(bf16), wih_next,
                    preferred_element_type=f32) + bgx_next
            return h_new

        return lax.fori_loop(0, T, body, jnp.zeros((Nb, HP), f32),
                             unroll=unroll)

    recurrence(whh0_ref, bhn0_ref, wih1_ref, bgx1_ref)   # layer 0 (+ layer-1 gx)
    recurrence(whh1_ref, bhn1_ref, wih2_ref, bgx2_ref)   # layer 1 (+ layer-2 gx)
    h_last = recurrence(whh2_ref, bhn2_ref)              # layer 2 (last h only)
    # TODO(synk): inter-layer GRU dropout (p=0.5) and fc Dropout are identity in eval.

    # ---- fc head: eval-mode BatchNorm folded into weights on host; all tiles
    # are 128-lane dense so the output store is unmasked.
    y = jnp.maximum(jnp.dot(h_last.astype(bf16), w1_ref[...],
                            preferred_element_type=f32) + b1_ref[...], 0.0)
    y = jnp.maximum(jnp.dot(y.astype(bf16), w2_ref[...],
                            preferred_element_type=f32) + b2_ref[...], 0.0)
    out_ref[...] = jnp.dot(y.astype(bf16), w3_ref[...],
                           preferred_element_type=f32) + b3_ref[...]


# ----------------------------------------------------------------------------
# Host-side parameter packing (gate-packed lane layouts, bf16 weights, BN fold)
# ----------------------------------------------------------------------------


def _pad_gru_layer(wih, whh, bih, bhh, in_dim_p):
    """Pack PyTorch-order (r,z,n) GRU mats into the [r|z],[n|pad] 256-lane layout."""
    H = HIDDEN
    in_dim = wih.shape[0]
    offs = (0, H, HP)      # packed column offsets for r, z, n
    wih_p = jnp.zeros((in_dim_p, G), jnp.float32)
    whh_p = jnp.zeros((HP, G), jnp.float32)
    for g, off in enumerate(offs):
        wih_p = wih_p.at[:in_dim, off:off + H].set(wih[:, g * H:(g + 1) * H])
        whh_p = whh_p.at[:H, off:off + H].set(whh[:, g * H:(g + 1) * H])
    # bih (all gates) + bhh (r,z) fold into the hoisted gx; bhh_n must stay
    # inside the r*(...) term (PyTorch GRU formula).
    bgx = jnp.zeros((1, G), jnp.float32)
    bgx = bgx.at[:, 0:H].set(bih[:, 0:H] + bhh[:, 0:H])
    bgx = bgx.at[:, H:2 * H].set(bih[:, H:2 * H] + bhh[:, H:2 * H])
    bgx = bgx.at[:, HP:HP + H].set(bih[:, 2 * H:3 * H])
    bhn = jnp.zeros((1, HP), jnp.float32).at[:, 0:H].set(bhh[:, 2 * H:3 * H])
    # Matmul operands -> bf16; biases are added post-matmul in f32.
    return wih_p.astype(jnp.bfloat16), whh_p.astype(jnp.bfloat16), bgx, bhn


def _fold_bn(w, b, gamma, beta, mean, var):
    """Fold eval-mode BatchNorm (incl. running stats) into the preceding Linear."""
    scale = gamma / jnp.sqrt(var + BN_EPS)
    return w * scale, (b - mean) * scale + beta


def _pad2(a, rows, cols):
    return jnp.zeros((rows, cols), jnp.float32).at[:a.shape[0], :a.shape[1]].set(a)


def gru_forward(x, params, *, batch_block=256):
    """x: (N, 22, T) float32 — mirrors the PyTorch (N, H, W) input."""
    N, F, T = x.shape
    assert F == FEATURES

    # ---- batch tiling: multiple of 8 sublanes; when possible keep >=2 grid
    # steps so the "parallel" axis shards across v7x's two TensorCores.
    Np8 = -(-N // 8) * 8
    Nb = max(8, (min(batch_block, Np8) // 8) * 8)
    if Np8 >= 16 and Nb >= Np8:
        Nb = -(-(Np8 // 2) // 8) * 8
    Np = -(-N // Nb) * Nb
    num_blocks = Np // Nb

    # ---- input: (N,F,T) -> (T,Np,F), regrouped so each grid step's (T*Nb, F)
    # slab is contiguous (no in-kernel reshapes), cast to bf16 for the MXU/DMA.
    x_tnf = jnp.transpose(x, (2, 0, 1)).astype(jnp.float32)
    if Np != N:
        x_tnf = jnp.pad(x_tnf, ((0, 0), (0, Np - N), (0, 0)))
    x_blk = (x_tnf.reshape(T, num_blocks, Nb, FEATURES)
                  .transpose(1, 0, 2, 3)
                  .reshape(num_blocks * T * Nb, FEATURES)
                  .astype(jnp.bfloat16))

    # ---- GRU weights: gate/lane packed, bf16
    packed = []
    in_pads = [FEATURES, HP, HP]
    for l in range(NUM_LAYERS):
        packed += list(_pad_gru_layer(params[f"wih{l}"], params[f"whh{l}"],
                                      params[f"bih{l}"], params[f"bhh{l}"],
                                      in_pads[l]))

    # ---- fc head: fold BN running stats + affine into the Linear weights,
    # pad everything to 128 lanes so the whole head is lane-dense.
    w1, b1 = _fold_bn(params["w1"], params["b1"], params["g1"], params["be1"],
                      params["rm1"], params["rv1"])
    w2, b2 = _fold_bn(params["w2"], params["b2"], params["g2"], params["be2"],
                      params["rm2"], params["rv2"])
    packed += [
        _pad2(w1, HP, FC_PAD).astype(jnp.bfloat16), _pad2(b1, 1, FC_PAD),
        _pad2(w2, FC_PAD, FC_PAD).astype(jnp.bfloat16), _pad2(b2, 1, FC_PAD),
        _pad2(params["w3"], FC_PAD, FC_PAD).astype(jnp.bfloat16),
        _pad2(params["b3"], 1, FC_PAD),
    ]

    weight_specs = [pl.BlockSpec(p.shape, lambda b: (0, 0)) for p in packed]

    # ---- explicit VMEM budget: scratch + double-buffered I/O + weights,
    # with headroom, capped at v7x's 64 MiB physical VMEM.
    w_bytes = sum(int(p.size) * p.dtype.itemsize for p in packed)
    vmem_need = (T * Nb * G * 4                 # gx scratch
                 + 2 * T * Nb * FEATURES * 2    # x block (double buffered, bf16)
                 + 2 * Nb * FC_PAD * 4          # out block (double buffered)
                 + 2 * w_bytes)
    vmem_limit = max(16 << 20, min(int(1.5 * vmem_need) + (4 << 20), 64 << 20))

    out = pl.pallas_call(
        gru_kernel,
        out_shape=jax.ShapeDtypeStruct((Np, FC_PAD), jnp.float32),
        grid=(num_blocks,),
        in_specs=[pl.BlockSpec((T * Nb, FEATURES), lambda b: (b, 0))]
                 + weight_specs,
        out_specs=pl.BlockSpec((Nb, FC_PAD), lambda b: (b, 0)),
        scratch_shapes=[pltpu.VMEM((T * Nb, G), jnp.float32)],
        compiler_params=pltpu.CompilerParams(
            dimension_semantics=("parallel",),
            vmem_limit_bytes=vmem_limit),
    )(x_blk, *packed)
    return out[:N, :4]


# ----------------------------------------------------------------------------
# Synthetic params + pure-JAX f32 reference
# ----------------------------------------------------------------------------


def init_params(key):
    """Deterministic synthetic params with PyTorch-style init shapes/bounds."""
    keys = iter(jax.random.split(key, 64))

    def uni(shape, lo, hi):
        return jax.random.uniform(next(keys), shape, jnp.float32, lo, hi)

    params = {}
    gb = 1.0 / (HIDDEN ** 0.5)
    in_sizes = [FEATURES, HIDDEN, HIDDEN]
    for l in range(NUM_LAYERS):
        # Stored pre-transposed as (in, 3H) / (H, 3H) for right-multiplication.
        params[f"wih{l}"] = uni((in_sizes[l], 3 * HIDDEN), -gb, gb)
        params[f"whh{l}"] = uni((HIDDEN, 3 * HIDDEN), -gb, gb)
        params[f"bih{l}"] = uni((1, 3 * HIDDEN), -gb, gb)
        params[f"bhh{l}"] = uni((1, 3 * HIDDEN), -gb, gb)

    def linear(fan_in, fan_out):
        b = 1.0 / (fan_in ** 0.5)
        return uni((fan_in, fan_out), -b, b), uni((1, fan_out), -b, b)

    params["w1"], params["b1"] = linear(HIDDEN, 54)
    params["w2"], params["b2"] = linear(54, 44)
    params["w3"], params["b3"] = linear(44, 4)
    for tag, d in (("1", 54), ("2", 44)):
        params[f"g{tag}"] = uni((1, d), 0.8, 1.2)      # BN gamma
        params[f"be{tag}"] = uni((1, d), -0.1, 0.1)    # BN beta
        params[f"rm{tag}"] = uni((1, d), -0.1, 0.1)    # BN running mean
        params[f"rv{tag}"] = uni((1, d), 0.8, 1.2)     # BN running var
    return params


def gru_ref(x, params):
    """Pure-JAX f32 reference of the same forward pass (for verification)."""
    N, F, T = x.shape
    xs = jnp.transpose(x, (2, 0, 1)).astype(jnp.float32)  # (T, N, F)
    H = HIDDEN

    def cell(x_t, h, wih, whh, bih, bhh):
        gx = x_t @ wih + bih
        gh = h @ whh + bhh
        r = jax.nn.sigmoid(gx[:, :H] + gh[:, :H])
        z = jax.nn.sigmoid(gx[:, H:2 * H] + gh[:, H:2 * H])
        n = jnp.tanh(gx[:, 2 * H:] + r * gh[:, 2 * H:])
        return (1.0 - z) * n + z * h

    seq = xs
    for l in range(NUM_LAYERS):
        h = jnp.zeros((N, H), jnp.float32)
        outs = []
        for t in range(T):
            h = cell(seq[t], h, params[f"wih{l}"], params[f"whh{l}"],
                     params[f"bih{l}"], params[f"bhh{l}"])
            outs.append(h)
        seq = jnp.stack(outs, axis=0)
    h_last = seq[-1]

    def bn(y, g, be, m, v):
        return (y - m) / jnp.sqrt(v + BN_EPS) * g + be

    y = jnp.maximum(bn(h_last @ params["w1"] + params["b1"],
                       params["g1"], params["be1"], params["rm1"], params["rv1"]), 0.0)
    y = jnp.maximum(bn(y @ params["w2"] + params["b2"],
                       params["g2"], params["be2"], params["rm2"], params["rv2"]), 0.0)
    return y @ params["w3"] + params["b3"]


if __name__ == "__main__":
    key = jax.random.PRNGKey(0)
    k_x, k_p = jax.random.split(key)

    N, T = 2, 8
    x = jax.random.normal(k_x, (N, FEATURES, T), dtype=jnp.float32)  # (N, 22, T)
    params = init_params(k_p)

    out = jax.block_until_ready(gru_forward(x, params))
    ref = gru_ref(x, params)

    assert out.shape == (N, 4), out.shape
    # bf16 MXU operands (f32 accumulation / gate math) -> bf16-level tolerance.
    assert jnp.allclose(out, ref, rtol=3e-2, atol=3e-2), (
        out, ref, jnp.max(jnp.abs(out - ref)))

    print("KERNEL_OK")
</pallas_src>

<mosaic_0001>
module attributes {stable_mosaic.version = 11 : i64} {
  func.func @gru_kernel(%arg0: i32, %arg1: memref<64x22xbf16, #tpu.memory_space<vmem>>, %arg2: memref<22x256xbf16, #tpu.memory_space<vmem>>, %arg3: memref<128x256xbf16, #tpu.memory_space<vmem>>, %arg4: memref<1x256xf32, #tpu.memory_space<vmem>>, %arg5: memref<1x128xf32, #tpu.memory_space<vmem>>, %arg6: memref<128x256xbf16, #tpu.memory_space<vmem>>, %arg7: memref<128x256xbf16, #tpu.memory_space<vmem>>, %arg8: memref<1x256xf32, #tpu.memory_space<vmem>>, %arg9: memref<1x128xf32, #tpu.memory_space<vmem>>, %arg10: memref<128x256xbf16, #tpu.memory_space<vmem>>, %arg11: memref<128x256xbf16, #tpu.memory_space<vmem>>, %arg12: memref<1x256xf32, #tpu.memory_space<vmem>>, %arg13: memref<1x128xf32, #tpu.memory_space<vmem>>, %arg14: memref<128x128xbf16, #tpu.memory_space<vmem>>, %arg15: memref<1x128xf32, #tpu.memory_space<vmem>>, %arg16: memref<128x128xbf16, #tpu.memory_space<vmem>>, %arg17: memref<1x128xf32, #tpu.memory_space<vmem>>, %arg18: memref<128x128xbf16, #tpu.memory_space<vmem>>, %arg19: memref<1x128xf32, #tpu.memory_space<vmem>>, %arg20: memref<8x128xf32, #tpu.memory_space<vmem>>, %arg21: memref<64x256xf32, #tpu.memory_space<vmem>>) attributes {dimension_semantics = [#tpu.dimension_semantics<parallel>], iteration_bounds = array<i64: 1>, scalar_prefetch = 0 : i64, scratch_operands = 1 : i64, tpu.core_type = #tpu.core_type<tc>, window_params = [{transform_indices = @transform_0, window_bounds = array<i64: 64, 22>}, {pipeline_mode = #tpu.pipeline_mode<synchronous>, transform_indices = @transform_1, window_bounds = array<i64: 22, 256>}, {pipeline_mode = #tpu.pipeline_mode<synchronous>, transform_indices = @transform_2, window_bounds = array<i64: 128, 256>}, {pipeline_mode = #tpu.pipeline_mode<synchronous>, transform_indices = @transform_3, window_bounds = array<i64: 1, 256>}, {pipeline_mode = #tpu.pipeline_mode<synchronous>, transform_indices = @transform_4, window_bounds = array<i64: 1, 128>}, {pipeline_mode = #tpu.pipeline_mode<synchronous>, transform_indices = @transform_5, window_bounds = array<i64: 128, 256>}, {pipeline_mode = #tpu.pipeline_mode<synchronous>, transform_indices = @transform_6, window_bounds = array<i64: 128, 256>}, {pipeline_mode = #tpu.pipeline_mode<synchronous>, transform_indices = @transform_7, window_bounds = array<i64: 1, 256>}, {pipeline_mode = #tpu.pipeline_mode<synchronous>, transform_indices = @transform_8, window_bounds = array<i64: 1, 128>}, {pipeline_mode = #tpu.pipeline_mode<synchronous>, transform_indices = @transform_9, window_bounds = array<i64: 128, 256>}, {pipeline_mode = #tpu.pipeline_mode<synchronous>, transform_indices = @transform_10, window_bounds = array<i64: 128, 256>}, {pipeline_mode = #tpu.pipeline_mode<synchronous>, transform_indices = @transform_11, window_bounds = array<i64: 1, 256>}, {pipeline_mode = #tpu.pipeline_mode<synchronous>, transform_indices = @transform_12, window_bounds = array<i64: 1, 128>}, {pipeline_mode = #tpu.pipeline_mode<synchronous>, transform_indices = @transform_13, window_bounds = array<i64: 128, 128>}, {pipeline_mode = #tpu.pipeline_mode<synchronous>, transform_indices = @transform_14, window_bounds = array<i64: 1, 128>}, {pipeline_mode = #tpu.pipeline_mode<synchronous>, transform_indices = @transform_15, window_bounds = array<i64: 128, 128>}, {pipeline_mode = #tpu.pipeline_mode<synchronous>, transform_indices = @transform_16, window_bounds = array<i64: 1, 128>}, {pipeline_mode = #tpu.pipeline_mode<synchronous>, transform_indices = @transform_17, window_bounds = array<i64: 128, 128>}, {pipeline_mode = #tpu.pipeline_mode<synchronous>, transform_indices = @transform_18, window_bounds = array<i64: 1, 128>}, {transform_indices = @transform_19, window_bounds = array<i64: 8, 128>}]} {
    %c0 = arith.constant 0 : index
    %c0_0 = arith.constant 0 : index
    %0 = vector.load %arg1[%c0, %c0_0] : memref<64x22xbf16, #tpu.memory_space<vmem>>, vector<64x22xbf16>
    %c0_1 = arith.constant 0 : index
    %c0_2 = arith.constant 0 : index
    %1 = vector.load %arg2[%c0_1, %c0_2] : memref<22x256xbf16, #tpu.memory_space<vmem>>, vector<22x256xbf16>
    %cst = arith.constant dense<0.000000e+00> : vector<64x256xf32>
    %2 = tpu.matmul %0, %1, %cst {dimension_numbers = #tpu.dot_dimension_numbers<[1], [0], [0], [1], [0, 0, 1, 1], [], []>} : vector<64x22xbf16>, vector<22x256xbf16>, vector<64x256xf32> -> vector<64x256xf32>
    %c0_3 = arith.constant 0 : index
    %c0_4 = arith.constant 0 : index
    %3 = vector.load %arg4[%c0_3, %c0_4] : memref<1x256xf32, #tpu.memory_space<vmem>>, vector<1x256xf32>
    %4 = vector.broadcast %3 : vector<1x256xf32> to vector<64x256xf32>
    %5 = arith.addf %2, %4 : vector<64x256xf32>
    %c0_5 = arith.constant 0 : index
    %c0_6 = arith.constant 0 : index
    %6 = vector.load %arg21[%c0_5, %c0_6] : memref<64x256xf32, #tpu.memory_space<vmem>>, vector<64x256xf32>
    tpu.vector_store %arg21[%c0_5, %c0_6], %5 {strides = array<i32>} : memref<64x256xf32, #tpu.memory_space<vmem>>, vector<64x256xf32>,
    %c0_7 = arith.constant 0 : index
    %c0_8 = arith.constant 0 : index
    %7 = vector.load %arg3[%c0_7, %c0_8] : memref<128x256xbf16, #tpu.memory_space<vmem>>, vector<128x256xbf16>
    %c0_9 = arith.constant 0 : index
    %c0_10 = arith.constant 0 : index
    %8 = vector.load %arg5[%c0_9, %c0_10] : memref<1x128xf32, #tpu.memory_space<vmem>>, vector<1x128xf32>
    %c0_11 = arith.constant 0 : index
    %c0_12 = arith.constant 0 : index
    %9 = vector.load %arg6[%c0_11, %c0_12] : memref<128x256xbf16, #tpu.memory_space<vmem>>, vector<128x256xbf16>
    %c0_13 = arith.constant 0 : index
    %c0_14 = arith.constant 0 : index
    %10 = vector.load %arg8[%c0_13, %c0_14] : memref<1x256xf32, #tpu.memory_space<vmem>>, vector<1x256xf32>
    %cst_15 = arith.constant 0.000000e+00 : f32
    %11 = vector.broadcast %cst_15 : f32 to vector<8x128xf32>
    %c0_i32 = arith.constant 0 : i32
    %c8_i32 = arith.constant 8 : i32
    %12 = arith.muli %c0_i32, %c8_i32 : i32
    %13 = tpu.assume_multiple %12, 8 : i32
    %14 = arith.index_cast %13 : i32 to index
    %c0_16 = arith.constant 0 : index
    %15 = vector.load %arg21[%14, %c0_16] : memref<64x256xf32, #tpu.memory_space<vmem>>, vector<8x256xf32>
    %16 = arith.truncf %11 : vector<8x128xf32> to vector<8x128xbf16>
    %cst_17 = arith.constant dense<0.000000e+00> : vector<8x256xf32>
    %17 = tpu.matmul %16, %7, %cst_17 {dimension_numbers = #tpu.dot_dimension_numbers<[1], [0], [0], [1], [0, 0, 1, 1], [], []>} : vector<8x128xbf16>, vector<128x256xbf16>, vector<8x256xf32> -> vector<8x256xf32>
    %18 = vector.extract_strided_slice %15 {offsets = [0, 0], sizes = [8, 128], strides = [1, 1]} : vector<8x256xf32> to vector<8x128xf32>
    %19 = vector.extract_strided_slice %17 {offsets = [0, 0], sizes = [8, 128], strides = [1, 1]} : vector<8x256xf32> to vector<8x128xf32>
    %20 = arith.addf %18, %19 : vector<8x128xf32>
    %21 = arith.negf %20 : vector<8x128xf32>
    %22 = math.exp %21 : vector<8x128xf32>
    %cst_18 = arith.constant 1.000000e+00 : f32
    %23 = vector.broadcast %cst_18 : f32 to vector<8x128xf32>
    %24 = arith.addf %23, %22 : vector<8x128xf32>
    %25 = arith.divf %23, %24 : vector<8x128xf32>
    %c64_i32 = arith.constant 64 : i32
    %26 = tpu.dynamic_rotate %25 by %c64_i32 dim 1 : vector<8x128xf32>, i32 -> vector<8x128xf32>
    %27 = vector.extract_strided_slice %15 {offsets = [0, 128], sizes = [8, 128], strides = [1, 1]} : vector<8x256xf32> to vector<8x128xf32>
    %28 = vector.extract_strided_slice %17 {offsets = [0, 128], sizes = [8, 128], strides = [1, 1]} : vector<8x256xf32> to vector<8x128xf32>
    %29 = vector.broadcast %8 : vector<1x128xf32> to vector<8x128xf32>
    %30 = arith.addf %28, %29 : vector<8x128xf32>
    %31 = arith.mulf %25, %30 : vector<8x128xf32>
    %32 = arith.addf %27, %31 : vector<8x128xf32>
    %33 = math.tanh %32 : vector<8x128xf32>
    %cst_19 = arith.constant 1.000000e+00 : f32
    %34 = vector.broadcast %cst_19 : f32 to vector<8x128xf32>
    %35 = arith.subf %34, %26 : vector<8x128xf32>
    %36 = arith.mulf %35, %33 : vector<8x128xf32>
    %37 = arith.mulf %26, %11 : vector<8x128xf32>
    %38 = arith.addf %36, %37 : vector<8x128xf32>
    %39 = arith.truncf %38 : vector<8x128xf32> to vector<8x128xbf16>
    %cst_20 = arith.constant dense<0.000000e+00> : vector<8x256xf32>
    %40 = tpu.matmul %39, %9, %cst_20 {dimension_numbers = #tpu.dot_dimension_numbers<[1], [0], [0], [1], [0, 0, 1, 1], [], []>} : vector<8x128xbf16>, vector<128x256xbf16>, vector<8x256xf32> -> vector<8x256xf32>
    %41 = vector.broadcast %10 : vector<1x256xf32> to vector<8x256xf32>
    %42 = arith.addf %40, %41 : vector<8x256xf32>
    %43 = arith.index_cast %13 : i32 to index
    %c0_21 = arith.constant 0 : index
    %44 = vector.load %arg21[%43, %c0_21] : memref<64x256xf32, #tpu.memory_space<vmem>>, vector<8x256xf32>
    tpu.vector_store %arg21[%43, %c0_21], %42 {strides = array<i32>} : memref<64x256xf32, #tpu.memory_space<vmem>>, vector<8x256xf32>,
    %c1_i32 = arith.constant 1 : i32
    %c8_i32_22 = arith.constant 8 : i32
    %45 = arith.muli %c1_i32, %c8_i32_22 : i32
    %46 = tpu.assume_multiple %45, 8 : i32
    %47 = arith.index_cast %46 : i32 to index
    %c0_23 = arith.constant 0 : index
    %48 = vector.load %arg21[%47, %c0_23] : memref<64x256xf32, #tpu.memory_space<vmem>>, vector<8x256xf32>
    %49 = arith.truncf %38 : vector<8x128xf32> to vector<8x128xbf16>
    %cst_24 = arith.constant dense<0.000000e+00> : vector<8x256xf32>
    %50 = tpu.matmul %49, %7, %cst_24 {dimension_numbers = #tpu.dot_dimension_numbers<[1], [0], [0], [1], [0, 0, 1, 1], [], []>} : vector<8x128xbf16>, vector<128x256xbf16>, vector<8x256xf32> -> vector<8x256xf32>
    %51 = vector.extract_strided_slice %48 {offsets = [0, 0], sizes = [8, 128], strides = [1, 1]} : vector<8x256xf32> to vector<8x128xf32>
    %52 = vector.extract_strided_slice %50 {offsets = [0, 0], sizes = [8, 128], strides = [1, 1]} : vector<8x256xf32> to vector<8x128xf32>
    %53 = arith.addf %51, %52 : vector<8x128xf32>
    %54 = arith.negf %53 : vector<8x128xf32>
    %55 = math.exp %54 : vector<8x128xf32>
    %cst_25 = arith.constant 1.000000e+00 : f32
    %56 = vector.broadcast %cst_25 : f32 to vector<8x128xf32>
    %57 = arith.addf %56, %55 : vector<8x128xf32>
    %58 = arith.divf %56, %57 : vector<8x128xf32>
    %c64_i32_26 = arith.constant 64 : i32
    %59 = tpu.dynamic_rotate %58 by %c64_i32_26 dim 1 : vector<8x128xf32>, i32 -> vector<8x128xf32>
    %60 = vector.extract_strided_slice %48 {offsets = [0, 128], sizes = [8, 128], strides = [1, 1]} : vector<8x256xf32> to vector<8x128xf32>
    %61 = vector.extract_strided_slice %50 {offsets = [0, 128], sizes = [8, 128], strides = [1, 1]} : vector<8x256xf32> to vector<8x128xf32>
    %62 = vector.broadcast %8 : vector<1x128xf32> to vector<8x128xf32>
    %63 = arith.addf %61, %62 : vector<8x128xf32>
    %64 = arith.mulf %58, %63 : vector<8x128xf32>
    %65 = arith.addf %60, %64 : vector<8x128xf32>
    %66 = math.tanh %65 : vector<8x128xf32>
    %cst_27 = arith.constant 1.000000e+00 : f32
    %67 = vector.broadcast %cst_27 : f32 to vector<8x128xf32>
    %68 = arith.subf %67, %59 : vector<8x128xf32>
    %69 = arith.mulf %68, %66 : vector<8x128xf32>
    %70 = arith.mulf %59, %38 : vector<8x128xf32>
    %71 = arith.addf %69, %70 : vector<8x128xf32>
    %72 = arith.truncf %71 : vector<8x128xf32> to vector<8x128xbf16>
    %cst_28 = arith.constant dense<0.000000e+00> : vector<8x256xf32>
    %73 = tpu.matmul %72, %9, %cst_28 {dimension_numbers = #tpu.dot_dimension_numbers<[1], [0], [0], [1], [0, 0, 1, 1], [], []>} : vector<8x128xbf16>, vector<128x256xbf16>, vector<8x256xf32> -> vector<8x256xf32>
    %74 = vector.broadcast %10 : vector<1x256xf32> to vector<8x256xf32>
    %75 = arith.addf %73, %74 : vector<8x256xf32>
    %76 = arith.index_cast %46 : i32 to index
    %c0_29 = arith.constant 0 : index
    %77 = vector.load %arg21[%76, %c0_29] : memref<64x256xf32, #tpu.memory_space<vmem>>, vector<8x256xf32>
    tpu.vector_store %arg21[%76, %c0_29], %75 {strides = array<i32>} : memref<64x256xf32, #tpu.memory_space<vmem>>, vector<8x256xf32>,
    %c2_i32 = arith.constant 2 : i32
    %c8_i32_30 = arith.constant 8 : i32
    %78 = arith.muli %c2_i32, %c8_i32_30 : i32
    %79 = tpu.assume_multiple %78, 8 : i32
    %80 = arith.index_cast %79 : i32 to index
    %c0_31 = arith.constant 0 : index
    %81 = vector.load %arg21[%80, %c0_31] : memref<64x256xf32, #tpu.memory_space<vmem>>, vector<8x256xf32>
    %82 = arith.truncf %71 : vector<8x128xf32> to vector<8x128xbf16>
    %cst_32 = arith.constant dense<0.000000e+00> : vector<8x256xf32>
    %83 = tpu.matmul %82, %7, %cst_32 {dimension_numbers = #tpu.dot_dimension_numbers<[1], [0], [0], [1], [0, 0, 1, 1], [], []>} : vector<8x128xbf16>, vector<128x256xbf16>, vector<8x256xf32> -> vector<8x256xf32>
    %84 = vector.extract_strided_slice %81 {offsets = [0, 0], sizes = [8, 128], strides = [1, 1]} : vector<8x256xf32> to vector<8x128xf32>
    %85 = vector.extract_strided_slice %83 {offsets = [0, 0], sizes = [8, 128], strides = [1, 1]} : vector<8x256xf32> to vector<8x128xf32>
    %86 = arith.addf %84, %85 : vector<8x128xf32>
    %87 = arith.negf %86 : vector<8x128xf32>
    %88 = math.exp %87 : vector<8x128xf32>
    %cst_33 = arith.constant 1.000000e+00 : f32
    %89 = vector.broadcast %cst_33 : f32 to vector<8x128xf32>
    %90 = arith.addf %89, %88 : vector<8x128xf32>
    %91 = arith.divf %89, %90 : vector<8x128xf32>
    %c64_i32_34 = arith.constant 64 : i32
    %92 = tpu.dynamic_rotate %91 by %c64_i32_34 dim 1 : vector<8x128xf32>, i32 -> vector<8x128xf32>
    %93 = vector.extract_strided_slice %81 {offsets = [0, 128], sizes = [8, 128], strides = [1, 1]} : vector<8x256xf32> to vector<8x128xf32>
    %94 = vector.extract_strided_slice %83 {offsets = [0, 128], sizes = [8, 128], strides = [1, 1]} : vector<8x256xf32> to vector<8x128xf32>
    %95 = vector.broadcast %8 : vector<1x128xf32> to vector<8x128xf32>
    %96 = arith.addf %94, %95 : vector<8x128xf32>
    %97 = arith.mulf %91, %96 : vector<8x128xf32>
    %98 = arith.addf %93, %97 : vector<8x128xf32>
    %99 = math.tanh %98 : vector<8x128xf32>
    %cst_35 = arith.constant 1.000000e+00 : f32
    %100 = vector.broadcast %cst_35 : f32 to vector<8x128xf32>
    %101 = arith.subf %100, %92 : vector<8x128xf32>
    %102 = arith.mulf %101, %99 : vector<8x128xf32>
    %103 = arith.mulf %92, %71 : vector<8x128xf32>
    %104 = arith.addf %102, %103 : vector<8x128xf32>
    %105 = arith.truncf %104 : vector<8x128xf32> to vector<8x128xbf16>
    %cst_36 = arith.constant dense<0.000000e+00> : vector<8x256xf32>
    %106 = tpu.matmul %105, %9, %cst_36 {dimension_numbers = #tpu.dot_dimension_numbers<[1], [0], [0], [1], [0, 0, 1, 1], [], []>} : vector<8x128xbf16>, vector<128x256xbf16>, vector<8x256xf32> -> vector<8x256xf32>
    %107 = vector.broadcast %10 : vector<1x256xf32> to vector<8x256xf32>
    %108 = arith.addf %106, %107 : vector<8x256xf32>
    %109 = arith.index_cast %79 : i32 to index
    %c0_37 = arith.constant 0 : index
    %110 = vector.load %arg21[%109, %c0_37] : memref<64x256xf32, #tpu.memory_space<vmem>>, vector<8x256xf32>
    tpu.vector_store %arg21[%109, %c0_37], %108 {strides = array<i32>} : memref<64x256xf32, #tpu.memory_space<vmem>>, vector<8x256xf32>,
    %c3_i32 = arith.constant 3 : i32
    %c8_i32_38 = arith.constant 8 : i32
    %111 = arith.muli %c3_i32, %c8_i32_38 : i32
    %112 = tpu.assume_multiple %111, 8 : i32
    %113 = arith.index_cast %112 : i32 to index
    %c0_39 = arith.constant 0 : index
    %114 = vector.load %arg21[%113, %c0_39] : memref<64x256xf32, #tpu.memory_space<vmem>>, vector<8x256xf32>
    %115 = arith.truncf %104 : vector<8x128xf32> to vector<8x128xbf16>
    %cst_40 = arith.constant dense<0.000000e+00> : vector<8x256xf32>
    %116 = tpu.matmul %115, %7, %cst_40 {dimension_numbers = #tpu.dot_dimension_numbers<[1], [0], [0], [1], [0, 0, 1, 1], [], []>} : vector<8x128xbf16>, vector<128x256xbf16>, vector<8x256xf32> -> vector<8x256xf32>
    %117 = vector.extract_strided_slice %114 {offsets = [0, 0], sizes = [8, 128], strides = [1, 1]} : vector<8x256xf32> to vector<8x128xf32>
    %118 = vector.extract_strided_slice %116 {offsets = [0, 0], sizes = [8, 128], strides = [1, 1]} : vector<8x256xf32> to vector<8x128xf32>
    %119 = arith.addf %117, %118 : vector<8x128xf32>
    %120 = arith.negf %119 : vector<8x128xf32>
    %121 = math.exp %120 : vector<8x128xf32>
    %cst_41 = arith.constant 1.000000e+00 : f32
    %122 = vector.broadcast %cst_41 : f32 to vector<8x128xf32>
    %123 = arith.addf %122, %121 : vector<8x128xf32>
    %124 = arith.divf %122, %123 : vector<8x128xf32>
    %c64_i32_42 = arith.constant 64 : i32
    %125 = tpu.dynamic_rotate %124 by %c64_i32_42 dim 1 : vector<8x128xf32>, i32 -> vector<8x128xf32>
    %126 = vector.extract_strided_slice %114 {offsets = [0, 128], sizes = [8, 128], strides = [1, 1]} : vector<8x256xf32> to vector<8x128xf32>
    %127 = vector.extract_strided_slice %116 {offsets = [0, 128], sizes = [8, 128], strides = [1, 1]} : vector<8x256xf32> to vector<8x128xf32>
    %128 = vector.broadcast %8 : vector<1x128xf32> to vector<8x128xf32>
    %129 = arith.addf %127, %128 : vector<8x128xf32>
    %130 = arith.mulf %124, %129 : vector<8x128xf32>
    %131 = arith.addf %126, %130 : vector<8x128xf32>
    %132 = math.tanh %131 : vector<8x128xf32>
    %cst_43 = arith.constant 1.000000e+00 : f32
    %133 = vector.broadcast %cst_43 : f32 to vector<8x128xf32>
    %134 = arith.subf %133, %125 : vector<8x128xf32>
    %135 = arith.mulf %134, %132 : vector<8x128xf32>
    %136 = arith.mulf %125, %104 : vector<8x128xf32>
    %137 = arith.addf %135, %136 : vector<8x128xf32>
    %138 = arith.truncf %137 : vector<8x128xf32> to vector<8x128xbf16>
    %cst_44 = arith.constant dense<0.000000e+00> : vector<8x256xf32>
    %139 = tpu.matmul %138, %9, %cst_44 {dimension_numbers = #tpu.dot_dimension_numbers<[1], [0], [0], [1], [0, 0, 1, 1], [], []>} : vector<8x128xbf16>, vector<128x256xbf16>, vector<8x256xf32> -> vector<8x256xf32>
    %140 = vector.broadcast %10 : vector<1x256xf32> to vector<8x256xf32>
    %141 = arith.addf %139, %140 : vector<8x256xf32>
    %142 = arith.index_cast %112 : i32 to index
    %c0_45 = arith.constant 0 : index
    %143 = vector.load %arg21[%142, %c0_45] : memref<64x256xf32, #tpu.memory_space<vmem>>, vector<8x256xf32>
    tpu.vector_store %arg21[%142, %c0_45], %141 {strides = array<i32>} : memref<64x256xf32, #tpu.memory_space<vmem>>, vector<8x256xf32>,
    %c4_i32 = arith.constant 4 : i32
    %c8_i32_46 = arith.constant 8 : i32
    %144 = arith.muli %c4_i32, %c8_i32_46 : i32
    %145 = tpu.assume_multiple %144, 8 : i32
    %146 = arith.index_cast %145 : i32 to index
    %c0_47 = arith.constant 0 : index
    %147 = vector.load %arg21[%146, %c0_47] : memref<64x256xf32, #tpu.memory_space<vmem>>, vector<8x256xf32>
    %148 = arith.truncf %137 : vector<8x128xf32> to vector<8x128xbf16>
    %cst_48 = arith.constant dense<0.000000e+00> : vector<8x256xf32>
    %149 = tpu.matmul %148, %7, %cst_48 {dimension_numbers = #tpu.dot_dimension_numbers<[1], [0], [0], [1], [0, 0, 1, 1], [], []>} : vector<8x128xbf16>, vector<128x256xbf16>, vector<8x256xf32> -> vector<8x256xf32>
    %150 = vector.extract_strided_slice %147 {offsets = [0, 0], sizes = [8, 128], strides = [1, 1]} : vector<8x256xf32> to vector<8x128xf32>
    %151 = vector.extract_strided_slice %149 {offsets = [0, 0], sizes = [8, 128], strides = [1, 1]} : vector<8x256xf32> to vector<8x128xf32>
    %152 = arith.addf %150, %151 : vector<8x128xf32>
    %153 = arith.negf %152 : vector<8x128xf32>
    %154 = math.exp %153 : vector<8x128xf32>
    %cst_49 = arith.constant 1.000000e+00 : f32
    %155 = vector.broadcast %cst_49 : f32 to vector<8x128xf32>
    %156 = arith.addf %155, %154 : vector<8x128xf32>
    %157 = arith.divf %155, %156 : vector<8x128xf32>
    %c64_i32_50 = arith.constant 64 : i32
    %158 = tpu.dynamic_rotate %157 by %c64_i32_50 dim 1 : vector<8x128xf32>, i32 -> vector<8x128xf32>
    %159 = vector.extract_strided_slice %147 {offsets = [0, 128], sizes = [8, 128], strides = [1, 1]} : vector<8x256xf32> to vector<8x128xf32>
    %160 = vector.extract_strided_slice %149 {offsets = [0, 128], sizes = [8, 128], strides = [1, 1]} : vector<8x256xf32> to vector<8x128xf32>
    %161 = vector.broadcast %8 : vector<1x128xf32> to vector<8x128xf32>
    %162 = arith.addf %160, %161 : vector<8x128xf32>
    %163 = arith.mulf %157, %162 : vector<8x128xf32>
    %164 = arith.addf %159, %163 : vector<8x128xf32>
    %165 = math.tanh %164 : vector<8x128xf32>
    %cst_51 = arith.constant 1.000000e+00 : f32
    %166 = vector.broadcast %cst_51 : f32 to vector<8x128xf32>
    %167 = arith.subf %166, %158 : vector<8x128xf32>
    %168 = arith.mulf %167, %165 : vector<8x128xf32>
    %169 = arith.mulf %158, %137 : vector<8x128xf32>
    %170 = arith.addf %168, %169 : vector<8x128xf32>
    %171 = arith.truncf %170 : vector<8x128xf32> to vector<8x128xbf16>
    %cst_52 = arith.constant dense<0.000000e+00> : vector<8x256xf32>
    %172 = tpu.matmul %171, %9, %cst_52 {dimension_numbers = #tpu.dot_dimension_numbers<[1], [0], [0], [1], [0, 0, 1, 1], [], []>} : vector<8x128xbf16>, vector<128x256xbf16>, vector<8x256xf32> -> vector<8x256xf32>
    %173 = vector.broadcast %10 : vector<1x256xf32> to vector<8x256xf32>
    %174 = arith.addf %172, %173 : vector<8x256xf32>
    %175 = arith.index_cast %145 : i32 to index
    %c0_53 = arith.constant 0 : index
    %176 = vector.load %arg21[%175, %c0_53] : memref<64x256xf32, #tpu.memory_space<vmem>>, vector<8x256xf32>
    tpu.vector_store %arg21[%175, %c0_53], %174 {strides = array<i32>} : memref<64x256xf32, #tpu.memory_space<vmem>>, vector<8x256xf32>,
    %c5_i32 = arith.constant 5 : i32
    %c8_i32_54 = arith.constant 8 : i32
    %177 = arith.muli %c5_i32, %c8_i32_54 : i32
    %178 = tpu.assume_multiple %177, 8 : i32
    %179 = arith.index_cast %178 : i32 to index
    %c0_55 = arith.constant 0 : index
    %180 = vector.load %arg21[%179, %c0_55] : memref<64x256xf32, #tpu.memory_space<vmem>>, vector<8x256xf32>
    %181 = arith.truncf %170 : vector<8x128xf32> to vector<8x128xbf16>
    %cst_56 = arith.constant dense<0.000000e+00> : vector<8x256xf32>
    %182 = tpu.matmul %181, %7, %cst_56 {dimension_numbers = #tpu.dot_dimension_numbers<[1], [0], [0], [1], [0, 0, 1, 1], [], []>} : vector<8x128xbf16>, vector<128x256xbf16>, vector<8x256xf32> -> vector<8x256xf32>
    %183 = vector.extract_strided_slice %180 {offsets = [0, 0], sizes = [8, 128], strides = [1, 1]} : vector<8x256xf32> to vector<8x128xf32>
    %184 = vector.extract_strided_slice %182 {offsets = [0, 0], sizes = [8, 128], strides = [1, 1]} : vector<8x256xf32> to vector<8x128xf32>
    %185 = arith.addf %183, %184 : vector<8x128xf32>
    %186 = arith.negf %185 : vector<8x128xf32>
    %187 = math.exp %186 : vector<8x128xf32>
    %cst_57 = arith.constant 1.000000e+00 : f32
    %188 = vector.broadcast %cst_57 : f32 to vector<8x128xf32>
    %189 = arith.addf %188, %187 : vector<8x128xf32>
    %190 = arith.divf %188, %189 : vector<8x128xf32>
    %c64_i32_58 = arith.constant 64 : i32
    %191 = tpu.dynamic_rotate %190 by %c64_i32_58 dim 1 : vector<8x128xf32>, i32 -> vector<8x128xf32>
    %192 = vector.extract_strided_slice %180 {offsets = [0, 128], sizes = [8, 128], strides = [1, 1]} : vector<8x256xf32> to vector<8x128xf32>
    %193 = vector.extract_strided_slice %182 {offsets = [0, 128], sizes = [8, 128], strides = [1, 1]} : vector<8x256xf32> to vector<8x128xf32>
    %194 = vector.broadcast %8 : vector<1x128xf32> to vector<8x128xf32>
    %195 = arith.addf %193, %194 : vector<8x128xf32>
    %196 = arith.mulf %190, %195 : vector<8x128xf32>
    %197 = arith.addf %192, %196 : vector<8x128xf32>
    %198 = math.tanh %197 : vector<8x128xf32>
    %cst_59 = arith.constant 1.000000e+00 : f32
    %199 = vector.broadcast %cst_59 : f32 to vector<8x128xf32>
    %200 = arith.subf %199, %191 : vector<8x128xf32>
    %201 = arith.mulf %200, %198 : vector<8x128xf32>
    %202 = arith.mulf %191, %170 : vector<8x128xf32>
    %203 = arith.addf %201, %202 : vector<8x128xf32>
    %204 = arith.truncf %203 : vector<8x128xf32> to vector<8x128xbf16>
    %cst_60 = arith.constant dense<0.000000e+00> : vector<8x256xf32>
    %205 = tpu.matmul %204, %9, %cst_60 {dimension_numbers = #tpu.dot_dimension_numbers<[1], [0], [0], [1], [0, 0, 1, 1], [], []>} : vector<8x128xbf16>, vector<128x256xbf16>, vector<8x256xf32> -> vector<8x256xf32>
    %206 = vector.broadcast %10 : vector<1x256xf32> to vector<8x256xf32>
    %207 = arith.addf %205, %206 : vector<8x256xf32>
    %208 = arith.index_cast %178 : i32 to index
    %c0_61 = arith.constant 0 : index
    %209 = vector.load %arg21[%208, %c0_61] : memref<64x256xf32, #tpu.memory_space<vmem>>, vector<8x256xf32>
    tpu.vector_store %arg21[%208, %c0_61], %207 {strides = array<i32>} : memref<64x256xf32, #tpu.memory_space<vmem>>, vector<8x256xf32>,
    %c6_i32 = arith.constant 6 : i32
    %c8_i32_62 = arith.constant 8 : i32
    %210 = arith.muli %c6_i32, %c8_i32_62 : i32
    %211 = tpu.assume_multiple %210, 8 : i32
    %212 = arith.index_cast %211 : i32 to index
    %c0_63 = arith.constant 0 : index
    %213 = vector.load %arg21[%212, %c0_63] : memref<64x256xf32, #tpu.memory_space<vmem>>, vector<8x256xf32>
    %214 = arith.truncf %203 : vector<8x128xf32> to vector<8x128xbf16>
    %cst_64 = arith.constant dense<0.000000e+00> : vector<8x256xf32>
    %215 = tpu.matmul %214, %7, %cst_64 {dimension_numbers = #tpu.dot_dimension_numbers<[1], [0], [0], [1], [0, 0, 1, 1], [], []>} : vector<8x128xbf16>, vector<128x256xbf16>, vector<8x256xf32> -> vector<8x256xf32>
    %216 = vector.extract_strided_slice %213 {offsets = [0, 0], sizes = [8, 128], strides = [1, 1]} : vector<8x256xf32> to vector<8x128xf32>
    %217 = vector.extract_strided_slice %215 {offsets = [0, 0], sizes = [8, 128], strides = [1, 1]} : vector<8x256xf32> to vector<8x128xf32>
    %218 = arith.addf %216, %217 : vector<8x128xf32>
    %219 = arith.negf %218 : vector<8x128xf32>
    %220 = math.exp %219 : vector<8x128xf32>
    %cst_65 = arith.constant 1.000000e+00 : f32
    %221 = vector.broadcast %cst_65 : f32 to vector<8x128xf32>
    %222 = arith.addf %221, %220 : vector<8x128xf32>
    %223 = arith.divf %221, %222 : vector<8x128xf32>
    %c64_i32_66 = arith.constant 64 : i32
    %224 = tpu.dynamic_rotate %223 by %c64_i32_66 dim 1 : vector<8x128xf32>, i32 -> vector<8x128xf32>
    %225 = vector.extract_strided_slice %213 {offsets = [0, 128], sizes = [8, 128], strides = [1, 1]} : vector<8x256xf32> to vector<8x128xf32>
    %226 = vector.extract_strided_slice %215 {offsets = [0, 128], sizes = [8, 128], strides = [1, 1]} : vector<8x256xf32> to vector<8x128xf32>
    %227 = vector.broadcast %8 : vector<1x128xf32> to vector<8x128xf32>
    %228 = arith.addf %226, %227 : vector<8x128xf32>
    %229 = arith.mulf %223, %228 : vector<8x128xf32>
    %230 = arith.addf %225, %229 : vector<8x128xf32>
    %231 = math.tanh %230 : vector<8x128xf32>
    %cst_67 = arith.constant 1.000000e+00 : f32
    %232 = vector.broadcast %cst_67 : f32 to vector<8x128xf32>
    %233 = arith.subf %232, %224 : vector<8x128xf32>
    %234 = arith.mulf %233, %231 : vector<8x128xf32>
    %235 = arith.mulf %224, %203 : vector<8x128xf32>
    %236 = arith.addf %234, %235 : vector<8x128xf32>
    %237 = arith.truncf %236 : vector<8x128xf32> to vector<8x128xbf16>
    %cst_68 = arith.constant dense<0.000000e+00> : vector<8x256xf32>
    %238 = tpu.matmul %237, %9, %cst_68 {dimension_numbers = #tpu.dot_dimension_numbers<[1], [0], [0], [1], [0, 0, 1, 1], [], []>} : vector<8x128xbf16>, vector<128x256xbf16>, vector<8x256xf32> -> vector<8x256xf32>
    %239 = vector.broadcast %10 : vector<1x256xf32> to vector<8x256xf32>
    %240 = arith.addf %238, %239 : vector<8x256xf32>
    %241 = arith.index_cast %211 : i32 to index
    %c0_69 = arith.constant 0 : index
    %242 = vector.load %arg21[%241, %c0_69] : memref<64x256xf32, #tpu.memory_space<vmem>>, vector<8x256xf32>
    tpu.vector_store %arg21[%241, %c0_69], %240 {strides = array<i32>} : memref<64x256xf32, #tpu.memory_space<vmem>>, vector<8x256xf32>,
    %c7_i32 = arith.constant 7 : i32
    %c8_i32_70 = arith.constant 8 : i32
    %243 = arith.muli %c7_i32, %c8_i32_70 : i32
    %244 = tpu.assume_multiple %243, 8 : i32
    %245 = arith.index_cast %244 : i32 to index
    %c0_71 = arith.constant 0 : index
    %246 = vector.load %arg21[%245, %c0_71] : memref<64x256xf32, #tpu.memory_space<vmem>>, vector<8x256xf32>
    %247 = arith.truncf %236 : vector<8x128xf32> to vector<8x128xbf16>
    %cst_72 = arith.constant dense<0.000000e+00> : vector<8x256xf32>
    %248 = tpu.matmul %247, %7, %cst_72 {dimension_numbers = #tpu.dot_dimension_numbers<[1], [0], [0], [1], [0, 0, 1, 1], [], []>} : vector<8x128xbf16>, vector<128x256xbf16>, vector<8x256xf32> -> vector<8x256xf32>
    %249 = vector.extract_strided_slice %246 {offsets = [0, 0], sizes = [8, 128], strides = [1, 1]} : vector<8x256xf32> to vector<8x128xf32>
    %250 = vector.extract_strided_slice %248 {offsets = [0, 0], sizes = [8, 128], strides = [1, 1]} : vector<8x256xf32> to vector<8x128xf32>
    %251 = arith.addf %249, %250 : vector<8x128xf32>
    %252 = arith.negf %251 : vector<8x128xf32>
    %253 = math.exp %252 : vector<8x128xf32>
    %cst_73 = arith.constant 1.000000e+00 : f32
    %254 = vector.broadcast %cst_73 : f32 to vector<8x128xf32>
    %255 = arith.addf %254, %253 : vector<8x128xf32>
    %256 = arith.divf %254, %255 : vector<8x128xf32>
    %c64_i32_74 = arith.constant 64 : i32
    %257 = tpu.dynamic_rotate %256 by %c64_i32_74 dim 1 : vector<8x128xf32>, i32 -> vector<8x128xf32>
    %258 = vector.extract_strided_slice %246 {offsets = [0, 128], sizes = [8, 128], strides = [1, 1]} : vector<8x256xf32> to vector<8x128xf32>
    %259 = vector.extract_strided_slice %248 {offsets = [0, 128], sizes = [8, 128], strides = [1, 1]} : vector<8x256xf32> to vector<8x128xf32>
    %260 = vector.broadcast %8 : vector<1x128xf32> to vector<8x128xf32>
    %261 = arith.addf %259, %260 : vector<8x128xf32>
    %262 = arith.mulf %256, %261 : vector<8x128xf32>
    %263 = arith.addf %258, %262 : vector<8x128xf32>
    %264 = math.tanh %263 : vector<8x128xf32>
    %cst_75 = arith.constant 1.000000e+00 : f32
    %265 = vector.broadcast %cst_75 : f32 to vector<8x128xf32>
    %266 = arith.subf %265, %257 : vector<8x128xf32>
    %267 = arith.mulf %266, %264 : vector<8x128xf32>
    %268 = arith.mulf %257, %236 : vector<8x128xf32>
    %269 = arith.addf %267, %268 : vector<8x128xf32>
    %270 = arith.truncf %269 : vector<8x128xf32> to vector<8x128xbf16>
    %cst_76 = arith.constant dense<0.000000e+00> : vector<8x256xf32>
    %271 = tpu.matmul %270, %9, %cst_76 {dimension_numbers = #tpu.dot_dimension_numbers<[1], [0], [0], [1], [0, 0, 1, 1], [], []>} : vector<8x128xbf16>, vector<128x256xbf16>, vector<8x256xf32> -> vector<8x256xf32>
    %272 = vector.broadcast %10 : vector<1x256xf32> to vector<8x256xf32>
    %273 = arith.addf %271, %272 : vector<8x256xf32>
    %274 = arith.index_cast %244 : i32 to index
    %c0_77 = arith.constant 0 : index
    %275 = vector.load %arg21[%274, %c0_77] : memref<64x256xf32, #tpu.memory_space<vmem>>, vector<8x256xf32>
    tpu.vector_store %arg21[%274, %c0_77], %273 {strides = array<i32>} : memref<64x256xf32, #tpu.memory_space<vmem>>, vector<8x256xf32>,
    %c8_i32_78 = arith.constant 8 : i32
    %c0_79 = arith.constant 0 : index
    %c0_80 = arith.constant 0 : index
    %276 = vector.load %arg7[%c0_79, %c0_80] : memref<128x256xbf16, #tpu.memory_space<vmem>>, vector<128x256xbf16>
    %c0_81 = arith.constant 0 : index
    %c0_82 = arith.constant 0 : index
    %277 = vector.load %arg9[%c0_81, %c0_82] : memref<1x128xf32, #tpu.memory_space<vmem>>, vector<1x128xf32>
    %c0_83 = arith.constant 0 : index
    %c0_84 = arith.constant 0 : index
    %278 = vector.load %arg10[%c0_83, %c0_84] : memref<128x256xbf16, #tpu.memory_space<vmem>>, vector<128x256xbf16>
    %c0_85 = arith.constant 0 : index
    %c0_86 = arith.constant 0 : index
    %279 = vector.load %arg12[%c0_85, %c0_86] : memref<1x256xf32, #tpu.memory_space<vmem>>, vector<1x256xf32>
    %cst_87 = arith.constant 0.000000e+00 : f32
    %280 = vector.broadcast %cst_87 : f32 to vector<8x128xf32>
    %c0_i32_88 = arith.constant 0 : i32
    %c8_i32_89 = arith.constant 8 : i32
    %281 = arith.muli %c0_i32_88, %c8_i32_89 : i32
    %282 = tpu.assume_multiple %281, 8 : i32
    %283 = arith.index_cast %282 : i32 to index
    %c0_90 = arith.constant 0 : index
    %284 = vector.load %arg21[%283, %c0_90] : memref<64x256xf32, #tpu.memory_space<vmem>>, vector<8x256xf32>
    %285 = arith.truncf %280 : vector<8x128xf32> to vector<8x128xbf16>
    %cst_91 = arith.constant dense<0.000000e+00> : vector<8x256xf32>
    %286 = tpu.matmul %285, %276, %cst_91 {dimension_numbers = #tpu.dot_dimension_numbers<[1], [0], [0], [1], [0, 0, 1, 1], [], []>} : vector<8x128xbf16>, vector<128x256xbf16>, vector<8x256xf32> -> vector<8x256xf32>
    %287 = vector.extract_strided_slice %284 {offsets = [0, 0], sizes = [8, 128], strides = [1, 1]} : vector<8x256xf32> to vector<8x128xf32>
    %288 = vector.extract_strided_slice %286 {offsets = [0, 0], sizes = [8, 128], strides = [1, 1]} : vector<8x256xf32> to vector<8x128xf32>
    %289 = arith.addf %287, %288 : vector<8x128xf32>
    %290 = arith.negf %289 : vector<8x128xf32>
    %291 = math.exp %290 : vector<8x128xf32>
    %cst_92 = arith.constant 1.000000e+00 : f32
    %292 = vector.broadcast %cst_92 : f32 to vector<8x128xf32>
    %293 = arith.addf %292, %291 : vector<8x128xf32>
    %294 = arith.divf %292, %293 : vector<8x128xf32>
    %c64_i32_93 = arith.constant 64 : i32
    %295 = tpu.dynamic_rotate %294 by %c64_i32_93 dim 1 : vector<8x128xf32>, i32 -> vector<8x128xf32>
    %296 = vector.extract_strided_slice %284 {offsets = [0, 128], sizes = [8, 128], strides = [1, 1]} : vector<8x256xf32> to vector<8x128xf32>
    %297 = vector.extract_strided_slice %286 {offsets = [0, 128], sizes = [8, 128], strides = [1, 1]} : vector<8x256xf32> to vector<8x128xf32>
    %298 = vector.broadcast %277 : vector<1x128xf32> to vector<8x128xf32>
    %299 = arith.addf %297, %298 : vector<8x128xf32>
    %300 = arith.mulf %294, %299 : vector<8x128xf32>
    %301 = arith.addf %296, %300 : vector<8x128xf32>
    %302 = math.tanh %301 : vector<8x128xf32>
    %cst_94 = arith.constant 1.000000e+00 : f32
    %303 = vector.broadcast %cst_94 : f32 to vector<8x128xf32>
    %304 = arith.subf %303, %295 : vector<8x128xf32>
    %305 = arith.mulf %304, %302 : vector<8x128xf32>
    %306 = arith.mulf %295, %280 : vector<8x128xf32>
    %307 = arith.addf %305, %306 : vector<8x128xf32>
    %308 = arith.truncf %307 : vector<8x128xf32> to vector<8x128xbf16>
    %cst_95 = arith.constant dense<0.000000e+00> : vector<8x256xf32>
    %309 = tpu.matmul %308, %278, %cst_95 {dimension_numbers = #tpu.dot_dimension_numbers<[1], [0], [0], [1], [0, 0, 1, 1], [], []>} : vector<8x128xbf16>, vector<128x256xbf16>, vector<8x256xf32> -> vector<8x256xf32>
    %310 = vector.broadcast %279 : vector<1x256xf32> to vector<8x256xf32>
    %311 = arith.addf %309, %310 : vector<8x256xf32>
    %312 = arith.index_cast %282 : i32 to index
    %c0_96 = arith.constant 0 : index
    %313 = vector.load %arg21[%312, %c0_96] : memref<64x256xf32, #tpu.memory_space<vmem>>, vector<8x256xf32>
    tpu.vector_store %arg21[%312, %c0_96], %311 {strides = array<i32>} : memref<64x256xf32, #tpu.memory_space<vmem>>, vector<8x256xf32>,
    %c1_i32_97 = arith.constant 1 : i32
    %c8_i32_98 = arith.constant 8 : i32
    %314 = arith.muli %c1_i32_97, %c8_i32_98 : i32
    %315 = tpu.assume_multiple %314, 8 : i32
    %316 = arith.index_cast %315 : i32 to index
    %c0_99 = arith.constant 0 : index
    %317 = vector.load %arg21[%316, %c0_99] : memref<64x256xf32, #tpu.memory_space<vmem>>, vector<8x256xf32>
    %318 = arith.truncf %307 : vector<8x128xf32> to vector<8x128xbf16>
    %cst_100 = arith.constant dense<0.000000e+00> : vector<8x256xf32>
    %319 = tpu.matmul %318, %276, %cst_100 {dimension_numbers = #tpu.dot_dimension_numbers<[1], [0], [0], [1], [0, 0, 1, 1], [], []>} : vector<8x128xbf16>, vector<128x256xbf16>, vector<8x256xf32> -> vector<8x256xf32>
    %320 = vector.extract_strided_slice %317 {offsets = [0, 0], sizes = [8, 128], strides = [1, 1]} : vector<8x256xf32> to vector<8x128xf32>
    %321 = vector.extract_strided_slice %319 {offsets = [0, 0], sizes = [8, 128], strides = [1, 1]} : vector<8x256xf32> to vector<8x128xf32>
    %322 = arith.addf %320, %321 : vector<8x128xf32>
    %323 = arith.negf %322 : vector<8x128xf32>
    %324 = math.exp %323 : vector<8x128xf32>
    %cst_101 = arith.constant 1.000000e+00 : f32
    %325 = vector.broadcast %cst_101 : f32 to vector<8x128xf32>
    %326 = arith.addf %325, %324 : vector<8x128xf32>
    %327 = arith.divf %325, %326 : vector<8x128xf32>
    %c64_i32_102 = arith.constant 64 : i32
    %328 = tpu.dynamic_rotate %327 by %c64_i32_102 dim 1 : vector<8x128xf32>, i32 -> vector<8x128xf32>
    %329 = vector.extract_strided_slice %317 {offsets = [0, 128], sizes = [8, 128], strides = [1, 1]} : vector<8x256xf32> to vector<8x128xf32>
    %330 = vector.extract_strided_slice %319 {offsets = [0, 128], sizes = [8, 128], strides = [1, 1]} : vector<8x256xf32> to vector<8x128xf32>
    %331 = vector.broadcast %277 : vector<1x128xf32> to vector<8x128xf32>
    %332 = arith.addf %330, %331 : vector<8x128xf32>
    %333 = arith.mulf %327, %332 : vector<8x128xf32>
    %334 = arith.addf %329, %333 : vector<8x128xf32>
    %335 = math.tanh %334 : vector<8x128xf32>
    %cst_103 = arith.constant 1.000000e+00 : f32
    %336 = vector.broadcast %cst_103 : f32 to vector<8x128xf32>
    %337 = arith.subf %336, %328 : vector<8x128xf32>
    %338 = arith.mulf %337, %335 : vector<8x128xf32>
    %339 = arith.mulf %328, %307 : vector<8x128xf32>
    %340 = arith.addf %338, %339 : vector<8x128xf32>
    %341 = arith.truncf %340 : vector<8x128xf32> to vector<8x128xbf16>
    %cst_104 = arith.constant dense<0.000000e+00> : vector<8x256xf32>
    %342 = tpu.matmul %341, %278, %cst_104 {dimension_numbers = #tpu.dot_dimension_numbers<[1], [0], [0], [1], [0, 0, 1, 1], [], []>} : vector<8x128xbf16>, vector<128x256xbf16>, vector<8x256xf32> -> vector<8x256xf32>
    %343 = vector.broadcast %279 : vector<1x256xf32> to vector<8x256xf32>
    %344 = arith.addf %342, %343 : vector<8x256xf32>
    %345 = arith.index_cast %315 : i32 to index
    %c0_105 = arith.constant 0 : index
    %346 = vector.load %arg21[%345, %c0_105] : memref<64x256xf32, #tpu.memory_space<vmem>>, vector<8x256xf32>
    tpu.vector_store %arg21[%345, %c0_105], %344 {strides = array<i32>} : memref<64x256xf32, #tpu.memory_space<vmem>>, vector<8x256xf32>,
    %c2_i32_106 = arith.constant 2 : i32
    %c8_i32_107 = arith.constant 8 : i32
    %347 = arith.muli %c2_i32_106, %c8_i32_107 : i32
    %348 = tpu.assume_multiple %347, 8 : i32
    %349 = arith.index_cast %348 : i32 to index
    %c0_108 = arith.constant 0 : index
    %350 = vector.load %arg21[%349, %c0_108] : memref<64x256xf32, #tpu.memory_space<vmem>>, vector<8x256xf32>
    %351 = arith.truncf %340 : vector<8x128xf32> to vector<8x128xbf16>
    %cst_109 = arith.constant dense<0.000000e+00> : vector<8x256xf32>
    %352 = tpu.matmul %351, %276, %cst_109 {dimension_numbers = #tpu.dot_dimension_numbers<[1], [0], [0], [1], [0, 0, 1, 1], [], []>} : vector<8x128xbf16>, vector<128x256xbf16>, vector<8x256xf32> -> vector<8x256xf32>
    %353 = vector.extract_strided_slice %350 {offsets = [0, 0], sizes = [8, 128], strides = [1, 1]} : vector<8x256xf32> to vector<8x128xf32>
    %354 = vector.extract_strided_slice %352 {offsets = [0, 0], sizes = [8, 128], strides = [1, 1]} : vector<8x256xf32> to vector<8x128xf32>
    %355 = arith.addf %353, %354 : vector<8x128xf32>
    %356 = arith.negf %355 : vector<8x128xf32>
    %357 = math.exp %356 : vector<8x128xf32>
    %cst_110 = arith.constant 1.000000e+00 : f32
    %358 = vector.broadcast %cst_110 : f32 to vector<8x128xf32>
    %359 = arith.addf %358, %357 : vector<8x128xf32>
    %360 = arith.divf %358, %359 : vector<8x128xf32>
    %c64_i32_111 = arith.constant 64 : i32
    %361 = tpu.dynamic_rotate %360 by %c64_i32_111 dim 1 : vector<8x128xf32>, i32 -> vector<8x128xf32>
    %362 = vector.extract_strided_slice %350 {offsets = [0, 128], sizes = [8, 128], strides = [1, 1]} : vector<8x256xf32> to vector<8x128xf32>
    %363 = vector.extract_strided_slice %352 {offsets = [0, 128], sizes = [8, 128], strides = [1, 1]} : vector<8x256xf32> to vector<8x128xf32>
    %364 = vector.broadcast %277 : vector<1x128xf32> to vector<8x128xf32>
    %365 = arith.addf %363, %364 : vector<8x128xf32>
    %366 = arith.mulf %360, %365 : vector<8x128xf32>
    %367 = arith.addf %362, %366 : vector<8x128xf32>
    %368 = math.tanh %367 : vector<8x128xf32>
    %cst_112 = arith.constant 1.000000e+00 : f32
    %369 = vector.broadcast %cst_112 : f32 to vector<8x128xf32>
    %370 = arith.subf %369, %361 : vector<8x128xf32>
    %371 = arith.mulf %370, %368 : vector<8x128xf32>
    %372 = arith.mulf %361, %340 : vector<8x128xf32>
    %373 = arith.addf %371, %372 : vector<8x128xf32>
    %374 = arith.truncf %373 : vector<8x128xf32> to vector<8x128xbf16>
    %cst_113 = arith.constant dense<0.000000e+00> : vector<8x256xf32>
    %375 = tpu.matmul %374, %278, %cst_113 {dimension_numbers = #tpu.dot_dimension_numbers<[1], [0], [0], [1], [0, 0, 1, 1], [], []>} : vector<8x128xbf16>, vector<128x256xbf16>, vector<8x256xf32> -> vector<8x256xf32>
    %376 = vector.broadcast %279 : vector<1x256xf32> to vector<8x256xf32>
    %377 = arith.addf %375, %376 : vector<8x256xf32>
    %378 = arith.index_cast %348 : i32 to index
    %c0_114 = arith.constant 0 : index
    %379 = vector.load %arg21[%378, %c0_114] : memref<64x256xf32, #tpu.memory_space<vmem>>, vector<8x256xf32>
    tpu.vector_store %arg21[%378, %c0_114], %377 {strides = array<i32>} : memref<64x256xf32, #tpu.memory_space<vmem>>, vector<8x256xf32>,
    %c3_i32_115 = arith.constant 3 : i32
    %c8_i32_116 = arith.constant 8 : i32
    %380 = arith.muli %c3_i32_115, %c8_i32_116 : i32
    %381 = tpu.assume_multiple %380, 8 : i32
    %382 = arith.index_cast %381 : i32 to index
    %c0_117 = arith.constant 0 : index
    %383 = vector.load %arg21[%382, %c0_117] : memref<64x256xf32, #tpu.memory_space<vmem>>, vector<8x256xf32>
    %384 = arith.truncf %373 : vector<8x128xf32> to vector<8x128xbf16>
    %cst_118 = arith.constant dense<0.000000e+00> : vector<8x256xf32>
    %385 = tpu.matmul %384, %276, %cst_118 {dimension_numbers = #tpu.dot_dimension_numbers<[1], [0], [0], [1], [0, 0, 1, 1], [], []>} : vector<8x128xbf16>, vector<128x256xbf16>, vector<8x256xf32> -> vector<8x256xf32>
    %386 = vector.extract_strided_slice %383 {offsets = [0, 0], sizes = [8, 128], strides = [1, 1]} : vector<8x256xf32> to vector<8x128xf32>
    %387 = vector.extract_strided_slice %385 {offsets = [0, 0], sizes = [8, 128], strides = [1, 1]} : vector<8x256xf32> to vector<8x128xf32>
    %388 = arith.addf %386, %387 : vector<8x128xf32>
    %389 = arith.negf %388 : vector<8x128xf32>
    %390 = math.exp %389 : vector<8x128xf32>
    %cst_119 = arith.constant 1.000000e+00 : f32
    %391 = vector.broadcast %cst_119 : f32 to vector<8x128xf32>
    %392 = arith.addf %391, %390 : vector<8x128xf32>
    %393 = arith.divf %391, %392 : vector<8x128xf32>
    %c64_i32_120 = arith.constant 64 : i32
    %394 = tpu.dynamic_rotate %393 by %c64_i32_120 dim 1 : vector<8x128xf32>, i32 -> vector<8x128xf32>
    %395 = vector.extract_strided_slice %383 {offsets = [0, 128], sizes = [8, 128], strides = [1, 1]} : vector<8x256xf32> to vector<8x128xf32>
    %396 = vector.extract_strided_slice %385 {offsets = [0, 128], sizes = [8, 128], strides = [1, 1]} : vector<8x256xf32> to vector<8x128xf32>
    %397 = vector.broadcast %277 : vector<1x128xf32> to vector<8x128xf32>
    %398 = arith.addf %396, %397 : vector<8x128xf32>
    %399 = arith.mulf %393, %398 : vector<8x128xf32>
    %400 = arith.addf %395, %399 : vector<8x128xf32>
    %401 = math.tanh %400 : vector<8x128xf32>
    %cst_121 = arith.constant 1.000000e+00 : f32
    %402 = vector.broadcast %cst_121 : f32 to vector<8x128xf32>
    %403 = arith.subf %402, %394 : vector<8x128xf32>
    %404 = arith.mulf %403, %401 : vector<8x128xf32>
    %405 = arith.mulf %394, %373 : vector<8x128xf32>
    %406 = arith.addf %404, %405 : vector<8x128xf32>
    %407 = arith.truncf %406 : vector<8x128xf32> to vector<8x128xbf16>
    %cst_122 = arith.constant dense<0.000000e+00> : vector<8x256xf32>
    %408 = tpu.matmul %407, %278, %cst_122 {dimension_numbers = #tpu.dot_dimension_numbers<[1], [0], [0], [1], [0, 0, 1, 1], [], []>} : vector<8x128xbf16>, vector<128x256xbf16>, vector<8x256xf32> -> vector<8x256xf32>
    %409 = vector.broadcast %279 : vector<1x256xf32> to vector<8x256xf32>
    %410 = arith.addf %408, %409 : vector<8x256xf32>
    %411 = arith.index_cast %381 : i32 to index
    %c0_123 = arith.constant 0 : index
    %412 = vector.load %arg21[%411, %c0_123] : memref<64x256xf32, #tpu.memory_space<vmem>>, vector<8x256xf32>
    tpu.vector_store %arg21[%411, %c0_123], %410 {strides = array<i32>} : memref<64x256xf32, #tpu.memory_space<vmem>>, vector<8x256xf32>,
    %c4_i32_124 = arith.constant 4 : i32
    %c8_i32_125 = arith.constant 8 : i32
    %413 = arith.muli %c4_i32_124, %c8_i32_125 : i32
    %414 = tpu.assume_multiple %413, 8 : i32
    %415 = arith.index_cast %414 : i32 to index
    %c0_126 = arith.constant 0 : index
    %416 = vector.load %arg21[%415, %c0_126] : memref<64x256xf32, #tpu.memory_space<vmem>>, vector<8x256xf32>
    %417 = arith.truncf %406 : vector<8x128xf32> to vector<8x128xbf16>
    %cst_127 = arith.constant dense<0.000000e+00> : vector<8x256xf32>
    %418 = tpu.matmul %417, %276, %cst_127 {dimension_numbers = #tpu.dot_dimension_numbers<[1], [0], [0], [1], [0, 0, 1, 1], [], []>} : vector<8x128xbf16>, vector<128x256xbf16>, vector<8x256xf32> -> vector<8x256xf32>
    %419 = vector.extract_strided_slice %416 {offsets = [0, 0], sizes = [8, 128], strides = [1, 1]} : vector<8x256xf32> to vector<8x128xf32>
    %420 = vector.extract_strided_slice %418 {offsets = [0, 0], sizes = [8, 128], strides = [1, 1]} : vector<8x256xf32> to vector<8x128xf32>
    %421 = arith.addf %419, %420 : vector<8x128xf32>
    %422 = arith.negf %421 : vector<8x128xf32>
    %423 = math.exp %422 : vector<8x128xf32>
    %cst_128 = arith.constant 1.000000e+00 : f32
    %424 = vector.broadcast %cst_128 : f32 to vector<8x128xf32>
    %425 = arith.addf %424, %423 : vector<8x128xf32>
    %426 = arith.divf %424, %425 : vector<8x128xf32>
    %c64_i32_129 = arith.constant 64 : i32
    %427 = tpu.dynamic_rotate %426 by %c64_i32_129 dim 1 : vector<8x128xf32>, i32 -> vector<8x128xf32>
    %428 = vector.extract_strided_slice %416 {offsets = [0, 128], sizes = [8, 128], strides = [1, 1]} : vector<8x256xf32> to vector<8x128xf32>
    %429 = vector.extract_strided_slice %418 {offsets = [0, 128], sizes = [8, 128], strides = [1, 1]} : vector<8x256xf32> to vector<8x128xf32>
    %430 = vector.broadcast %277 : vector<1x128xf32> to vector<8x128xf32>
    %431 = arith.addf %429, %430 : vector<8x128xf32>
    %432 = arith.mulf %426, %431 : vector<8x128xf32>
    %433 = arith.addf %428, %432 : vector<8x128xf32>
    %434 = math.tanh %433 : vector<8x128xf32>
    %cst_130 = arith.constant 1.000000e+00 : f32
    %435 = vector.broadcast %cst_130 : f32 to vector<8x128xf32>
    %436 = arith.subf %435, %427 : vector<8x128xf32>
    %437 = arith.mulf %436, %434 : vector<8x128xf32>
    %438 = arith.mulf %427, %406 : vector<8x128xf32>
    %439 = arith.addf %437, %438 : vector<8x128xf32>
    %440 = arith.truncf %439 : vector<8x128xf32> to vector<8x128xbf16>
    %cst_131 = arith.constant dense<0.000000e+00> : vector<8x256xf32>
    %441 = tpu.matmul %440, %278, %cst_131 {dimension_numbers = #tpu.dot_dimension_numbers<[1], [0], [0], [1], [0, 0, 1, 1], [], []>} : vector<8x128xbf16>, vector<128x256xbf16>, vector<8x256xf32> -> vector<8x256xf32>
    %442 = vector.broadcast %279 : vector<1x256xf32> to vector<8x256xf32>
    %443 = arith.addf %441, %442 : vector<8x256xf32>
    %444 = arith.index_cast %414 : i32 to index
    %c0_132 = arith.constant 0 : index
    %445 = vector.load %arg21[%444, %c0_132] : memref<64x256xf32, #tpu.memory_space<vmem>>, vector<8x256xf32>
    tpu.vector_store %arg21[%444, %c0_132], %443 {strides = array<i32>} : memref<64x256xf32, #tpu.memory_space<vmem>>, vector<8x256xf32>,
    %c5_i32_133 = arith.constant 5 : i32
    %c8_i32_134 = arith.constant 8 : i32
    %446 = arith.muli %c5_i32_133, %c8_i32_134 : i32
    %447 = tpu.assume_multiple %446, 8 : i32
    %448 = arith.index_cast %447 : i32 to index
    %c0_135 = arith.constant 0 : index
    %449 = vector.load %arg21[%448, %c0_135] : memref<64x256xf32, #tpu.memory_space<vmem>>, vector<8x256xf32>
    %450 = arith.truncf %439 : vector<8x128xf32> to vector<8x128xbf16>
    %cst_136 = arith.constant dense<0.000000e+00> : vector<8x256xf32>
    %451 = tpu.matmul %450, %276, %cst_136 {dimension_numbers = #tpu.dot_dimension_numbers<[1], [0], [0], [1], [0, 0, 1, 1], [], []>} : vector<8x128xbf16>, vector<128x256xbf16>, vector<8x256xf32> -> vector<8x256xf32>
    %452 = vector.extract_strided_slice %449 {offsets = [0, 0], sizes = [8, 128], strides = [1, 1]} : vector<8x256xf32> to vector<8x128xf32>
    %453 = vector.extract_strided_slice %451 {offsets = [0, 0], sizes = [8, 128], strides = [1, 1]} : vector<8x256xf32> to vector<8x128xf32>
    %454 = arith.addf %452, %453 : vector<8x128xf32>
    %455 = arith.negf %454 : vector<8x128xf32>
    %456 = math.exp %455 : vector<8x128xf32>
    %cst_137 = arith.constant 1.000000e+00 : f32
    %457 = vector.broadcast %cst_137 : f32 to vector<8x128xf32>
    %458 = arith.addf %457, %456 : vector<8x128xf32>
    %459 = arith.divf %457, %458 : vector<8x128xf32>
    %c64_i32_138 = arith.constant 64 : i32
    %460 = tpu.dynamic_rotate %459 by %c64_i32_138 dim 1 : vector<8x128xf32>, i32 -> vector<8x128xf32>
    %461 = vector.extract_strided_slice %449 {offsets = [0, 128], sizes = [8, 128], strides = [1, 1]} : vector<8x256xf32> to vector<8x128xf32>
    %462 = vector.extract_strided_slice %451 {offsets = [0, 128], sizes = [8, 128], strides = [1, 1]} : vector<8x256xf32> to vector<8x128xf32>
    %463 = vector.broadcast %277 : vector<1x128xf32> to vector<8x128xf32>
    %464 = arith.addf %462, %463 : vector<8x128xf32>
    %465 = arith.mulf %459, %464 : vector<8x128xf32>
    %466 = arith.addf %461, %465 : vector<8x128xf32>
    %467 = math.tanh %466 : vector<8x128xf32>
    %cst_139 = arith.constant 1.000000e+00 : f32
    %468 = vector.broadcast %cst_139 : f32 to vector<8x128xf32>
    %469 = arith.subf %468, %460 : vector<8x128xf32>
    %470 = arith.mulf %469, %467 : vector<8x128xf32>
    %471 = arith.mulf %460, %439 : vector<8x128xf32>
    %472 = arith.addf %470, %471 : vector<8x128xf32>
    %473 = arith.truncf %472 : vector<8x128xf32> to vector<8x128xbf16>
    %cst_140 = arith.constant dense<0.000000e+00> : vector<8x256xf32>
    %474 = tpu.matmul %473, %278, %cst_140 {dimension_numbers = #tpu.dot_dimension_numbers<[1], [0], [0], [1], [0, 0, 1, 1], [], []>} : vector<8x128xbf16>, vector<128x256xbf16>, vector<8x256xf32> -> vector<8x256xf32>
    %475 = vector.broadcast %279 : vector<1x256xf32> to vector<8x256xf32>
    %476 = arith.addf %474, %475 : vector<8x256xf32>
    %477 = arith.index_cast %447 : i32 to index
    %c0_141 = arith.constant 0 : index
    %478 = vector.load %arg21[%477, %c0_141] : memref<64x256xf32, #tpu.memory_space<vmem>>, vector<8x256xf32>
    tpu.vector_store %arg21[%477, %c0_141], %476 {strides = array<i32>} : memref<64x256xf32, #tpu.memory_space<vmem>>, vector<8x256xf32>,
    %c6_i32_142 = arith.constant 6 : i32
    %c8_i32_143 = arith.constant 8 : i32
    %479 = arith.muli %c6_i32_142, %c8_i32_143 : i32
    %480 = tpu.assume_multiple %479, 8 : i32
    %481 = arith.index_cast %480 : i32 to index
    %c0_144 = arith.constant 0 : index
    %482 = vector.load %arg21[%481, %c0_144] : memref<64x256xf32, #tpu.memory_space<vmem>>, vector<8x256xf32>
    %483 = arith.truncf %472 : vector<8x128xf32> to vector<8x128xbf16>
    %cst_145 = arith.constant dense<0.000000e+00> : vector<8x256xf32>
    %484 = tpu.matmul %483, %276, %cst_145 {dimension_numbers = #tpu.dot_dimension_numbers<[1], [0], [0], [1], [0, 0, 1, 1], [], []>} : vector<8x128xbf16>, vector<128x256xbf16>, vector<8x256xf32> -> vector<8x256xf32>
    %485 = vector.extract_strided_slice %482 {offsets = [0, 0], sizes = [8, 128], strides = [1, 1]} : vector<8x256xf32> to vector<8x128xf32>
    %486 = vector.extract_strided_slice %484 {offsets = [0, 0], sizes = [8, 128], strides = [1, 1]} : vector<8x256xf32> to vector<8x128xf32>
    %487 = arith.addf %485, %486 : vector<8x128xf32>
    %488 = arith.negf %487 : vector<8x128xf32>
    %489 = math.exp %488 : vector<8x128xf32>
    %cst_146 = arith.constant 1.000000e+00 : f32
    %490 = vector.broadcast %cst_146 : f32 to vector<8x128xf32>
    %491 = arith.addf %490, %489 : vector<8x128xf32>
    %492 = arith.divf %490, %491 : vector<8x128xf32>
    %c64_i32_147 = arith.constant 64 : i32
    %493 = tpu.dynamic_rotate %492 by %c64_i32_147 dim 1 : vector<8x128xf32>, i32 -> vector<8x128xf32>
    %494 = vector.extract_strided_slice %482 {offsets = [0, 128], sizes = [8, 128], strides = [1, 1]} : vector<8x256xf32> to vector<8x128xf32>
    %495 = vector.extract_strided_slice %484 {offsets = [0, 128], sizes = [8, 128], strides = [1, 1]} : vector<8x256xf32> to vector<8x128xf32>
    %496 = vector.broadcast %277 : vector<1x128xf32> to vector<8x128xf32>
    %497 = arith.addf %495, %496 : vector<8x128xf32>
    %498 = arith.mulf %492, %497 : vector<8x128xf32>
    %499 = arith.addf %494, %498 : vector<8x128xf32>
    %500 = math.tanh %499 : vector<8x128xf32>
    %cst_148 = arith.constant 1.000000e+00 : f32
    %501 = vector.broadcast %cst_148 : f32 to vector<8x128xf32>
    %502 = arith.subf %501, %493 : vector<8x128xf32>
    %503 = arith.mulf %502, %500 : vector<8x128xf32>
    %504 = arith.mulf %493, %472 : vector<8x128xf32>
    %505 = arith.addf %503, %504 : vector<8x128xf32>
    %506 = arith.truncf %505 : vector<8x128xf32> to vector<8x128xbf16>
    %cst_149 = arith.constant dense<0.000000e+00> : vector<8x256xf32>
    %507 = tpu.matmul %506, %278, %cst_149 {dimension_numbers = #tpu.dot_dimension_numbers<[1], [0], [0], [1], [0, 0, 1, 1], [], []>} : vector<8x128xbf16>, vector<128x256xbf16>, vector<8x256xf32> -> vector<8x256xf32>
    %508 = vector.broadcast %279 : vector<1x256xf32> to vector<8x256xf32>
    %509 = arith.addf %507, %508 : vector<8x256xf32>
    %510 = arith.index_cast %480 : i32 to index
    %c0_150 = arith.constant 0 : index
    %511 = vector.load %arg21[%510, %c0_150] : memref<64x256xf32, #tpu.memory_space<vmem>>, vector<8x256xf32>
    tpu.vector_store %arg21[%510, %c0_150], %509 {strides = array<i32>} : memref<64x256xf32, #tpu.memory_space<vmem>>, vector<8x256xf32>,
    %c7_i32_151 = arith.constant 7 : i32
    %c8_i32_152 = arith.constant 8 : i32
    %512 = arith.muli %c7_i32_151, %c8_i32_152 : i32
    %513 = tpu.assume_multiple %512, 8 : i32
    %514 = arith.index_cast %513 : i32 to index
    %c0_153 = arith.constant 0 : index
    %515 = vector.load %arg21[%514, %c0_153] : memref<64x256xf32, #tpu.memory_space<vmem>>, vector<8x256xf32>
    %516 = arith.truncf %505 : vector<8x128xf32> to vector<8x128xbf16>
    %cst_154 = arith.constant dense<0.000000e+00> : vector<8x256xf32>
    %517 = tpu.matmul %516, %276, %cst_154 {dimension_numbers = #tpu.dot_dimension_numbers<[1], [0], [0], [1], [0, 0, 1, 1], [], []>} : vector<8x128xbf16>, vector<128x256xbf16>, vector<8x256xf32> -> vector<8x256xf32>
    %518 = vector.extract_strided_slice %515 {offsets = [0, 0], sizes = [8, 128], strides = [1, 1]} : vector<8x256xf32> to vector<8x128xf32>
    %519 = vector.extract_strided_slice %517 {offsets = [0, 0], sizes = [8, 128], strides = [1, 1]} : vector<8x256xf32> to vector<8x128xf32>
    %520 = arith.addf %518, %519 : vector<8x128xf32>
    %521 = arith.negf %520 : vector<8x128xf32>
    %522 = math.exp %521 : vector<8x128xf32>
    %cst_155 = arith.constant 1.000000e+00 : f32
    %523 = vector.broadcast %cst_155 : f32 to vector<8x128xf32>
    %524 = arith.addf %523, %522 : vector<8x128xf32>
    %525 = arith.divf %523, %524 : vector<8x128xf32>
    %c64_i32_156 = arith.constant 64 : i32
    %526 = tpu.dynamic_rotate %525 by %c64_i32_156 dim 1 : vector<8x128xf32>, i32 -> vector<8x128xf32>
    %527 = vector.extract_strided_slice %515 {offsets = [0, 128], sizes = [8, 128], strides = [1, 1]} : vector<8x256xf32> to vector<8x128xf32>
    %528 = vector.extract_strided_slice %517 {offsets = [0, 128], sizes = [8, 128], strides = [1, 1]} : vector<8x256xf32> to vector<8x128xf32>
    %529 = vector.broadcast %277 : vector<1x128xf32> to vector<8x128xf32>
    %530 = arith.addf %528, %529 : vector<8x128xf32>
    %531 = arith.mulf %525, %530 : vector<8x128xf32>
    %532 = arith.addf %527, %531 : vector<8x128xf32>
    %533 = math.tanh %532 : vector<8x128xf32>
    %cst_157 = arith.constant 1.000000e+00 : f32
    %534 = vector.broadcast %cst_157 : f32 to vector<8x128xf32>
    %535 = arith.subf %534, %526 : vector<8x128xf32>
    %536 = arith.mulf %535, %533 : vector<8x128xf32>
    %537 = arith.mulf %526, %505 : vector<8x128xf32>
    %538 = arith.addf %536, %537 : vector<8x128xf32>
    %539 = arith.truncf %538 : vector<8x128xf32> to vector<8x128xbf16>
    %cst_158 = arith.constant dense<0.000000e+00> : vector<8x256xf32>
    %540 = tpu.matmul %539, %278, %cst_158 {dimension_numbers = #tpu.dot_dimension_numbers<[1], [0], [0], [1], [0, 0, 1, 1], [], []>} : vector<8x128xbf16>, vector<128x256xbf16>, vector<8x256xf32> -> vector<8x256xf32>
    %541 = vector.broadcast %279 : vector<1x256xf32> to vector<8x256xf32>
    %542 = arith.addf %540, %541 : vector<8x256xf32>
    %543 = arith.index_cast %513 : i32 to index
    %c0_159 = arith.constant 0 : index
    %544 = vector.load %arg21[%543, %c0_159] : memref<64x256xf32, #tpu.memory_space<vmem>>, vector<8x256xf32>
    tpu.vector_store %arg21[%543, %c0_159], %542 {strides = array<i32>} : memref<64x256xf32, #tpu.memory_space<vmem>>, vector<8x256xf32>,
    %c8_i32_160 = arith.constant 8 : i32
    %c0_161 = arith.constant 0 : index
    %c0_162 = arith.constant 0 : index
    %545 = vector.load %arg11[%c0_161, %c0_162] : memref<128x256xbf16, #tpu.memory_space<vmem>>, vector<128x256xbf16>
    %c0_163 = arith.constant 0 : index
    %c0_164 = arith.constant 0 : index
    %546 = vector.load %arg13[%c0_163, %c0_164] : memref<1x128xf32, #tpu.memory_space<vmem>>, vector<1x128xf32>
    %cst_165 = arith.constant 0.000000e+00 : f32
    %547 = vector.broadcast %cst_165 : f32 to vector<8x128xf32>
    %c0_i32_166 = arith.constant 0 : i32
    %c8_i32_167 = arith.constant 8 : i32
    %548 = arith.muli %c0_i32_166, %c8_i32_167 : i32
    %549 = tpu.assume_multiple %548, 8 : i32
    %550 = arith.index_cast %549 : i32 to index
    %c0_168 = arith.constant 0 : index
    %551 = vector.load %arg21[%550, %c0_168] : memref<64x256xf32, #tpu.memory_space<vmem>>, vector<8x256xf32>
    %552 = arith.truncf %547 : vector<8x128xf32> to vector<8x128xbf16>
    %cst_169 = arith.constant dense<0.000000e+00> : vector<8x256xf32>
    %553 = tpu.matmul %552, %545, %cst_169 {dimension_numbers = #tpu.dot_dimension_numbers<[1], [0], [0], [1], [0, 0, 1, 1], [], []>} : vector<8x128xbf16>, vector<128x256xbf16>, vector<8x256xf32> -> vector<8x256xf32>
    %554 = vector.extract_strided_slice %551 {offsets = [0, 0], sizes = [8, 128], strides = [1, 1]} : vector<8x256xf32> to vector<8x128xf32>
    %555 = vector.extract_strided_slice %553 {offsets = [0, 0], sizes = [8, 128], strides = [1, 1]} : vector<8x256xf32> to vector<8x128xf32>
    %556 = arith.addf %554, %555 : vector<8x128xf32>
    %557 = arith.negf %556 : vector<8x128xf32>
    %558 = math.exp %557 : vector<8x128xf32>
    %cst_170 = arith.constant 1.000000e+00 : f32
    %559 = vector.broadcast %cst_170 : f32 to vector<8x128xf32>
    %560 = arith.addf %559, %558 : vector<8x128xf32>
    %561 = arith.divf %559, %560 : vector<8x128xf32>
    %c64_i32_171 = arith.constant 64 : i32
    %562 = tpu.dynamic_rotate %561 by %c64_i32_171 dim 1 : vector<8x128xf32>, i32 -> vector<8x128xf32>
    %563 = vector.extract_strided_slice %551 {offsets = [0, 128], sizes = [8, 128], strides = [1, 1]} : vector<8x256xf32> to vector<8x128xf32>
    %564 = vector.extract_strided_slice %553 {offsets = [0, 128], sizes = [8, 128], strides = [1, 1]} : vector<8x256xf32> to vector<8x128xf32>
    %565 = vector.broadcast %546 : vector<1x128xf32> to vector<8x128xf32>
    %566 = arith.addf %564, %565 : vector<8x128xf32>
    %567 = arith.mulf %561, %566 : vector<8x128xf32>
    %568 = arith.addf %563, %567 : vector<8x128xf32>
    %569 = math.tanh %568 : vector<8x128xf32>
    %cst_172 = arith.constant 1.000000e+00 : f32
    %570 = vector.broadcast %cst_172 : f32 to vector<8x128xf32>
    %571 = arith.subf %570, %562 : vector<8x128xf32>
    %572 = arith.mulf %571, %569 : vector<8x128xf32>
    %573 = arith.mulf %562, %547 : vector<8x128xf32>
    %574 = arith.addf %572, %573 : vector<8x128xf32>
    %c1_i32_173 = arith.constant 1 : i32
    %c8_i32_174 = arith.constant 8 : i32
    %575 = arith.muli %c1_i32_173, %c8_i32_174 : i32
    %576 = tpu.assume_multiple %575, 8 : i32
    %577 = arith.index_cast %576 : i32 to index
    %c0_175 = arith.constant 0 : index
    %578 = vector.load %arg21[%577, %c0_175] : memref<64x256xf32, #tpu.memory_space<vmem>>, vector<8x256xf32>
    %579 = arith.truncf %574 : vector<8x128xf32> to vector<8x128xbf16>
    %cst_176 = arith.constant dense<0.000000e+00> : vector<8x256xf32>
    %580 = tpu.matmul %579, %545, %cst_176 {dimension_numbers = #tpu.dot_dimension_numbers<[1], [0], [0], [1], [0, 0, 1, 1], [], []>} : vector<8x128xbf16>, vector<128x256xbf16>, vector<8x256xf32> -> vector<8x256xf32>
    %581 = vector.extract_strided_slice %578 {offsets = [0, 0], sizes = [8, 128], strides = [1, 1]} : vector<8x256xf32> to vector<8x128xf32>
    %582 = vector.extract_strided_slice %580 {offsets = [0, 0], sizes = [8, 128], strides = [1, 1]} : vector<8x256xf32> to vector<8x128xf32>
    %583 = arith.addf %581, %582 : vector<8x128xf32>
    %584 = arith.negf %583 : vector<8x128xf32>
    %585 = math.exp %584 : vector<8x128xf32>
    %cst_177 = arith.constant 1.000000e+00 : f32
    %586 = vector.broadcast %cst_177 : f32 to vector<8x128xf32>
    %587 = arith.addf %586, %585 : vector<8x128xf32>
    %588 = arith.divf %586, %587 : vector<8x128xf32>
    %c64_i32_178 = arith.constant 64 : i32
    %589 = tpu.dynamic_rotate %588 by %c64_i32_178 dim 1 : vector<8x128xf32>, i32 -> vector<8x128xf32>
    %590 = vector.extract_strided_slice %578 {offsets = [0, 128], sizes = [8, 128], strides = [1, 1]} : vector<8x256xf32> to vector<8x128xf32>
    %591 = vector.extract_strided_slice %580 {offsets = [0, 128], sizes = [8, 128], strides = [1, 1]} : vector<8x256xf32> to vector<8x128xf32>
    %592 = vector.broadcast %546 : vector<1x128xf32> to vector<8x128xf32>
    %593 = arith.addf %591, %592 : vector<8x128xf32>
    %594 = arith.mulf %588, %593 : vector<8x128xf32>
    %595 = arith.addf %590, %594 : vector<8x128xf32>
    %596 = math.tanh %595 : vector<8x128xf32>
    %cst_179 = arith.constant 1.000000e+00 : f32
    %597 = vector.broadcast %cst_179 : f32 to vector<8x128xf32>
    %598 = arith.subf %597, %589 : vector<8x128xf32>
    %599 = arith.mulf %598, %596 : vector<8x128xf32>
    %600 = arith.mulf %589, %574 : vector<8x128xf32>
    %601 = arith.addf %599, %600 : vector<8x128xf32>
    %c2_i32_180 = arith.constant 2 : i32
    %c8_i32_181 = arith.constant 8 : i32
    %602 = arith.muli %c2_i32_180, %c8_i32_181 : i32
    %603 = tpu.assume_multiple %602, 8 : i32
    %604 = arith.index_cast %603 : i32 to index
    %c0_182 = arith.constant 0 : index
    %605 = vector.load %arg21[%604, %c0_182] : memref<64x256xf32, #tpu.memory_space<vmem>>, vector<8x256xf32>
    %606 = arith.truncf %601 : vector<8x128xf32> to vector<8x128xbf16>
    %cst_183 = arith.constant dense<0.000000e+00> : vector<8x256xf32>
    %607 = tpu.matmul %606, %545, %cst_183 {dimension_numbers = #tpu.dot_dimension_numbers<[1], [0], [0], [1], [0, 0, 1, 1], [], []>} : vector<8x128xbf16>, vector<128x256xbf16>, vector<8x256xf32> -> vector<8x256xf32>
    %608 = vector.extract_strided_slice %605 {offsets = [0, 0], sizes = [8, 128], strides = [1, 1]} : vector<8x256xf32> to vector<8x128xf32>
    %609 = vector.extract_strided_slice %607 {offsets = [0, 0], sizes = [8, 128], strides = [1, 1]} : vector<8x256xf32> to vector<8x128xf32>
    %610 = arith.addf %608, %609 : vector<8x128xf32>
    %611 = arith.negf %610 : vector<8x128xf32>
    %612 = math.exp %611 : vector<8x128xf32>
    %cst_184 = arith.constant 1.000000e+00 : f32
    %613 = vector.broadcast %cst_184 : f32 to vector<8x128xf32>
    %614 = arith.addf %613, %612 : vector<8x128xf32>
    %615 = arith.divf %613, %614 : vector<8x128xf32>
    %c64_i32_185 = arith.constant 64 : i32
    %616 = tpu.dynamic_rotate %615 by %c64_i32_185 dim 1 : vector<8x128xf32>, i32 -> vector<8x128xf32>
    %617 = vector.extract_strided_slice %605 {offsets = [0, 128], sizes = [8, 128], strides = [1, 1]} : vector<8x256xf32> to vector<8x128xf32>
    %618 = vector.extract_strided_slice %607 {offsets = [0, 128], sizes = [8, 128], strides = [1, 1]} : vector<8x256xf32> to vector<8x128xf32>
    %619 = vector.broadcast %546 : vector<1x128xf32> to vector<8x128xf32>
    %620 = arith.addf %618, %619 : vector<8x128xf32>
    %621 = arith.mulf %615, %620 : vector<8x128xf32>
    %622 = arith.addf %617, %621 : vector<8x128xf32>
    %623 = math.tanh %622 : vector<8x128xf32>
    %cst_186 = arith.constant 1.000000e+00 : f32
    %624 = vector.broadcast %cst_186 : f32 to vector<8x128xf32>
    %625 = arith.subf %624, %616 : vector<8x128xf32>
    %626 = arith.mulf %625, %623 : vector<8x128xf32>
    %627 = arith.mulf %616, %601 : vector<8x128xf32>
    %628 = arith.addf %626, %627 : vector<8x128xf32>
    %c3_i32_187 = arith.constant 3 : i32
    %c8_i32_188 = arith.constant 8 : i32
    %629 = arith.muli %c3_i32_187, %c8_i32_188 : i32
    %630 = tpu.assume_multiple %629, 8 : i32
    %631 = arith.index_cast %630 : i32 to index
    %c0_189 = arith.constant 0 : index
    %632 = vector.load %arg21[%631, %c0_189] : memref<64x256xf32, #tpu.memory_space<vmem>>, vector<8x256xf32>
    %633 = arith.truncf %628 : vector<8x128xf32> to vector<8x128xbf16>
    %cst_190 = arith.constant dense<0.000000e+00> : vector<8x256xf32>
    %634 = tpu.matmul %633, %545, %cst_190 {dimension_numbers = #tpu.dot_dimension_numbers<[1], [0], [0], [1], [0, 0, 1, 1], [], []>} : vector<8x128xbf16>, vector<128x256xbf16>, vector<8x256xf32> -> vector<8x256xf32>
    %635 = vector.extract_strided_slice %632 {offsets = [0, 0], sizes = [8, 128], strides = [1, 1]} : vector<8x256xf32> to vector<8x128xf32>
    %636 = vector.extract_strided_slice %634 {offsets = [0, 0], sizes = [8, 128], strides = [1, 1]} : vector<8x256xf32> to vector<8x128xf32>
    %637 = arith.addf %635, %636 : vector<8x128xf32>
    %638 = arith.negf %637 : vector<8x128xf32>
    %639 = math.exp %638 : vector<8x128xf32>
    %cst_191 = arith.constant 1.000000e+00 : f32
    %640 = vector.broadcast %cst_191 : f32 to vector<8x128xf32>
    %641 = arith.addf %640, %639 : vector<8x128xf32>
    %642 = arith.divf %640, %641 : vector<8x128xf32>
    %c64_i32_192 = arith.constant 64 : i32
    %643 = tpu.dynamic_rotate %642 by %c64_i32_192 dim 1 : vector<8x128xf32>, i32 -> vector<8x128xf32>
    %644 = vector.extract_strided_slice %632 {offsets = [0, 128], sizes = [8, 128], strides = [1, 1]} : vector<8x256xf32> to vector<8x128xf32>
    %645 = vector.extract_strided_slice %634 {offsets = [0, 128], sizes = [8, 128], strides = [1, 1]} : vector<8x256xf32> to vector<8x128xf32>
    %646 = vector.broadcast %546 : vector<1x128xf32> to vector<8x128xf32>
    %647 = arith.addf %645, %646 : vector<8x128xf32>
    %648 = arith.mulf %642, %647 : vector<8x128xf32>
    %649 = arith.addf %644, %648 : vector<8x128xf32>
    %650 = math.tanh %649 : vector<8x128xf32>
    %cst_193 = arith.constant 1.000000e+00 : f32
    %651 = vector.broadcast %cst_193 : f32 to vector<8x128xf32>
    %652 = arith.subf %651, %643 : vector<8x128xf32>
    %653 = arith.mulf %652, %650 : vector<8x128xf32>
    %654 = arith.mulf %643, %628 : vector<8x128xf32>
    %655 = arith.addf %653, %654 : vector<8x128xf32>
    %c4_i32_194 = arith.constant 4 : i32
    %c8_i32_195 = arith.constant 8 : i32
    %656 = arith.muli %c4_i32_194, %c8_i32_195 : i32
    %657 = tpu.assume_multiple %656, 8 : i32
    %658 = arith.index_cast %657 : i32 to index
    %c0_196 = arith.constant 0 : index
    %659 = vector.load %arg21[%658, %c0_196] : memref<64x256xf32, #tpu.memory_space<vmem>>, vector<8x256xf32>
    %660 = arith.truncf %655 : vector<8x128xf32> to vector<8x128xbf16>
    %cst_197 = arith.constant dense<0.000000e+00> : vector<8x256xf32>
    %661 = tpu.matmul %660, %545, %cst_197 {dimension_numbers = #tpu.dot_dimension_numbers<[1], [0], [0], [1], [0, 0, 1, 1], [], []>} : vector<8x128xbf16>, vector<128x256xbf16>, vector<8x256xf32> -> vector<8x256xf32>
    %662 = vector.extract_strided_slice %659 {offsets = [0, 0], sizes = [8, 128], strides = [1, 1]} : vector<8x256xf32> to vector<8x128xf32>
    %663 = vector.extract_strided_slice %661 {offsets = [0, 0], sizes = [8, 128], strides = [1, 1]} : vector<8x256xf32> to vector<8x128xf32>
    %664 = arith.addf %662, %663 : vector<8x128xf32>
    %665 = arith.negf %664 : vector<8x128xf32>
    %666 = math.exp %665 : vector<8x128xf32>
    %cst_198 = arith.constant 1.000000e+00 : f32
    %667 = vector.broadcast %cst_198 : f32 to vector<8x128xf32>
    %668 = arith.addf %667, %666 : vector<8x128xf32>
    %669 = arith.divf %667, %668 : vector<8x128xf32>
    %c64_i32_199 = arith.constant 64 : i32
    %670 = tpu.dynamic_rotate %669 by %c64_i32_199 dim 1 : vector<8x128xf32>, i32 -> vector<8x128xf32>
    %671 = vector.extract_strided_slice %659 {offsets = [0, 128], sizes = [8, 128], strides = [1, 1]} : vector<8x256xf32> to vector<8x128xf32>
    %672 = vector.extract_strided_slice %661 {offsets = [0, 128], sizes = [8, 128], strides = [1, 1]} : vector<8x256xf32> to vector<8x128xf32>
    %673 = vector.broadcast %546 : vector<1x128xf32> to vector<8x128xf32>
    %674 = arith.addf %672, %673 : vector<8x128xf32>
    %675 = arith.mulf %669, %674 : vector<8x128xf32>
    %676 = arith.addf %671, %675 : vector<8x128xf32>
    %677 = math.tanh %676 : vector<8x128xf32>
    %cst_200 = arith.constant 1.000000e+00 : f32
    %678 = vector.broadcast %cst_200 : f32 to vector<8x128xf32>
    %679 = arith.subf %678, %670 : vector<8x128xf32>
    %680 = arith.mulf %679, %677 : vector<8x128xf32>
    %681 = arith.mulf %670, %655 : vector<8x128xf32>
    %682 = arith.addf %680, %681 : vector<8x128xf32>
    %c5_i32_201 = arith.constant 5 : i32
    %c8_i32_202 = arith.constant 8 : i32
    %683 = arith.muli %c5_i32_201, %c8_i32_202 : i32
    %684 = tpu.assume_multiple %683, 8 : i32
    %685 = arith.index_cast %684 : i32 to index
    %c0_203 = arith.constant 0 : index
    %686 = vector.load %arg21[%685, %c0_203] : memref<64x256xf32, #tpu.memory_space<vmem>>, vector<8x256xf32>
    %687 = arith.truncf %682 : vector<8x128xf32> to vector<8x128xbf16>
    %cst_204 = arith.constant dense<0.000000e+00> : vector<8x256xf32>
    %688 = tpu.matmul %687, %545, %cst_204 {dimension_numbers = #tpu.dot_dimension_numbers<[1], [0], [0], [1], [0, 0, 1, 1], [], []>} : vector<8x128xbf16>, vector<128x256xbf16>, vector<8x256xf32> -> vector<8x256xf32>
    %689 = vector.extract_strided_slice %686 {offsets = [0, 0], sizes = [8, 128], strides = [1, 1]} : vector<8x256xf32> to vector<8x128xf32>
    %690 = vector.extract_strided_slice %688 {offsets = [0, 0], sizes = [8, 128], strides = [1, 1]} : vector<8x256xf32> to vector<8x128xf32>
    %691 = arith.addf %689, %690 : vector<8x128xf32>
    %692 = arith.negf %691 : vector<8x128xf32>
    %693 = math.exp %692 : vector<8x128xf32>
    %cst_205 = arith.constant 1.000000e+00 : f32
    %694 = vector.broadcast %cst_205 : f32 to vector<8x128xf32>
    %695 = arith.addf %694, %693 : vector<8x128xf32>
    %696 = arith.divf %694, %695 : vector<8x128xf32>
    %c64_i32_206 = arith.constant 64 : i32
    %697 = tpu.dynamic_rotate %696 by %c64_i32_206 dim 1 : vector<8x128xf32>, i32 -> vector<8x128xf32>
    %698 = vector.extract_strided_slice %686 {offsets = [0, 128], sizes = [8, 128], strides = [1, 1]} : vector<8x256xf32> to vector<8x128xf32>
    %699 = vector.extract_strided_slice %688 {offsets = [0, 128], sizes = [8, 128], strides = [1, 1]} : vector<8x256xf32> to vector<8x128xf32>
    %700 = vector.broadcast %546 : vector<1x128xf32> to vector<8x128xf32>
    %701 = arith.addf %699, %700 : vector<8x128xf32>
    %702 = arith.mulf %696, %701 : vector<8x128xf32>
    %703 = arith.addf %698, %702 : vector<8x128xf32>
    %704 = math.tanh %703 : vector<8x128xf32>
    %cst_207 = arith.constant 1.000000e+00 : f32
    %705 = vector.broadcast %cst_207 : f32 to vector<8x128xf32>
    %706 = arith.subf %705, %697 : vector<8x128xf32>
    %707 = arith.mulf %706, %704 : vector<8x128xf32>
    %708 = arith.mulf %697, %682 : vector<8x128xf32>
    %709 = arith.addf %707, %708 : vector<8x128xf32>
    %c6_i32_208 = arith.constant 6 : i32
    %c8_i32_209 = arith.constant 8 : i32
    %710 = arith.muli %c6_i32_208, %c8_i32_209 : i32
    %711 = tpu.assume_multiple %710, 8 : i32
    %712 = arith.index_cast %711 : i32 to index
    %c0_210 = arith.constant 0 : index
    %713 = vector.load %arg21[%712, %c0_210] : memref<64x256xf32, #tpu.memory_space<vmem>>, vector<8x256xf32>
    %714 = arith.truncf %709 : vector<8x128xf32> to vector<8x128xbf16>
    %cst_211 = arith.constant dense<0.000000e+00> : vector<8x256xf32>
    %715 = tpu.matmul %714, %545, %cst_211 {dimension_numbers = #tpu.dot_dimension_numbers<[1], [0], [0], [1], [0, 0, 1, 1], [], []>} : vector<8x128xbf16>, vector<128x256xbf16>, vector<8x256xf32> -> vector<8x256xf32>
    %716 = vector.extract_strided_slice %713 {offsets = [0, 0], sizes = [8, 128], strides = [1, 1]} : vector<8x256xf32> to vector<8x128xf32>
    %717 = vector.extract_strided_slice %715 {offsets = [0, 0], sizes = [8, 128], strides = [1, 1]} : vector<8x256xf32> to vector<8x128xf32>
    %718 = arith.addf %716, %717 : vector<8x128xf32>
    %719 = arith.negf %718 : vector<8x128xf32>
    %720 = math.exp %719 : vector<8x128xf32>
    %cst_212 = arith.constant 1.000000e+00 : f32
    %721 = vector.broadcast %cst_212 : f32 to vector<8x128xf32>
    %722 = arith.addf %721, %720 : vector<8x128xf32>
    %723 = arith.divf %721, %722 : vector<8x128xf32>
    %c64_i32_213 = arith.constant 64 : i32
    %724 = tpu.dynamic_rotate %723 by %c64_i32_213 dim 1 : vector<8x128xf32>, i32 -> vector<8x128xf32>
    %725 = vector.extract_strided_slice %713 {offsets = [0, 128], sizes = [8, 128], strides = [1, 1]} : vector<8x256xf32> to vector<8x128xf32>
    %726 = vector.extract_strided_slice %715 {offsets = [0, 128], sizes = [8, 128], strides = [1, 1]} : vector<8x256xf32> to vector<8x128xf32>
    %727 = vector.broadcast %546 : vector<1x128xf32> to vector<8x128xf32>
    %728 = arith.addf %726, %727 : vector<8x128xf32>
    %729 = arith.mulf %723, %728 : vector<8x128xf32>
    %730 = arith.addf %725, %729 : vector<8x128xf32>
    %731 = math.tanh %730 : vector<8x128xf32>
    %cst_214 = arith.constant 1.000000e+00 : f32
    %732 = vector.broadcast %cst_214 : f32 to vector<8x128xf32>
    %733 = arith.subf %732, %724 : vector<8x128xf32>
    %734 = arith.mulf %733, %731 : vector<8x128xf32>
    %735 = arith.mulf %724, %709 : vector<8x128xf32>
    %736 = arith.addf %734, %735 : vector<8x128xf32>
    %c7_i32_215 = arith.constant 7 : i32
    %c8_i32_216 = arith.constant 8 : i32
    %737 = arith.muli %c7_i32_215, %c8_i32_216 : i32
    %738 = tpu.assume_multiple %737, 8 : i32
    %739 = arith.index_cast %738 : i32 to index
    %c0_217 = arith.constant 0 : index
    %740 = vector.load %arg21[%739, %c0_217] : memref<64x256xf32, #tpu.memory_space<vmem>>, vector<8x256xf32>
    %741 = arith.truncf %736 : vector<8x128xf32> to vector<8x128xbf16>
    %cst_218 = arith.constant dense<0.000000e+00> : vector<8x256xf32>
    %742 = tpu.matmul %741, %545, %cst_218 {dimension_numbers = #tpu.dot_dimension_numbers<[1], [0], [0], [1], [0, 0, 1, 1], [], []>} : vector<8x128xbf16>, vector<128x256xbf16>, vector<8x256xf32> -> vector<8x256xf32>
    %743 = vector.extract_strided_slice %740 {offsets = [0, 0], sizes = [8, 128], strides = [1, 1]} : vector<8x256xf32> to vector<8x128xf32>
    %744 = vector.extract_strided_slice %742 {offsets = [0, 0], sizes = [8, 128], strides = [1, 1]} : vector<8x256xf32> to vector<8x128xf32>
    %745 = arith.addf %743, %744 : vector<8x128xf32>
    %746 = arith.negf %745 : vector<8x128xf32>
    %747 = math.exp %746 : vector<8x128xf32>
    %cst_219 = arith.constant 1.000000e+00 : f32
    %748 = vector.broadcast %cst_219 : f32 to vector<8x128xf32>
    %749 = arith.addf %748, %747 : vector<8x128xf32>
    %750 = arith.divf %748, %749 : vector<8x128xf32>
    %c64_i32_220 = arith.constant 64 : i32
    %751 = tpu.dynamic_rotate %750 by %c64_i32_220 dim 1 : vector<8x128xf32>, i32 -> vector<8x128xf32>
    %752 = vector.extract_strided_slice %740 {offsets = [0, 128], sizes = [8, 128], strides = [1, 1]} : vector<8x256xf32> to vector<8x128xf32>
    %753 = vector.extract_strided_slice %742 {offsets = [0, 128], sizes = [8, 128], strides = [1, 1]} : vector<8x256xf32> to vector<8x128xf32>
    %754 = vector.broadcast %546 : vector<1x128xf32> to vector<8x128xf32>
    %755 = arith.addf %753, %754 : vector<8x128xf32>
    %756 = arith.mulf %750, %755 : vector<8x128xf32>
    %757 = arith.addf %752, %756 : vector<8x128xf32>
    %758 = math.tanh %757 : vector<8x128xf32>
    %cst_221 = arith.constant 1.000000e+00 : f32
    %759 = vector.broadcast %cst_221 : f32 to vector<8x128xf32>
    %760 = arith.subf %759, %751 : vector<8x128xf32>
    %761 = arith.mulf %760, %758 : vector<8x128xf32>
    %762 = arith.mulf %751, %736 : vector<8x128xf32>
    %763 = arith.addf %761, %762 : vector<8x128xf32>
    %c8_i32_222 = arith.constant 8 : i32
    %764 = arith.truncf %763 : vector<8x128xf32> to vector<8x128xbf16>
    %c0_223 = arith.constant 0 : index
    %c0_224 = arith.constant 0 : index
    %765 = vector.load %arg14[%c0_223, %c0_224] : memref<128x128xbf16, #tpu.memory_space<vmem>>, vector<128x128xbf16>
    %cst_225 = arith.constant dense<0.000000e+00> : vector<8x128xf32>
    %766 = tpu.matmul %764, %765, %cst_225 {dimension_numbers = #tpu.dot_dimension_numbers<[1], [0], [0], [1], [0, 0, 1, 1], [], []>} : vector<8x128xbf16>, vector<128x128xbf16>, vector<8x128xf32> -> vector<8x128xf32>
    %c0_226 = arith.constant 0 : index
    %c0_227 = arith.constant 0 : index
    %767 = vector.load %arg15[%c0_226, %c0_227] : memref<1x128xf32, #tpu.memory_space<vmem>>, vector<1x128xf32>
    %768 = vector.broadcast %767 : vector<1x128xf32> to vector<8x128xf32>
    %769 = arith.addf %766, %768 : vector<8x128xf32>
    %cst_228 = arith.constant 0.000000e+00 : f32
    %770 = vector.broadcast %cst_228 : f32 to vector<8x128xf32>
    %771 = arith.maximumf %769, %770 : vector<8x128xf32>
    %772 = arith.truncf %771 : vector<8x128xf32> to vector<8x128xbf16>
    %c0_229 = arith.constant 0 : index
    %c0_230 = arith.constant 0 : index
    %773 = vector.load %arg16[%c0_229, %c0_230] : memref<128x128xbf16, #tpu.memory_space<vmem>>, vector<128x128xbf16>
    %cst_231 = arith.constant dense<0.000000e+00> : vector<8x128xf32>
    %774 = tpu.matmul %772, %773, %cst_231 {dimension_numbers = #tpu.dot_dimension_numbers<[1], [0], [0], [1], [0, 0, 1, 1], [], []>} : vector<8x128xbf16>, vector<128x128xbf16>, vector<8x128xf32> -> vector<8x128xf32>
    %c0_232 = arith.constant 0 : index
    %c0_233 = arith.constant 0 : index
    %775 = vector.load %arg17[%c0_232, %c0_233] : memref<1x128xf32, #tpu.memory_space<vmem>>, vector<1x128xf32>
    %776 = vector.broadcast %775 : vector<1x128xf32> to vector<8x128xf32>
    %777 = arith.addf %774, %776 : vector<8x128xf32>
    %cst_234 = arith.constant 0.000000e+00 : f32
    %778 = vector.broadcast %cst_234 : f32 to vector<8x128xf32>
    %779 = arith.maximumf %777, %778 : vector<8x128xf32>
    %780 = arith.truncf %779 : vector<8x128xf32> to vector<8x128xbf16>
    %c0_235 = arith.constant 0 : index
    %c0_236 = arith.constant 0 : index
    %781 = vector.load %arg18[%c0_235, %c0_236] : memref<128x128xbf16, #tpu.memory_space<vmem>>, vector<128x128xbf16>
    %cst_237 = arith.constant dense<0.000000e+00> : vector<8x128xf32>
    %782 = tpu.matmul %780, %781, %cst_237 {dimension_numbers = #tpu.dot_dimension_numbers<[1], [0], [0], [1], [0, 0, 1, 1], [], []>} : vector<8x128xbf16>, vector<128x128xbf16>, vector<8x128xf32> -> vector<8x128xf32>
    %c0_238 = arith.constant 0 : index
    %c0_239 = arith.constant 0 : index
    %783 = vector.load %arg19[%c0_238, %c0_239] : memref<1x128xf32, #tpu.memory_space<vmem>>, vector<1x128xf32>
    %784 = vector.broadcast %783 : vector<1x128xf32> to vector<8x128xf32>
    %785 = arith.addf %782, %784 : vector<8x128xf32>
    %c0_240 = arith.constant 0 : index
    %c0_241 = arith.constant 0 : index
    %786 = vector.load %arg20[%c0_240, %c0_241] : memref<8x128xf32, #tpu.memory_space<vmem>>, vector<8x128xf32>
    tpu.vector_store %arg20[%c0_240, %c0_241], %785 {strides = array<i32>} : memref<8x128xf32, #tpu.memory_space<vmem>>, vector<8x128xf32>,
    return
  }
  func.func @transform_0(%arg0: i32) -> (i32, i32) {
    %c0_i32 = arith.constant 0 : i32
    %c0_i32_0 = arith.constant 0 : i32
    return %arg0, %c0_i32 : i32, i32
  }
  func.func @transform_1(%arg0: i32) -> (i32, i32) {
    %c0_i32 = arith.constant 0 : i32
    %c0_i32_0 = arith.constant 0 : i32
    %c0_i32_1 = arith.constant 0 : i32
    return %c0_i32, %c0_i32_0 : i32, i32
  }
  func.func @transform_2(%arg0: i32) -> (i32, i32) {
    %c0_i32 = arith.constant 0 : i32
    %c0_i32_0 = arith.constant 0 : i32
    %c0_i32_1 = arith.constant 0 : i32
    return %c0_i32, %c0_i32_0 : i32, i32
  }
  func.func @transform_3(%arg0: i32) -> (i32, i32) {
    %c0_i32 = arith.constant 0 : i32
    %c0_i32_0 = arith.constant 0 : i32
    %c0_i32_1 = arith.constant 0 : i32
    return %c0_i32, %c0_i32_0 : i32, i32
  }
  func.func @transform_4(%arg0: i32) -> (i32, i32) {
    %c0_i32 = arith.constant 0 : i32
    %c0_i32_0 = arith.constant 0 : i32
    %c0_i32_1 = arith.constant 0 : i32
    return %c0_i32, %c0_i32_0 : i32, i32
  }
  func.func @transform_5(%arg0: i32) -> (i32, i32) {
    %c0_i32 = arith.constant 0 : i32
    %c0_i32_0 = arith.constant 0 : i32
    %c0_i32_1 = arith.constant 0 : i32
    return %c0_i32, %c0_i32_0 : i32, i32
  }
  func.func @transform_6(%arg0: i32) -> (i32, i32) {
    %c0_i32 = arith.constant 0 : i32
    %c0_i32_0 = arith.constant 0 : i32
    %c0_i32_1 = arith.constant 0 : i32
    return %c0_i32, %c0_i32_0 : i32, i32
  }
  func.func @transform_7(%arg0: i32) -> (i32, i32) {
    %c0_i32 = arith.constant 0 : i32
    %c0_i32_0 = arith.constant 0 : i32
    %c0_i32_1 = arith.constant 0 : i32
    return %c0_i32, %c0_i32_0 : i32, i32
  }
  func.func @transform_8(%arg0: i32) -> (i32, i32) {
    %c0_i32 = arith.constant 0 : i32
    %c0_i32_0 = arith.constant 0 : i32
    %c0_i32_1 = arith.constant 0 : i32
    return %c0_i32, %c0_i32_0 : i32, i32
  }
  func.func @transform_9(%arg0: i32) -> (i32, i32) {
    %c0_i32 = arith.constant 0 : i32
    %c0_i32_0 = arith.constant 0 : i32
    %c0_i32_1 = arith.constant 0 : i32
    return %c0_i32, %c0_i32_0 : i32, i32
  }
  func.func @transform_10(%arg0: i32) -> (i32, i32) {
    %c0_i32 = arith.constant 0 : i32
    %c0_i32_0 = arith.constant 0 : i32
    %c0_i32_1 = arith.constant 0 : i32
    return %c0_i32, %c0_i32_0 : i32, i32
  }
  func.func @transform_11(%arg0: i32) -> (i32, i32) {
    %c0_i32 = arith.constant 0 : i32
    %c0_i32_0 = arith.constant 0 : i32
    %c0_i32_1 = arith.constant 0 : i32
    return %c0_i32, %c0_i32_0 : i32, i32
  }
  func.func @transform_12(%arg0: i32) -> (i32, i32) {
    %c0_i32 = arith.constant 0 : i32
    %c0_i32_0 = arith.constant 0 : i32
    %c0_i32_1 = arith.constant 0 : i32
    return %c0_i32, %c0_i32_0 : i32, i32
  }
  func.func @transform_13(%arg0: i32) -> (i32, i32) {
    %c0_i32 = arith.constant 0 : i32
    %c0_i32_0 = arith.constant 0 : i32
    %c0_i32_1 = arith.constant 0 : i32
    return %c0_i32, %c0_i32_0 : i32, i32
  }
  func.func @transform_14(%arg0: i32) -> (i32, i32) {
    %c0_i32 = arith.constant 0 : i32
    %c0_i32_0 = arith.constant 0 : i32
    %c0_i32_1 = arith.constant 0 : i32
    return %c0_i32, %c0_i32_0 : i32, i32
  }
  func.func @transform_15(%arg0: i32) -> (i32, i32) {
    %c0_i32 = arith.constant 0 : i32
    %c0_i32_0 = arith.constant 0 : i32
    %c0_i32_1 = arith.constant 0 : i32
    return %c0_i32, %c0_i32_0 : i32, i32
  }
  func.func @transform_16(%arg0: i32) -> (i32, i32) {
    %c0_i32 = arith.constant 0 : i32
    %c0_i32_0 = arith.constant 0 : i32
    %c0_i32_1 = arith.constant 0 : i32
    return %c0_i32, %c0_i32_0 : i32, i32
  }
  func.func @transform_17(%arg0: i32) -> (i32, i32) {
    %c0_i32 = arith.constant 0 : i32
    %c0_i32_0 = arith.constant 0 : i32
    %c0_i32_1 = arith.constant 0 : i32
    return %c0_i32, %c0_i32_0 : i32, i32
  }
  func.func @transform_18(%arg0: i32) -> (i32, i32) {
    %c0_i32 = arith.constant 0 : i32
    %c0_i32_0 = arith.constant 0 : i32
    %c0_i32_1 = arith.constant 0 : i32
    return %c0_i32, %c0_i32_0 : i32, i32
  }
  func.func @transform_19(%arg0: i32) -> (i32, i32) {
    %c0_i32 = arith.constant 0 : i32
    %c0_i32_0 = arith.constant 0 : i32
    return %arg0, %c0_i32 : i32, i32
  }
}

</mosaic_0001>

<llo_original>
// kernel: tpu_custom_call.1
$region0: #{tpu_custom_call.1}
  #allocation0 [shape = 'u32[]', space=smem, size = 0x4, offset = 0x4, fixed_abs, tag = 'smem constant byte address 0x4 - core index']
  #allocation1 [shape = 'u32[72,128]{1,0:T(1,128)}', space=vmem, size = 0x9000, scoped, tag = 'internal scratch']
  #allocation2 [shape = 'f32[64,256]{1,0:T(8,128)}', space=vmem, size = 0x10000, scoped, tag = 'scratch operand']
  %s0 = inlined_call_operand.vmem [shape: bf16[64,22], index: 0, kind: input, shape index: {}]
  %s1 = inlined_call_operand.vmem [shape: bf16[22,256], index: 1, kind: input, shape index: {}]
  %s2 = inlined_call_operand.hbm [shape: bf16[128,256], index: 2, kind: input, shape index: {}]
  %s3 = inlined_call_operand.vmem [shape: f32[1,256], index: 3, kind: input, shape index: {}]
  %s4 = inlined_call_operand.vmem [shape: f32[1,128], index: 4, kind: input, shape index: {}]
  %s5 = inlined_call_operand.hbm [shape: bf16[128,256], index: 5, kind: input, shape index: {}]
  %s6 = inlined_call_operand.hbm [shape: bf16[128,256], index: 6, kind: input, shape index: {}]
  %s7 = inlined_call_operand.vmem [shape: f32[1,256], index: 7, kind: input, shape index: {}]
  %s8 = inlined_call_operand.vmem [shape: f32[1,128], index: 8, kind: input, shape index: {}]
  %s9 = inlined_call_operand.hbm [shape: bf16[128,256], index: 9, kind: input, shape index: {}]
  %s10 = inlined_call_operand.hbm [shape: bf16[128,256], index: 10, kind: input, shape index: {}]
  %s11 = inlined_call_operand.vmem [shape: f32[1,256], index: 11, kind: input, shape index: {}]
  %s12 = inlined_call_operand.vmem [shape: f32[1,128], index: 12, kind: input, shape index: {}]
  %s13 = inlined_call_operand.hbm [shape: bf16[128,128], index: 13, kind: input, shape index: {}]
  %s14 = inlined_call_operand.vmem [shape: f32[1,128], index: 14, kind: input, shape index: {}]
  %s15 = inlined_call_operand.hbm [shape: bf16[128,128], index: 15, kind: input, shape index: {}]
  %s16 = inlined_call_operand.vmem [shape: f32[1,128], index: 16, kind: input, shape index: {}]
  %s17 = inlined_call_operand.hbm [shape: bf16[128,128], index: 17, kind: input, shape index: {}]
  %s18 = inlined_call_operand.vmem [shape: f32[1,128], index: 18, kind: input, shape index: {}]
  %s19 = inlined_call_operand.hbm [shape: f32[8,128], index: 19, kind: output, shape index: {}]
  %s20 = sld [smem:[#allocation0]]
  $region118: #{tpu_custom_call.1} parent=0
    _
  %s22 = ssub.s32 1, %s20
  %s23 = scalar_select 0, %s22, %s20
  $region1: #{tpu_custom_call.1} parent=0
    #allocation3 [shape = 'u8[65536]{0}', space=vmem, size = 0x10000, scoped, tag = 'input window, operand 2, single buffered']
    #allocation4 [shape = 's32[1]{0}', space=sflag, size = 0x4, scoped, tag = 'scoped memory for tpu_custom_call.1']
    #allocation5 [shape = 's32[1]{0}', space=sflag, size = 0x4, scoped, tag = 'scoped memory for tpu_custom_call.1']
    #allocation6 [shape = 'u8[65536]{0}', space=vmem, size = 0x10000, scoped, tag = 'input window, operand 5, single buffered']
    #allocation7 [shape = 's32[1]{0}', space=sflag, size = 0x4, scoped, tag = 'scoped memory for tpu_custom_call.1']
    #allocation8 [shape = 'u8[65536]{0}', space=vmem, size = 0x10000, scoped, tag = 'input window, operand 6, single buffered']
    #allocation9 [shape = 'u8[65536]{0}', space=vmem, size = 0x10000, scoped, tag = 'input window, operand 9, single buffered']
    #allocation10 [shape = 's32[1]{0}', space=sflag, size = 0x4, scoped, tag = 'scoped memory for tpu_custom_call.1']
    #allocation11 [shape = 'u8[65536]{0}', space=vmem, size = 0x10000, scoped, tag = 'input window, operand 10, single buffered']
    #allocation12 [shape = 'u8[32768]{0}', space=vmem, size = 0x8000, scoped, tag = 'input window, operand 13, single buffered']
    #allocation13 [shape = 's32[1]{0}', space=sflag, size = 0x4, scoped, tag = 'scoped memory for tpu_custom_call.1']
    #allocation14 [shape = 'u8[32768]{0}', space=vmem, size = 0x8000, scoped, tag = 'input window, operand 15, single buffered']
    #allocation15 [shape = 'u8[32768]{0}', space=vmem, size = 0x8000, scoped, tag = 'input window, operand 17, single buffered']
    #allocation16 [shape = 's32[1]{0}', space=sflag, size = 0x4, scoped, tag = 'scoped memory for tpu_custom_call.1']
    #allocation17 [shape = 'u8[4096]{0}', space=vmem, size = 0x1000, scoped, tag = 'output window, operand 0, single buffered']
    %24 = vsyncpa [#allocation4], 0
    %25 = vsyncpa [#allocation7], 0
    %26 = vsyncpa [#allocation10], 0
    %27 = vsyncpa [#allocation13], 0
    %28 = vsyncpa [#allocation16], 0
    %29 = vsyncpa [#allocation5], 0
    // Predicated region
    $region2: #{tpu_custom_call.1} parent=1 // pred_check
      _
    $region3: #{tpu_custom_call.1} parent=1 // pred_check_branch
      %31 = sbr.rel (0) target = $region5
    $region4: #{tpu_custom_call.1} parent=1 // pred_region
      _
    $region5: #{tpu_custom_call.1} parent=1 // pred_fallthru
      _
    // Predicated region
    $region6: #{tpu_custom_call.1} parent=1 // pred_check
      _
    $region7: #{tpu_custom_call.1} parent=1 // pred_check_branch
      %33 = sbr.rel (0) target = $region9
    $region8: #{tpu_custom_call.1} parent=1 // pred_region
      _
    $region9: #{tpu_custom_call.1} parent=1 // pred_fallthru
      _
    // Predicated region
    $region10: #{tpu_custom_call.1} parent=1 // pred_check
      _
    $region11: #{tpu_custom_call.1} parent=1 // pred_check_branch
      %35 = sbr.rel (0) target = $region13
    $region12: #{tpu_custom_call.1} parent=1 // pred_region
      %37 = vsyncadd [#allocation4], 0
      %s38 = sshll.u32 %s2, 4
      %s39 = int_to_ptr.hbm [resolvable:$true] %s38
      %s40 = sshll.u32 [#allocation3], 4
      %s41 = int_to_ptr.vmem [resolvable:$true] %s40
      %46 = dma.hbm_to_vmem [thread:$0]  %s39, 2048, %s41, [#allocation4], 128, 128, 8
    $region13: #{tpu_custom_call.1} parent=1 // pred_fallthru
      _
    // Predicated region
    $region14: #{tpu_custom_call.1} parent=1 // pred_check
      _
    $region15: #{tpu_custom_call.1} parent=1 // pred_check_branch
      %48 = sbr.rel (0) target = $region17
    $region16: #{tpu_custom_call.1} parent=1 // pred_region
      _
    $region17: #{tpu_custom_call.1} parent=1 // pred_fallthru
      _
    // Predicated region
    $region18: #{tpu_custom_call.1} parent=1 // pred_check
      _
    $region19: #{tpu_custom_call.1} parent=1 // pred_check_branch
      %50 = sbr.rel (0) target = $region21
    $region20: #{tpu_custom_call.1} parent=1 // pred_region
      _
    $region21: #{tpu_custom_call.1} parent=1 // pred_fallthru
      _
    // Predicated region
    $region22: #{tpu_custom_call.1} parent=1 // pred_check
      _
    $region23: #{tpu_custom_call.1} parent=1 // pred_check_branch
      %52 = sbr.rel (0) target = $region25
    $region24: #{tpu_custom_call.1} parent=1 // pred_region
      %54 = vsyncadd [#allocation7], 0
      %s55 = sshll.u32 %s5, 4
      %s56 = int_to_ptr.hbm [resolvable:$true] %s55
      %s57 = sshll.u32 [#allocation6], 4
      %s58 = int_to_ptr.vmem [resolvable:$true] %s57
      %63 = dma.hbm_to_vmem [thread:$0]  %s56, 2048, %s58, [#allocation7], 128, 128, 8
    $region25: #{tpu_custom_call.1} parent=1 // pred_fallthru
      _
    // Predicated region
    $region26: #{tpu_custom_call.1} parent=1 // pred_check
      _
    $region27: #{tpu_custom_call.1} parent=1 // pred_check_branch
      %65 = sbr.rel (0) target = $region29
    $region28: #{tpu_custom_call.1} parent=1 // pred_region
      %67 = vsyncadd [#allocation7], 0
      %s68 = sshll.u32 %s6, 4
      %s69 = int_to_ptr.hbm [resolvable:$true] %s68
      %s70 = sshll.u32 [#allocation8], 4
      %s71 = int_to_ptr.vmem [resolvable:$true] %s70
      %76 = dma.hbm_to_vmem [thread:$0]  %s69, 2048, %s71, [#allocation7], 128, 128, 8
    $region29: #{tpu_custom_call.1} parent=1 // pred_fallthru
      _
    // Predicated region
    $region30: #{tpu_custom_call.1} parent=1 // pred_check
      _
    $region31: #{tpu_custom_call.1} parent=1 // pred_check_branch
      %78 = sbr.rel (0) target = $region33
    $region32: #{tpu_custom_call.1} parent=1 // pred_region
      _
    $region33: #{tpu_custom_call.1} parent=1 // pred_fallthru
      _
    // Predicated region
    $region34: #{tpu_custom_call.1} parent=1 // pred_check
      _
    $region35: #{tpu_custom_call.1} parent=1 // pred_check_branch
      %80 = sbr.rel (0) target = $region37
    $region36: #{tpu_custom_call.1} parent=1 // pred_region
      _
    $region37: #{tpu_custom_call.1} parent=1 // pred_fallthru
      _
    // Predicated region
    $region38: #{tpu_custom_call.1} parent=1 // pred_check
      _
    $region39: #{tpu_custom_call.1} parent=1 // pred_check_branch
      %82 = sbr.rel (0) target = $region41
    $region40: #{tpu_custom_call.1} parent=1 // pred_region
      %84 = vsyncadd [#allocation10], 0
      %s85 = sshll.u32 %s9, 4
      %s86 = int_to_ptr.hbm [resolvable:$true] %s85
      %s87 = sshll.u32 [#allocation9], 4
      %s88 = int_to_ptr.vmem [resolvable:$true] %s87
      %93 = dma.hbm_to_vmem [thread:$0]  %s86, 2048, %s88, [#allocation10], 128, 128, 8
    $region41: #{tpu_custom_call.1} parent=1 // pred_fallthru
      _
    // Predicated region
    $region42: #{tpu_custom_call.1} parent=1 // pred_check
      _
    $region43: #{tpu_custom_call.1} parent=1 // pred_check_branch
      %95 = sbr.rel (0) target = $region45
    $region44: #{tpu_custom_call.1} parent=1 // pred_region
      %97 = vsyncadd [#allocation10], 0
      %s98 = sshll.u32 %s10, 4
      %s99 = int_to_ptr.hbm [resolvable:$true] %s98
      %s100 = sshll.u32 [#allocation11], 4
      %s101 = int_to_ptr.vmem [resolvable:$true] %s100
      %106 = dma.hbm_to_vmem [thread:$0]  %s99, 2048, %s101, [#allocation10], 128, 128, 8
    $region45: #{tpu_custom_call.1} parent=1 // pred_fallthru
      _
    // Predicated region
    $region46: #{tpu_custom_call.1} parent=1 // pred_check
      _
    $region47: #{tpu_custom_call.1} parent=1 // pred_check_branch
      %108 = sbr.rel (0) target = $region49
    $region48: #{tpu_custom_call.1} parent=1 // pred_region
      _
    $region49: #{tpu_custom_call.1} parent=1 // pred_fallthru
      _
    // Predicated region
    $region50: #{tpu_custom_call.1} parent=1 // pred_check
      _
    $region51: #{tpu_custom_call.1} parent=1 // pred_check_branch
      %110 = sbr.rel (0) target = $region53
    $region52: #{tpu_custom_call.1} parent=1 // pred_region
      _
    $region53: #{tpu_custom_call.1} parent=1 // pred_fallthru
      _
    // Predicated region
    $region54: #{tpu_custom_call.1} parent=1 // pred_check
      _
    $region55: #{tpu_custom_call.1} parent=1 // pred_check_branch
      %112 = sbr.rel (0) target = $region57
    $region56: #{tpu_custom_call.1} parent=1 // pred_region
      %114 = vsyncadd [#allocation13], 0
      %s115 = sshll.u32 %s13, 4
      %s116 = int_to_ptr.hbm [resolvable:$true] %s115
      %s117 = sshll.u32 [#allocation12], 4
      %s118 = int_to_ptr.vmem [resolvable:$true] %s117
      %123 = dma.hbm_to_vmem [thread:$0]  %s116, 1024, %s118, [#allocation13], 64, 64, 4
    $region57: #{tpu_custom_call.1} parent=1 // pred_fallthru
      _
    // Predicated region
    $region58: #{tpu_custom_call.1} parent=1 // pred_check
      _
    $region59: #{tpu_custom_call.1} parent=1 // pred_check_branch
      %125 = sbr.rel (0) target = $region61
    $region60: #{tpu_custom_call.1} parent=1 // pred_region
      _
    $region61: #{tpu_custom_call.1} parent=1 // pred_fallthru
      _
    // Predicated region
    $region62: #{tpu_custom_call.1} parent=1 // pred_check
      _
    $region63: #{tpu_custom_call.1} parent=1 // pred_check_branch
      %127 = sbr.rel (0) target = $region65
    $region64: #{tpu_custom_call.1} parent=1 // pred_region
      %129 = vsyncadd [#allocation13], 0
      %s130 = sshll.u32 %s15, 4
      %s131 = int_to_ptr.hbm [resolvable:$true] %s130
      %s132 = sshll.u32 [#allocation14], 4
      %s133 = int_to_ptr.vmem [resolvable:$true] %s132
      %138 = dma.hbm_to_vmem [thread:$0]  %s131, 1024, %s133, [#allocation13], 64, 64, 4
    $region65: #{tpu_custom_call.1} parent=1 // pred_fallthru
      _
    // Predicated region
    $region66: #{tpu_custom_call.1} parent=1 // pred_check
      _
    $region67: #{tpu_custom_call.1} parent=1 // pred_check_branch
      %140 = sbr.rel (0) target = $region69
    $region68: #{tpu_custom_call.1} parent=1 // pred_region
      _
    $region69: #{tpu_custom_call.1} parent=1 // pred_fallthru
      _
    // Predicated region
    $region70: #{tpu_custom_call.1} parent=1 // pred_check
      _
    $region71: #{tpu_custom_call.1} parent=1 // pred_check_branch
      %142 = sbr.rel (0) target = $region73
    $region72: #{tpu_custom_call.1} parent=1 // pred_region
      %144 = vsyncadd [#allocation16], 0
      %s145 = sshll.u32 %s17, 4
      %s146 = int_to_ptr.hbm [resolvable:$true] %s145
      %s147 = sshll.u32 [#allocation15], 4
      %s148 = int_to_ptr.vmem [resolvable:$true] %s147
      %153 = dma.hbm_to_vmem [thread:$0]  %s146, 1024, %s148, [#allocation16], 64, 64, 4
    $region73: #{tpu_custom_call.1} parent=1 // pred_fallthru
      _
    // Predicated region
    $region74: #{tpu_custom_call.1} parent=1 // pred_check
      _
    $region75: #{tpu_custom_call.1} parent=1 // pred_check_branch
      %155 = sbr.rel (0) target = $region77
    $region76: #{tpu_custom_call.1} parent=1 // pred_region
      _
    $region77: #{tpu_custom_call.1} parent=1 // pred_fallthru
      _
    // Predicated region
    $region78: #{tpu_custom_call.1} parent=1 // pred_check
      _
    $region79: #{tpu_custom_call.1} parent=1 // pred_check_branch
      %157 = sbr.rel (0) target = $region81
    $region80: #{tpu_custom_call.1} parent=1 // pred_region
      %159 = dma.done [#allocation4], 2048
    $region81: #{tpu_custom_call.1} parent=1 // pred_fallthru
      _
    // Predicated region
    $region82: #{tpu_custom_call.1} parent=1 // pred_check
      _
    $region83: #{tpu_custom_call.1} parent=1 // pred_check_branch
      %161 = sbr.rel (0) target = $region85
    $region84: #{tpu_custom_call.1} parent=1 // pred_region
      %163 = dma.done [#allocation7], 2048
    $region85: #{tpu_custom_call.1} parent=1 // pred_fallthru
      _
    // Predicated region
    $region86: #{tpu_custom_call.1} parent=1 // pred_check
      _
    $region87: #{tpu_custom_call.1} parent=1 // pred_check_branch
      %165 = sbr.rel (0) target = $region89
    $region88: #{tpu_custom_call.1} parent=1 // pred_region
      %167 = dma.done [#allocation7], 2048
    $region89: #{tpu_custom_call.1} parent=1 // pred_fallthru
      _
    // Predicated region
    $region90: #{tpu_custom_call.1} parent=1 // pred_check
      _
    $region91: #{tpu_custom_call.1} parent=1 // pred_check_branch
      %169 = sbr.rel (0) target = $region93
    $region92: #{tpu_custom_call.1} parent=1 // pred_region
      %171 = dma.done [#allocation10], 2048
    $region93: #{tpu_custom_call.1} parent=1 // pred_fallthru
      _
    // Predicated region
    $region94: #{tpu_custom_call.1} parent=1 // pred_check
      _
    $region95: #{tpu_custom_call.1} parent=1 // pred_check_branch
      %173 = sbr.rel (0) target = $region97
    $region96: #{tpu_custom_call.1} parent=1 // pred_region
      %175 = dma.done [#allocation10], 2048
    $region97: #{tpu_custom_call.1} parent=1 // pred_fallthru
      _
    // Predicated region
    $region98: #{tpu_custom_call.1} parent=1 // pred_check
      _
    $region99: #{tpu_custom_call.1} parent=1 // pred_check_branch
      %177 = sbr.rel (0) target = $region101
    $region100: #{tpu_custom_call.1} parent=1 // pred_region
      %179 = dma.done [#allocation13], 1024
    $region101: #{tpu_custom_call.1} parent=1 // pred_fallthru
      _
    // Predicated region
    $region102: #{tpu_custom_call.1} parent=1 // pred_check
      _
    $region103: #{tpu_custom_call.1} parent=1 // pred_check_branch
      %181 = sbr.rel (0) target = $region105
    $region104: #{tpu_custom_call.1} parent=1 // pred_region
      %183 = dma.done [#allocation13], 1024
    $region105: #{tpu_custom_call.1} parent=1 // pred_fallthru
      _
    // Predicated region
    $region106: #{tpu_custom_call.1} parent=1 // pred_check
      _
    $region107: #{tpu_custom_call.1} parent=1 // pred_check_branch
      %185 = sbr.rel (0) target = $region109
    $region108: #{tpu_custom_call.1} parent=1 // pred_region
      %187 = dma.done [#allocation16], 1024
    $region109: #{tpu_custom_call.1} parent=1 // pred_fallthru
      _
    %v189 = vld [vmem:[%s0] sm:$0xf]
    %v190 = vld [vmem:[%s0 + $0x4] sm:$0xf]
    %v191 = vld [vmem:[%s0 + $0x8] sm:$0xf]
    %v192 = vld [vmem:[%s0 + $0xc] sm:$0xf]
    %v193 = vld [vmem:[%s0 + $0x10] sm:$0xf]
    %v194 = vld [vmem:[%s0 + $0x14] sm:$0xf]
    %v195 = vld [vmem:[%s0 + $0x18] sm:$0xf]
    %v196 = vld [vmem:[%s0 + $0x1c] sm:$0xf]
    %v197 = vld [vmem:[%s1] sm:$0xff]
    %v198 = vld [vmem:[%s1 + $0x8] sm:$0xff]
    %v199 = vld [vmem:[%s1 + $0x10] sm:$0x77]
    %v200 = vld [vmem:[%s3] sm:$0x3]
    %v202 = vperm.slane %v200, 0
    %v203 = vperm.slane %v200, 1
    %v214 = vunpack.c.l.b16 %v189
    %v215 = vunpack.c.l.b16 %v190
    %v216 = vunpack.c.l.b16 %v191
    %v217 = vunpack.c.l.b16 %v192
    %v218 = vunpack.c.l.b16 %v193
    %v219 = vunpack.c.l.b16 %v194
    %v220 = vunpack.c.l.b16 %v195
    %v221 = vunpack.c.l.b16 %v196
    %v222 = vpack.c.b16 %v215, %v214
    %v223 = vpack.c.b16 %v217, %v216
    %v224 = vpack.c.b16 %v219, %v218
    %v225 = vpack.c.b16 %v221, %v220
    %v229 = vunpack.c.l.b16 %v197
    %v230 = vunpack.c.h.b16 %v197
    %v231 = vunpack.c.l.b16 %v198
    %v232 = vunpack.c.h.b16 %v198
    %v233 = vunpack.c.l.b16 %v199
    %v234 = vunpack.c.h.b16 %v199
    %v235 = vpack.c.b16 %v231, %v229
    %v236 = vpack.c.b16 %v232, %v230
    %v237 = vpack.c.b16 %v233, %v233
    %v238 = vpack.c.b16 %v234, %v234
    %vm241 = vcmask 179200
    %v243 = vsel %vm241, %v222, 0
    %v246 = vsel %vm241, %v223, 0
    %v249 = vsel %vm241, %v224, 0
    %v252 = vsel %vm241, %v225, 0
    %vm254 = vcmask 1042432
    %v256 = vsel %vm254, %v237, 0
    %v259 = vsel %vm254, %v238, 0
    %261 = vmatpush.bf16.msra.mxu0 0
    %262 = vmatpush.bf16.msra.mxu0 0
    %263 = vmatpush.bf16.msra.mxu0 0
    %264 = vmatpush.bf16.msra.mxu0 0
    %265 = vmatpush.bf16.msra.mxu0 0
    %266 = vmatpush.bf16.msra.mxu0 0
    %267 = vmatpush.bf16.msra.mxu0 %v256
    %268 = vmatpush.bf16.msra.mxu0 %v235
    %269 = vmatmul.bf16.gmra.mxu0 %v243
    %v270 = vpop.f32.mrf.mxu0
    %v271 = vadd.f32 %v202, %v270
    %v272 = vpop.f32.mrf.mxu0
    %v273 = vadd.f32 %v202, %v272
    %274 = vmatmul.bf16.gmra.mxu0 %v246
    %v275 = vpop.f32.mrf.mxu0
    %v276 = vadd.f32 %v202, %v275
    %v277 = vpop.f32.mrf.mxu0
    %v278 = vadd.f32 %v202, %v277
    %279 = vmatmul.bf16.gmra.mxu0 %v249
    %v280 = vpop.f32.mrf.mxu0
    %v281 = vadd.f32 %v202, %v280
    %v282 = vpop.f32.mrf.mxu0
    %v283 = vadd.f32 %v202, %v282
    %284 = vmatmul.bf16.gmra.mxu0 %v252
    %v285 = vpop.f32.mrf.mxu0
    %v286 = vadd.f32 %v202, %v285
    %v287 = vpop.f32.mrf.mxu0
    %v288 = vadd.f32 %v202, %v287
    %289 = vdwg.mxu0
    %290 = vmatpush.bf16.msra.mxu0 0
    %291 = vmatpush.bf16.msra.mxu0 0
    %292 = vmatpush.bf16.msra.mxu0 0
    %293 = vmatpush.bf16.msra.mxu0 0
    %294 = vmatpush.bf16.msra.mxu0 0
    %295 = vmatpush.bf16.msra.mxu0 0
    %296 = vmatpush.bf16.msra.mxu0 %v259
    %297 = vmatpush.bf16.msra.mxu0 %v236
    %298 = vmatmul.bf16.gmra.mxu0 %v243
    %v299 = vpop.f32.mrf.mxu0
    %v300 = vadd.f32 %v203, %v299
    %v301 = vpop.f32.mrf.mxu0
    %v302 = vadd.f32 %v203, %v301
    %303 = vmatmul.bf16.gmra.mxu0 %v246
    %v304 = vpop.f32.mrf.mxu0
    %v305 = vadd.f32 %v203, %v304
    %v306 = vpop.f32.mrf.mxu0
    %v307 = vadd.f32 %v203, %v306
    %308 = vmatmul.bf16.gmra.mxu0 %v249
    %v309 = vpop.f32.mrf.mxu0
    %v310 = vadd.f32 %v203, %v309
    %v311 = vpop.f32.mrf.mxu0
    %v312 = vadd.f32 %v203, %v311
    %313 = vmatmul.bf16.gmra.mxu0 %v252
    %v314 = vpop.f32.mrf.mxu0
    %v315 = vadd.f32 %v203, %v314
    %v316 = vpop.f32.mrf.mxu0
    %v317 = vadd.f32 %v203, %v316
    %318 = vdwg.mxu0
    %319 = vst [vmem:[#allocation2] sm:$0xff] %v271
    %320 = vst [vmem:[#allocation2 + $0x8] sm:$0xff] %v300
    %321 = vst [vmem:[#allocation2 + $0x10] sm:$0xff] %v273
    %322 = vst [vmem:[#allocation2 + $0x18] sm:$0xff] %v302
    %323 = vst [vmem:[#allocation2 + $0x20] sm:$0xff] %v276
    %324 = vst [vmem:[#allocation2 + $0x28] sm:$0xff] %v305
    %325 = vst [vmem:[#allocation2 + $0x30] sm:$0xff] %v278
    %326 = vst [vmem:[#allocation2 + $0x38] sm:$0xff] %v307
    %327 = vst [vmem:[#allocation2 + $0x40] sm:$0xff] %v281
    %328 = vst [vmem:[#allocation2 + $0x48] sm:$0xff] %v310
    %329 = vst [vmem:[#allocation2 + $0x50] sm:$0xff] %v283
    %330 = vst [vmem:[#allocation2 + $0x58] sm:$0xff] %v312
    %331 = vst [vmem:[#allocation2 + $0x60] sm:$0xff] %v286
    %332 = vst [vmem:[#allocation2 + $0x68] sm:$0xff] %v315
    %333 = vst [vmem:[#allocation2 + $0x70] sm:$0xff] %v288
    %334 = vst [vmem:[#allocation2 + $0x78] sm:$0xff] %v317
    %v335 = vld [vmem:[#allocation3] sm:$0xff]
    %v336 = vld [vmem:[#allocation3 + $0x8] sm:$0xff]
    %v337 = vld [vmem:[#allocation3 + $0x10] sm:$0xff]
    %v338 = vld [vmem:[#allocation3 + $0x18] sm:$0xff]
    %v339 = vld [vmem:[#allocation3 + $0x20] sm:$0xff]
    %v340 = vld [vmem:[#allocation3 + $0x28] sm:$0xff]
    %v341 = vld [vmem:[#allocation3 + $0x30] sm:$0xff]
    %v342 = vld [vmem:[#allocation3 + $0x38] sm:$0xff]
    %v343 = vld [vmem:[#allocation3 + $0x40] sm:$0xff]
    %v344 = vld [vmem:[#allocation3 + $0x48] sm:$0xff]
    %v345 = vld [vmem:[#allocation3 + $0x50] sm:$0xff]
    %v346 = vld [vmem:[#allocation3 + $0x58] sm:$0xff]
    %v347 = vld [vmem:[#allocation3 + $0x60] sm:$0xff]
    %v348 = vld [vmem:[#allocation3 + $0x68] sm:$0xff]
    %v349 = vld [vmem:[#allocation3 + $0x70] sm:$0xff]
    %v350 = vld [vmem:[#allocation3 + $0x78] sm:$0xff]
    %v351 = vld [vmem:[%s4] sm:$0x1]
    %v352 = vld [vmem:[#allocation6] sm:$0xff]
    %v353 = vld [vmem:[#allocation6 + $0x8] sm:$0xff]
    %v354 = vld [vmem:[#allocation6 + $0x10] sm:$0xff]
    %v355 = vld [vmem:[#allocation6 + $0x18] sm:$0xff]
    %v356 = vld [vmem:[#allocation6 + $0x20] sm:$0xff]
    %v357 = vld [vmem:[#allocation6 + $0x28] sm:$0xff]
    %v358 = vld [vmem:[#allocation6 + $0x30] sm:$0xff]
    %v359 = vld [vmem:[#allocation6 + $0x38] sm:$0xff]
    %v360 = vld [vmem:[#allocation6 + $0x40] sm:$0xff]
    %v361 = vld [vmem:[#allocation6 + $0x48] sm:$0xff]
    %v362 = vld [vmem:[#allocation6 + $0x50] sm:$0xff]
    %v363 = vld [vmem:[#allocation6 + $0x58] sm:$0xff]
    %v364 = vld [vmem:[#allocation6 + $0x60] sm:$0xff]
    %v365 = vld [vmem:[#allocation6 + $0x68] sm:$0xff]
    %v366 = vld [vmem:[#allocation6 + $0x70] sm:$0xff]
    %v367 = vld [vmem:[#allocation6 + $0x78] sm:$0xff]
    %v368 = vld [vmem:[%s7] sm:$0x3]
    %s369 = smul.u32 0, 2
    %s370 = smul.addr %s369, 8
    %s371 = scalar_lea.vmem [#allocation2], %s370
    %v372 = vld [vmem:[%s371] sm:$0xff]
    %v373 = vld [vmem:[%s371 + $0x8] sm:$0xff]
    %v390 = vunpack.c.l.b16 %v335
    %v391 = vunpack.c.h.b16 %v335
    %v392 = vunpack.c.l.b16 %v336
    %v393 = vunpack.c.h.b16 %v336
    %v394 = vunpack.c.l.b16 %v337
    %v395 = vunpack.c.h.b16 %v337
    %v396 = vunpack.c.l.b16 %v338
    %v397 = vunpack.c.h.b16 %v338
    %v398 = vunpack.c.l.b16 %v339
    %v399 = vunpack.c.h.b16 %v339
    %v400 = vunpack.c.l.b16 %v340
    %v401 = vunpack.c.h.b16 %v340
    %v402 = vunpack.c.l.b16 %v341
    %v403 = vunpack.c.h.b16 %v341
    %v404 = vunpack.c.l.b16 %v342
    %v405 = vunpack.c.h.b16 %v342
    %v406 = vunpack.c.l.b16 %v343
    %v407 = vunpack.c.h.b16 %v343
    %v408 = vunpack.c.l.b16 %v344
    %v409 = vunpack.c.h.b16 %v344
    %v410 = vunpack.c.l.b16 %v345
    %v411 = vunpack.c.h.b16 %v345
    %v412 = vunpack.c.l.b16 %v346
    %v413 = vunpack.c.h.b16 %v346
    %v414 = vunpack.c.l.b16 %v347
    %v415 = vunpack.c.h.b16 %v347
    %v416 = vunpack.c.l.b16 %v348
    %v417 = vunpack.c.h.b16 %v348
    %v418 = vunpack.c.l.b16 %v349
    %v419 = vunpack.c.h.b16 %v349
    %v420 = vunpack.c.l.b16 %v350
    %v421 = vunpack.c.h.b16 %v350
    %v422 = vpack.c.b16 %v392, %v390
    %v423 = vpack.c.b16 %v393, %v391
    %v424 = vpack.c.b16 %v396, %v394
    %v425 = vpack.c.b16 %v397, %v395
    %v426 = vpack.c.b16 %v400, %v398
    %v427 = vpack.c.b16 %v401, %v399
    %v428 = vpack.c.b16 %v404, %v402
    %v429 = vpack.c.b16 %v405, %v403
    %v430 = vpack.c.b16 %v408, %v406
    %v431 = vpack.c.b16 %v409, %v407
    %v432 = vpack.c.b16 %v412, %v410
    %v433 = vpack.c.b16 %v413, %v411
    %v434 = vpack.c.b16 %v416, %v414
    %v435 = vpack.c.b16 %v417, %v415
    %v436 = vpack.c.b16 %v420, %v418
    %v437 = vpack.c.b16 %v421, %v419
    %454 = vmatpush.bf16.msra.mxu0 %v436
    %455 = vmatpush.bf16.msra.mxu0 %v434
    %456 = vmatpush.bf16.msra.mxu0 %v432
    %457 = vmatpush.bf16.msra.mxu0 %v430
    %458 = vmatpush.bf16.msra.mxu0 %v428
    %459 = vmatpush.bf16.msra.mxu0 %v426
    %460 = vmatpush.bf16.msra.mxu0 %v424
    %461 = vmatpush.bf16.msra.mxu0 %v422
    %462 = vmatmul.bf16.gmra.mxu0 0
    %v463 = vpop.f32.mrf.mxu0
    %v464 = vadd.f32 0.0, %v463
    %v465 = vpop.f32.mrf.mxu0
    %466 = vdwg.mxu0
    %467 = vmatpush.bf16.msra.mxu0 %v437
    %468 = vmatpush.bf16.msra.mxu0 %v435
    %469 = vmatpush.bf16.msra.mxu0 %v433
    %470 = vmatpush.bf16.msra.mxu0 %v431
    %471 = vmatpush.bf16.msra.mxu0 %v429
    %472 = vmatpush.bf16.msra.mxu0 %v427
    %473 = vmatpush.bf16.msra.mxu0 %v425
    %474 = vmatpush.bf16.msra.mxu0 %v423
    %475 = vmatmul.bf16.gmra.mxu0 0
    %v476 = vpop.f32.mrf.mxu0
    %v477 = vadd.f32 0.0, %v476
    %v478 = vpop.f32.mrf.mxu0
    %479 = vdwg.mxu0
    %v480 = vadd.f32 %v372, %v464
    %v481 = vxor.u32 %v480, 2147483648
    %v482 = vmul.f32 %v481, 1.442695
    %v483 = vpow.pop %v482
    %v484 = vadd.f32 %v483, 1.0
    %v485 = vrcp.pop %v484
    %v486 = vmul.f32 %v484, %v485
    %v487 = vsub.f32 1.0, %v486
    %v488 = vmul.f32 %v485, %v487
    %v489 = vadd.f32 %v485, %v488
    %vm490 = vweird.f32 %v484
    %vm491 = vweird.f32 %v485
    %vm492 = vmor %vm490, %vm491
    %v493 = vsel %vm492, %v485, %v489
    %v494 = vand.u32 2147483647, %v484
    %vm495 = vcmp.eq.f32.partialorder %v494, 8.507059e+37
    %v496 = vand.u32 %v484, 2147483648
    %v497 = vor.u32 1.1754944e-38, %v496
    %v498 = vsel %vm495, %v497, %v493
    %v499 = vmul.f32 1.0, %v498
    %500 = vrot.lane.b32.xlu0 %v499, 64
    %v501 = vpop.permute.xlu0 %500
    %v503 = vperm.slane %v351, 0
    %v505 = vadd.f32 %v477, %v503
    %v506 = vmul.f32 %v499, %v505
    %v507 = vadd.f32 %v373, %v506
    %v508 = vtanh.pop %v507
    %v509 = vsub.f32 1.0, %v501
    %v510 = vmul.f32 %v509, %v508
    %v511 = vmul.f32 %v501, 0.0
    %v512 = vadd.f32 %v510, %v511
    %v513 = vpack.c.bf16 %v512, %v512
    %v515 = vperm.slane %v368, 0
    %v516 = vperm.slane %v368, 1
    %v535 = vunpack.c.l.b16 %v352
    %v536 = vunpack.c.h.b16 %v352
    %v537 = vunpack.c.l.b16 %v353
    %v538 = vunpack.c.h.b16 %v353
    %v539 = vunpack.c.l.b16 %v354
    %v540 = vunpack.c.h.b16 %v354
    %v541 = vunpack.c.l.b16 %v355
    %v542 = vunpack.c.h.b16 %v355
    %v543 = vunpack.c.l.b16 %v356
    %v544 = vunpack.c.h.b16 %v356
    %v545 = vunpack.c.l.b16 %v357
    %v546 = vunpack.c.h.b16 %v357
    %v547 = vunpack.c.l.b16 %v358
    %v548 = vunpack.c.h.b16 %v358
    %v549 = vunpack.c.l.b16 %v359
    %v550 = vunpack.c.h.b16 %v359
    %v551 = vunpack.c.l.b16 %v360
    %v552 = vunpack.c.h.b16 %v360
    %v553 = vunpack.c.l.b16 %v361
    %v554 = vunpack.c.h.b16 %v361
    %v555 = vunpack.c.l.b16 %v362
    %v556 = vunpack.c.h.b16 %v362
    %v557 = vunpack.c.l.b16 %v363
    %v558 = vunpack.c.h.b16 %v363
    %v559 = vunpack.c.l.b16 %v364
    %v560 = vunpack.c.h.b16 %v364
    %v561 = vunpack.c.l.b16 %v365
    %v562 = vunpack.c.h.b16 %v365
    %v563 = vunpack.c.l.b16 %v366
    %v564 = vunpack.c.h.b16 %v366
    %v565 = vunpack.c.l.b16 %v367
    %v566 = vunpack.c.h.b16 %v367
    %v567 = vpack.c.b16 %v537, %v535
    %v568 = vpack.c.b16 %v538, %v536
    %v569 = vpack.c.b16 %v541, %v539
    %v570 = vpack.c.b16 %v542, %v540
    %v571 = vpack.c.b16 %v545, %v543
    %v572 = vpack.c.b16 %v546, %v544
    %v573 = vpack.c.b16 %v549, %v547
    %v574 = vpack.c.b16 %v550, %v548
    %v575 = vpack.c.b16 %v553, %v551
    %v576 = vpack.c.b16 %v554, %v552
    %v577 = vpack.c.b16 %v557, %v555
    %v578 = vpack.c.b16 %v558, %v556
    %v579 = vpack.c.b16 %v561, %v559
    %v580 = vpack.c.b16 %v562, %v560
    %v581 = vpack.c.b16 %v565, %v563
    %v582 = vpack.c.b16 %v566, %v564
    %599 = vmatpush.bf16.msra.mxu0 %v581
    %600 = vmatpush.bf16.msra.mxu0 %v579
    %601 = vmatpush.bf16.msra.mxu0 %v577
    %602 = vmatpush.bf16.msra.mxu0 %v575
    %603 = vmatpush.bf16.msra.mxu0 %v573
    %604 = vmatpush.bf16.msra.mxu0 %v571
    %605 = vmatpush.bf16.msra.mxu0 %v569
    %606 = vmatpush.bf16.msra.mxu0 %v567
    %607 = vmatmul.bf16.gmra.mxu0 %v513
    %v608 = vpop.f32.mrf.mxu0
    %v609 = vadd.f32 %v515, %v608
    %v610 = vpop.f32.mrf.mxu0
    %611 = vdwg.mxu0
    %612 = vmatpush.bf16.msra.mxu0 %v582
    %613 = vmatpush.bf16.msra.mxu0 %v580
    %614 = vmatpush.bf16.msra.mxu0 %v578
    %615 = vmatpush.bf16.msra.mxu0 %v576
    %616 = vmatpush.bf16.msra.mxu0 %v574
    %617 = vmatpush.bf16.msra.mxu0 %v572
    %618 = vmatpush.bf16.msra.mxu0 %v570
    %619 = vmatpush.bf16.msra.mxu0 %v568
    %620 = vmatmul.bf16.gmra.mxu0 %v513
    %v621 = vpop.f32.mrf.mxu0
    %v622 = vadd.f32 %v516, %v621
    %v623 = vpop.f32.mrf.mxu0
    %624 = vdwg.mxu0
    %625 = vst [vmem:[%s371] sm:$0xff] %v609
    %626 = vst [vmem:[%s371 + $0x8] sm:$0xff] %v622
    %s627 = smul.u32 1, 2
    %s628 = smul.addr %s627, 8
    %s629 = scalar_lea.vmem [#allocation2], %s628
    %v630 = vld [vmem:[%s629] sm:$0xff]
    %v631 = vld [vmem:[%s629 + $0x8] sm:$0xff]
    %632 = vmatpush.bf16.msra.mxu0 %v436
    %633 = vmatpush.bf16.msra.mxu0 %v434
    %634 = vmatpush.bf16.msra.mxu0 %v432
    %635 = vmatpush.bf16.msra.mxu0 %v430
    %636 = vmatpush.bf16.msra.mxu0 %v428
    %637 = vmatpush.bf16.msra.mxu0 %v426
    %638 = vmatpush.bf16.msra.mxu0 %v424
    %639 = vmatpush.bf16.msra.mxu0 %v422
    %640 = vmatmul.bf16.gmra.mxu0 %v513
    %v641 = vpop.f32.mrf.mxu0
    %v642 = vadd.f32 0.0, %v641
    %v643 = vpop.f32.mrf.mxu0
    %644 = vdwg.mxu0
    %645 = vmatpush.bf16.msra.mxu0 %v437
    %646 = vmatpush.bf16.msra.mxu0 %v435
    %647 = vmatpush.bf16.msra.mxu0 %v433
    %648 = vmatpush.bf16.msra.mxu0 %v431
    %649 = vmatpush.bf16.msra.mxu0 %v429
    %650 = vmatpush.bf16.msra.mxu0 %v427
    %651 = vmatpush.bf16.msra.mxu0 %v425
    %652 = vmatpush.bf16.msra.mxu0 %v423
    %653 = vmatmul.bf16.gmra.mxu0 %v513
    %v654 = vpop.f32.mrf.mxu0
    %v655 = vadd.f32 0.0, %v654
    %v656 = vpop.f32.mrf.mxu0
    %657 = vdwg.mxu0
    %v658 = vadd.f32 %v630, %v642
    %v659 = vxor.u32 %v658, 2147483648
    %v660 = vmul.f32 %v659, 1.442695
    %v661 = vpow.pop %v660
    %v662 = vadd.f32 %v661, 1.0
    %v663 = vrcp.pop %v662
    %v664 = vmul.f32 %v662, %v663
    %v665 = vsub.f32 1.0, %v664
    %v666 = vmul.f32 %v663, %v665
    %v667 = vadd.f32 %v663, %v666
    %vm668 = vweird.f32 %v662
    %vm669 = vweird.f32 %v663
    %vm670 = vmor %vm668, %vm669
    %v671 = vsel %vm670, %v663, %v667
    %v672 = vand.u32 2147483647, %v662
    %vm673 = vcmp.eq.f32.partialorder %v672, 8.507059e+37
    %v674 = vand.u32 %v662, 2147483648
    %v675 = vor.u32 1.1754944e-38, %v674
    %v676 = vsel %vm673, %v675, %v671
    %v677 = vmul.f32 1.0, %v676
    %678 = vrot.lane.b32.xlu0 %v677, 64
    %v679 = vpop.permute.xlu0 %678
    %v680 = vadd.f32 %v655, %v503
    %v681 = vmul.f32 %v677, %v680
    %v682 = vadd.f32 %v631, %v681
    %v683 = vtanh.pop %v682
    %v684 = vsub.f32 1.0, %v679
    %v685 = vmul.f32 %v684, %v683
    %v686 = vmul.f32 %v679, %v512
    %v687 = vadd.f32 %v685, %v686
    %v688 = vpack.c.bf16 %v687, %v687
    %689 = vmatpush.bf16.msra.mxu0 %v581
    %690 = vmatpush.bf16.msra.mxu0 %v579
    %691 = vmatpush.bf16.msra.mxu0 %v577
    %692 = vmatpush.bf16.msra.mxu0 %v575
    %693 = vmatpush.bf16.msra.mxu0 %v573
    %694 = vmatpush.bf16.msra.mxu0 %v571
    %695 = vmatpush.bf16.msra.mxu0 %v569
    %696 = vmatpush.bf16.msra.mxu0 %v567
    %697 = vmatmul.bf16.gmra.mxu0 %v688
    %v698 = vpop.f32.mrf.mxu0
    %v699 = vadd.f32 %v515, %v698
    %v700 = vpop.f32.mrf.mxu0
    %701 = vdwg.mxu0
    %702 = vmatpush.bf16.msra.mxu0 %v582
    %703 = vmatpush.bf16.msra.mxu0 %v580
    %704 = vmatpush.bf16.msra.mxu0 %v578
    %705 = vmatpush.bf16.msra.mxu0 %v576
    %706 = vmatpush.bf16.msra.mxu0 %v574
    %707 = vmatpush.bf16.msra.mxu0 %v572
    %708 = vmatpush.bf16.msra.mxu0 %v570
    %709 = vmatpush.bf16.msra.mxu0 %v568
    %710 = vmatmul.bf16.gmra.mxu0 %v688
    %v711 = vpop.f32.mrf.mxu0
    %v712 = vadd.f32 %v516, %v711
    %v713 = vpop.f32.mrf.mxu0
    %714 = vdwg.mxu0
    %715 = vst [vmem:[%s629] sm:$0xff] %v699
    %716 = vst [vmem:[%s629 + $0x8] sm:$0xff] %v712
    %s717 = smul.u32 2, 2
    %s718 = smul.addr %s717, 8
    %s719 = scalar_lea.vmem [#allocation2], %s718
    %v720 = vld [vmem:[%s719] sm:$0xff]
    %v721 = vld [vmem:[%s719 + $0x8] sm:$0xff]
    %722 = vmatpush.bf16.msra.mxu0 %v436
    %723 = vmatpush.bf16.msra.mxu0 %v434
    %724 = vmatpush.bf16.msra.mxu0 %v432
    %725 = vmatpush.bf16.msra.mxu0 %v430
    %726 = vmatpush.bf16.msra.mxu0 %v428
    %727 = vmatpush.bf16.msra.mxu0 %v426
    %728 = vmatpush.bf16.msra.mxu0 %v424
    %729 = vmatpush.bf16.msra.mxu0 %v422
    %730 = vmatmul.bf16.gmra.mxu0 %v688
    %v731 = vpop.f32.mrf.mxu0
    %v732 = vadd.f32 0.0, %v731
    %v733 = vpop.f32.mrf.mxu0
    %734 = vdwg.mxu0
    %735 = vmatpush.bf16.msra.mxu0 %v437
    %736 = vmatpush.bf16.msra.mxu0 %v435
    %737 = vmatpush.bf16.msra.mxu0 %v433
    %738 = vmatpush.bf16.msra.mxu0 %v431
    %739 = vmatpush.bf16.msra.mxu0 %v429
    %740 = vmatpush.bf16.msra.mxu0 %v427
    %741 = vmatpush.bf16.msra.mxu0 %v425
    %742 = vmatpush.bf16.msra.mxu0 %v423
    %743 = vmatmul.bf16.gmra.mxu0 %v688
    %v744 = vpop.f32.mrf.mxu0
    %v745 = vadd.f32 0.0, %v744
    %v746 = vpop.f32.mrf.mxu0
    %747 = vdwg.mxu0
    %v748 = vadd.f32 %v720, %v732
    %v749 = vxor.u32 %v748, 2147483648
    %v750 = vmul.f32 %v749, 1.442695
    %v751 = vpow.pop %v750
    %v752 = vadd.f32 %v751, 1.0
    %v753 = vrcp.pop %v752
    %v754 = vmul.f32 %v752, %v753
    %v755 = vsub.f32 1.0, %v754
    %v756 = vmul.f32 %v753, %v755
    %v757 = vadd.f32 %v753, %v756
    %vm758 = vweird.f32 %v752
    %vm759 = vweird.f32 %v753
    %vm760 = vmor %vm758, %vm759
    %v761 = vsel %vm760, %v753, %v757
    %v762 = vand.u32 2147483647, %v752
    %vm763 = vcmp.eq.f32.partialorder %v762, 8.507059e+37
    %v764 = vand.u32 %v752, 2147483648
    %v765 = vor.u32 1.1754944e-38, %v764
    %v766 = vsel %vm763, %v765, %v761
    %v767 = vmul.f32 1.0, %v766
    %768 = vrot.lane.b32.xlu0 %v767, 64
    %v769 = vpop.permute.xlu0 %768
    %v770 = vadd.f32 %v745, %v503
    %v771 = vmul.f32 %v767, %v770
    %v772 = vadd.f32 %v721, %v771
    %v773 = vtanh.pop %v772
    %v774 = vsub.f32 1.0, %v769
    %v775 = vmul.f32 %v774, %v773
    %v776 = vmul.f32 %v769, %v687
    %v777 = vadd.f32 %v775, %v776
    %v778 = vpack.c.bf16 %v777, %v777
    %779 = vmatpush.bf16.msra.mxu0 %v581
    %780 = vmatpush.bf16.msra.mxu0 %v579
    %781 = vmatpush.bf16.msra.mxu0 %v577
    %782 = vmatpush.bf16.msra.mxu0 %v575
    %783 = vmatpush.bf16.msra.mxu0 %v573
    %784 = vmatpush.bf16.msra.mxu0 %v571
    %785 = vmatpush.bf16.msra.mxu0 %v569
    %786 = vmatpush.bf16.msra.mxu0 %v567
    %787 = vmatmul.bf16.gmra.mxu0 %v778
    %v788 = vpop.f32.mrf.mxu0
    %v789 = vadd.f32 %v515, %v788
    %v790 = vpop.f32.mrf.mxu0
    %791 = vdwg.mxu0
    %792 = vmatpush.bf16.msra.mxu0 %v582
    %793 = vmatpush.bf16.msra.mxu0 %v580
    %794 = vmatpush.bf16.msra.mxu0 %v578
    %795 = vmatpush.bf16.msra.mxu0 %v576
    %796 = vmatpush.bf16.msra.mxu0 %v574
    %797 = vmatpush.bf16.msra.mxu0 %v572
    %798 = vmatpush.bf16.msra.mxu0 %v570
    %799 = vmatpush.bf16.msra.mxu0 %v568
    %800 = vmatmul.bf16.gmra.mxu0 %v778
    %v801 = vpop.f32.mrf.mxu0
    %v802 = vadd.f32 %v516, %v801
    %v803 = vpop.f32.mrf.mxu0
    %804 = vdwg.mxu0
    %805 = vst [vmem:[%s719] sm:$0xff] %v789
    %806 = vst [vmem:[%s719 + $0x8] sm:$0xff] %v802
    %s807 = smul.u32 3, 2
    %s808 = smul.addr %s807, 8
    %s809 = scalar_lea.vmem [#allocation2], %s808
    %v810 = vld [vmem:[%s809] sm:$0xff]
    %v811 = vld [vmem:[%s809 + $0x8] sm:$0xff]
    %812 = vmatpush.bf16.msra.mxu0 %v436
    %813 = vmatpush.bf16.msra.mxu0 %v434
    %814 = vmatpush.bf16.msra.mxu0 %v432
    %815 = vmatpush.bf16.msra.mxu0 %v430
    %816 = vmatpush.bf16.msra.mxu0 %v428
    %817 = vmatpush.bf16.msra.mxu0 %v426
    %818 = vmatpush.bf16.msra.mxu0 %v424
    %819 = vmatpush.bf16.msra.mxu0 %v422
    %820 = vmatmul.bf16.gmra.mxu0 %v778
    %v821 = vpop.f32.mrf.mxu0
    %v822 = vadd.f32 0.0, %v821
    %v823 = vpop.f32.mrf.mxu0
    %824 = vdwg.mxu0
    %825 = vmatpush.bf16.msra.mxu0 %v437
    %826 = vmatpush.bf16.msra.mxu0 %v435
    %827 = vmatpush.bf16.msra.mxu0 %v433
    %828 = vmatpush.bf16.msra.mxu0 %v431
    %829 = vmatpush.bf16.msra.mxu0 %v429
    %830 = vmatpush.bf16.msra.mxu0 %v427
    %831 = vmatpush.bf16.msra.mxu0 %v425
    %832 = vmatpush.bf16.msra.mxu0 %v423
    %833 = vmatmul.bf16.gmra.mxu0 %v778
    %v834 = vpop.f32.mrf.mxu0
    %v835 = vadd.f32 0.0, %v834
    %v836 = vpop.f32.mrf.mxu0
    %837 = vdwg.mxu0
    %v838 = vadd.f32 %v810, %v822
    %v839 = vxor.u32 %v838, 2147483648
    %v840 = vmul.f32 %v839, 1.442695
    %v841 = vpow.pop %v840
    %v842 = vadd.f32 %v841, 1.0
    %v843 = vrcp.pop %v842
    %v844 = vmul.f32 %v842, %v843
    %v845 = vsub.f32 1.0, %v844
    %v846 = vmul.f32 %v843, %v845
    %v847 = vadd.f32 %v843, %v846
    %vm848 = vweird.f32 %v842
    %vm849 = vweird.f32 %v843
    %vm850 = vmor %vm848, %vm849
    %v851 = vsel %vm850, %v843, %v847
    %v852 = vand.u32 2147483647, %v842
    %vm853 = vcmp.eq.f32.partialorder %v852, 8.507059e+37
    %v854 = vand.u32 %v842, 2147483648
    %v855 = vor.u32 1.1754944e-38, %v854
    %v856 = vsel %vm853, %v855, %v851
    %v857 = vmul.f32 1.0, %v856
    %858 = vrot.lane.b32.xlu0 %v857, 64
    %v859 = vpop.permute.xlu0 %858
    %v860 = vadd.f32 %v835, %v503
    %v861 = vmul.f32 %v857, %v860
    %v862 = vadd.f32 %v811, %v861
    %v863 = vtanh.pop %v862
    %v864 = vsub.f32 1.0, %v859
    %v865 = vmul.f32 %v864, %v863
    %v866 = vmul.f32 %v859, %v777
    %v867 = vadd.f32 %v865, %v866
    %v868 = vpack.c.bf16 %v867, %v867
    %869 = vmatpush.bf16.msra.mxu0 %v581
    %870 = vmatpush.bf16.msra.mxu0 %v579
    %871 = vmatpush.bf16.msra.mxu0 %v577
    %872 = vmatpush.bf16.msra.mxu0 %v575
    %873 = vmatpush.bf16.msra.mxu0 %v573
    %874 = vmatpush.bf16.msra.mxu0 %v571
    %875 = vmatpush.bf16.msra.mxu0 %v569
    %876 = vmatpush.bf16.msra.mxu0 %v567
    %877 = vmatmul.bf16.gmra.mxu0 %v868
    %v878 = vpop.f32.mrf.mxu0
    %v879 = vadd.f32 %v515, %v878
    %v880 = vpop.f32.mrf.mxu0
    %881 = vdwg.mxu0
    %882 = vmatpush.bf16.msra.mxu0 %v582
    %883 = vmatpush.bf16.msra.mxu0 %v580
    %884 = vmatpush.bf16.msra.mxu0 %v578
    %885 = vmatpush.bf16.msra.mxu0 %v576
    %886 = vmatpush.bf16.msra.mxu0 %v574
    %887 = vmatpush.bf16.msra.mxu0 %v572
    %888 = vmatpush.bf16.msra.mxu0 %v570
    %889 = vmatpush.bf16.msra.mxu0 %v568
    %890 = vmatmul.bf16.gmra.mxu0 %v868
    %v891 = vpop.f32.mrf.mxu0
    %v892 = vadd.f32 %v516, %v891
    %v893 = vpop.f32.mrf.mxu0
    %894 = vdwg.mxu0
    %895 = vst [vmem:[%s809] sm:$0xff] %v879
    %896 = vst [vmem:[%s809 + $0x8] sm:$0xff] %v892
    %s897 = smul.u32 4, 2
    %s898 = smul.addr %s897, 8
    %s899 = scalar_lea.vmem [#allocation2], %s898
    %v900 = vld [vmem:[%s899] sm:$0xff]
    %v901 = vld [vmem:[%s899 + $0x8] sm:$0xff]
    %902 = vmatpush.bf16.msra.mxu0 %v436
    %903 = vmatpush.bf16.msra.mxu0 %v434
    %904 = vmatpush.bf16.msra.mxu0 %v432
    %905 = vmatpush.bf16.msra.mxu0 %v430
    %906 = vmatpush.bf16.msra.mxu0 %v428
    %907 = vmatpush.bf16.msra.mxu0 %v426
    %908 = vmatpush.bf16.msra.mxu0 %v424
    %909 = vmatpush.bf16.msra.mxu0 %v422
    %910 = vmatmul.bf16.gmra.mxu0 %v868
    %v911 = vpop.f32.mrf.mxu0
    %v912 = vadd.f32 0.0, %v911
    %v913 = vpop.f32.mrf.mxu0
    %914 = vdwg.mxu0
    %915 = vmatpush.bf16.msra.mxu0 %v437
    %916 = vmatpush.bf16.msra.mxu0 %v435
    %917 = vmatpush.bf16.msra.mxu0 %v433
    %918 = vmatpush.bf16.msra.mxu0 %v431
    %919 = vmatpush.bf16.msra.mxu0 %v429
    %920 = vmatpush.bf16.msra.mxu0 %v427
    %921 = vmatpush.bf16.msra.mxu0 %v425
    %922 = vmatpush.bf16.msra.mxu0 %v423
    %923 = vmatmul.bf16.gmra.mxu0 %v868
    %v924 = vpop.f32.mrf.mxu0
    %v925 = vadd.f32 0.0, %v924
    %v926 = vpop.f32.mrf.mxu0
    %927 = vdwg.mxu0
    %v928 = vadd.f32 %v900, %v912
    %v929 = vxor.u32 %v928, 2147483648
    %v930 = vmul.f32 %v929, 1.442695
    %v931 = vpow.pop %v930
    %v932 = vadd.f32 %v931, 1.0
    %v933 = vrcp.pop %v932
    %v934 = vmul.f32 %v932, %v933
    %v935 = vsub.f32 1.0, %v934
    %v936 = vmul.f32 %v933, %v935
    %v937 = vadd.f32 %v933, %v936
    %vm938 = vweird.f32 %v932
    %vm939 = vweird.f32 %v933
    %vm940 = vmor %vm938, %vm939
    %v941 = vsel %vm940, %v933, %v937
    %v942 = vand.u32 2147483647, %v932
    %vm943 = vcmp.eq.f32.partialorder %v942, 8.507059e+37
    %v944 = vand.u32 %v932, 2147483648
    %v945 = vor.u32 1.1754944e-38, %v944
    %v946 = vsel %vm943, %v945, %v941
    %v947 = vmul.f32 1.0, %v946
    %948 = vrot.lane.b32.xlu0 %v947, 64
    %v949 = vpop.permute.xlu0 %948
    %v950 = vadd.f32 %v925, %v503
    %v951 = vmul.f32 %v947, %v950
    %v952 = vadd.f32 %v901, %v951
    %v953 = vtanh.pop %v952
    %v954 = vsub.f32 1.0, %v949
    %v955 = vmul.f32 %v954, %v953
    %v956 = vmul.f32 %v949, %v867
    %v957 = vadd.f32 %v955, %v956
    %v958 = vpack.c.bf16 %v957, %v957
    %959 = vmatpush.bf16.msra.mxu0 %v581
    %960 = vmatpush.bf16.msra.mxu0 %v579
    %961 = vmatpush.bf16.msra.mxu0 %v577
    %962 = vmatpush.bf16.msra.mxu0 %v575
    %963 = vmatpush.bf16.msra.mxu0 %v573
    %964 = vmatpush.bf16.msra.mxu0 %v571
    %965 = vmatpush.bf16.msra.mxu0 %v569
    %966 = vmatpush.bf16.msra.mxu0 %v567
    %967 = vmatmul.bf16.gmra.mxu0 %v958
    %v968 = vpop.f32.mrf.mxu0
    %v969 = vadd.f32 %v515, %v968
    %v970 = vpop.f32.mrf.mxu0
    %971 = vdwg.mxu0
    %972 = vmatpush.bf16.msra.mxu0 %v582
    %973 = vmatpush.bf16.msra.mxu0 %v580
    %974 = vmatpush.bf16.msra.mxu0 %v578
    %975 = vmatpush.bf16.msra.mxu0 %v576
    %976 = vmatpush.bf16.msra.mxu0 %v574
    %977 = vmatpush.bf16.msra.mxu0 %v572
    %978 = vmatpush.bf16.msra.mxu0 %v570
    %979 = vmatpush.bf16.msra.mxu0 %v568
    %980 = vmatmul.bf16.gmra.mxu0 %v958
    %v981 = vpop.f32.mrf.mxu0
    %v982 = vadd.f32 %v516, %v981
    %v983 = vpop.f32.mrf.mxu0
    %984 = vdwg.mxu0
    %985 = vst [vmem:[%s899] sm:$0xff] %v969
    %986 = vst [vmem:[%s899 + $0x8] sm:$0xff] %v982
    %s987 = smul.u32 5, 2
    %s988 = smul.addr %s987, 8
    %s989 = scalar_lea.vmem [#allocation2], %s988
    %v990 = vld [vmem:[%s989] sm:$0xff]
    %v991 = vld [vmem:[%s989 + $0x8] sm:$0xff]
    %992 = vmatpush.bf16.msra.mxu0 %v436
    %993 = vmatpush.bf16.msra.mxu0 %v434
    %994 = vmatpush.bf16.msra.mxu0 %v432
    %995 = vmatpush.bf16.msra.mxu0 %v430
    %996 = vmatpush.bf16.msra.mxu0 %v428
    %997 = vmatpush.bf16.msra.mxu0 %v426
    %998 = vmatpush.bf16.msra.mxu0 %v424
    %999 = vmatpush.bf16.msra.mxu0 %v422
    %1000 = vmatmul.bf16.gmra.mxu0 %v958
    %v1001 = vpop.f32.mrf.mxu0
    %v1002 = vadd.f32 0.0, %v1001
    %v1003 = vpop.f32.mrf.mxu0
    %1004 = vdwg.mxu0
    %1005 = vmatpush.bf16.msra.mxu0 %v437
    %1006 = vmatpush.bf16.msra.mxu0 %v435
    %1007 = vmatpush.bf16.msra.mxu0 %v433
    %1008 = vmatpush.bf16.msra.mxu0 %v431
    %1009 = vmatpush.bf16.msra.mxu0 %v429
    %1010 = vmatpush.bf16.msra.mxu0 %v427
    %1011 = vmatpush.bf16.msra.mxu0 %v425
    %1012 = vmatpush.bf16.msra.mxu0 %v423
    %1013 = vmatmul.bf16.gmra.mxu0 %v958
    %v1014 = vpop.f32.mrf.mxu0
    %v1015 = vadd.f32 0.0, %v1014
    %v1016 = vpop.f32.mrf.mxu0
    %1017 = vdwg.mxu0
    %v1018 = vadd.f32 %v990, %v1002
    %v1019 = vxor.u32 %v1018, 2147483648
    %v1020 = vmul.f32 %v1019, 1.442695
    %v1021 = vpow.pop %v1020
    %v1022 = vadd.f32 %v1021, 1.0
    %v1023 = vrcp.pop %v1022
    %v1024 = vmul.f32 %v1022, %v1023
    %v1025 = vsub.f32 1.0, %v1024
    %v1026 = vmul.f32 %v1023, %v1025
    %v1027 = vadd.f32 %v1023, %v1026
    %vm1028 = vweird.f32 %v1022
    %vm1029 = vweird.f32 %v1023
    %vm1030 = vmor %vm1028, %vm1029
    %v1031 = vsel %vm1030, %v1023, %v1027
    %v1032 = vand.u32 2147483647, %v1022
    %vm1033 = vcmp.eq.f32.partialorder %v1032, 8.507059e+37
    %v1034 = vand.u32 %v1022, 2147483648
    %v1035 = vor.u32 1.1754944e-38, %v1034
    %v1036 = vsel %vm1033, %v1035, %v1031
    %v1037 = vmul.f32 1.0, %v1036
    %1038 = vrot.lane.b32.xlu0 %v1037, 64
    %v1039 = vpop.permute.xlu0 %1038
    %v1040 = vadd.f32 %v1015, %v503
    %v1041 = vmul.f32 %v1037, %v1040
    %v1042 = vadd.f32 %v991, %v1041
    %v1043 = vtanh.pop %v1042
    %v1044 = vsub.f32 1.0, %v1039
    %v1045 = vmul.f32 %v1044, %v1043
    %v1046 = vmul.f32 %v1039, %v957
    %v1047 = vadd.f32 %v1045, %v1046
    %v1048 = vpack.c.bf16 %v1047, %v1047
    %1049 = vmatpush.bf16.msra.mxu0 %v581
    %1050 = vmatpush.bf16.msra.mxu0 %v579
    %1051 = vmatpush.bf16.msra.mxu0 %v577
    %1052 = vmatpush.bf16.msra.mxu0 %v575
    %1053 = vmatpush.bf16.msra.mxu0 %v573
    %1054 = vmatpush.bf16.msra.mxu0 %v571
    %1055 = vmatpush.bf16.msra.mxu0 %v569
    %1056 = vmatpush.bf16.msra.mxu0 %v567
    %1057 = vmatmul.bf16.gmra.mxu0 %v1048
    %v1058 = vpop.f32.mrf.mxu0
    %v1059 = vadd.f32 %v515, %v1058
    %v1060 = vpop.f32.mrf.mxu0
    %1061 = vdwg.mxu0
    %1062 = vmatpush.bf16.msra.mxu0 %v582
    %1063 = vmatpush.bf16.msra.mxu0 %v580
    %1064 = vmatpush.bf16.msra.mxu0 %v578
    %1065 = vmatpush.bf16.msra.mxu0 %v576
    %1066 = vmatpush.bf16.msra.mxu0 %v574
    %1067 = vmatpush.bf16.msra.mxu0 %v572
    %1068 = vmatpush.bf16.msra.mxu0 %v570
    %1069 = vmatpush.bf16.msra.mxu0 %v568
    %1070 = vmatmul.bf16.gmra.mxu0 %v1048
    %v1071 = vpop.f32.mrf.mxu0
    %v1072 = vadd.f32 %v516, %v1071
    %v1073 = vpop.f32.mrf.mxu0
    %1074 = vdwg.mxu0
    %1075 = vst [vmem:[%s989] sm:$0xff] %v1059
    %1076 = vst [vmem:[%s989 + $0x8] sm:$0xff] %v1072
    %s1077 = smul.u32 6, 2
    %s1078 = smul.addr %s1077, 8
    %s1079 = scalar_lea.vmem [#allocation2], %s1078
    %v1080 = vld [vmem:[%s1079] sm:$0xff]
    %v1081 = vld [vmem:[%s1079 + $0x8] sm:$0xff]
    %1082 = vmatpush.bf16.msra.mxu0 %v436
    %1083 = vmatpush.bf16.msra.mxu0 %v434
    %1084 = vmatpush.bf16.msra.mxu0 %v432
    %1085 = vmatpush.bf16.msra.mxu0 %v430
    %1086 = vmatpush.bf16.msra.mxu0 %v428
    %1087 = vmatpush.bf16.msra.mxu0 %v426
    %1088 = vmatpush.bf16.msra.mxu0 %v424
    %1089 = vmatpush.bf16.msra.mxu0 %v422
    %1090 = vmatmul.bf16.gmra.mxu0 %v1048
    %v1091 = vpop.f32.mrf.mxu0
    %v1092 = vadd.f32 0.0, %v1091
    %v1093 = vpop.f32.mrf.mxu0
    %1094 = vdwg.mxu0
    %1095 = vmatpush.bf16.msra.mxu0 %v437
    %1096 = vmatpush.bf16.msra.mxu0 %v435
    %1097 = vmatpush.bf16.msra.mxu0 %v433
    %1098 = vmatpush.bf16.msra.mxu0 %v431
    %1099 = vmatpush.bf16.msra.mxu0 %v429
    %1100 = vmatpush.bf16.msra.mxu0 %v427
    %1101 = vmatpush.bf16.msra.mxu0 %v425
    %1102 = vmatpush.bf16.msra.mxu0 %v423
    %1103 = vmatmul.bf16.gmra.mxu0 %v1048
    %v1104 = vpop.f32.mrf.mxu0
    %v1105 = vadd.f32 0.0, %v1104
    %v1106 = vpop.f32.mrf.mxu0
    %1107 = vdwg.mxu0
    %v1108 = vadd.f32 %v1080, %v1092
    %v1109 = vxor.u32 %v1108, 2147483648
    %v1110 = vmul.f32 %v1109, 1.442695
    %v1111 = vpow.pop %v1110
    %v1112 = vadd.f32 %v1111, 1.0
    %v1113 = vrcp.pop %v1112
    %v1114 = vmul.f32 %v1112, %v1113
    %v1115 = vsub.f32 1.0, %v1114
    %v1116 = vmul.f32 %v1113, %v1115
    %v1117 = vadd.f32 %v1113, %v1116
    %vm1118 = vweird.f32 %v1112
    %vm1119 = vweird.f32 %v1113
    %vm1120 = vmor %vm1118, %vm1119
    %v1121 = vsel %vm1120, %v1113, %v1117
    %v1122 = vand.u32 2147483647, %v1112
    %vm1123 = vcmp.eq.f32.partialorder %v1122, 8.507059e+37
    %v1124 = vand.u32 %v1112, 2147483648
    %v1125 = vor.u32 1.1754944e-38, %v1124
    %v1126 = vsel %vm1123, %v1125, %v1121
    %v1127 = vmul.f32 1.0, %v1126
    %1128 = vrot.lane.b32.xlu0 %v1127, 64
    %v1129 = vpop.permute.xlu0 %1128
    %v1130 = vadd.f32 %v1105, %v503
    %v1131 = vmul.f32 %v1127, %v1130
    %v1132 = vadd.f32 %v1081, %v1131
    %v1133 = vtanh.pop %v1132
    %v1134 = vsub.f32 1.0, %v1129
    %v1135 = vmul.f32 %v1134, %v1133
    %v1136 = vmul.f32 %v1129, %v1047
    %v1137 = vadd.f32 %v1135, %v1136
    %v1138 = vpack.c.bf16 %v1137, %v1137
    %1139 = vmatpush.bf16.msra.mxu0 %v581
    %1140 = vmatpush.bf16.msra.mxu0 %v579
    %1141 = vmatpush.bf16.msra.mxu0 %v577
    %1142 = vmatpush.bf16.msra.mxu0 %v575
    %1143 = vmatpush.bf16.msra.mxu0 %v573
    %1144 = vmatpush.bf16.msra.mxu0 %v571
    %1145 = vmatpush.bf16.msra.mxu0 %v569
    %1146 = vmatpush.bf16.msra.mxu0 %v567
    %1147 = vmatmul.bf16.gmra.mxu0 %v1138
    %v1148 = vpop.f32.mrf.mxu0
    %v1149 = vadd.f32 %v515, %v1148
    %v1150 = vpop.f32.mrf.mxu0
    %1151 = vdwg.mxu0
    %1152 = vmatpush.bf16.msra.mxu0 %v582
    %1153 = vmatpush.bf16.msra.mxu0 %v580
    %1154 = vmatpush.bf16.msra.mxu0 %v578
    %1155 = vmatpush.bf16.msra.mxu0 %v576
    %1156 = vmatpush.bf16.msra.mxu0 %v574
    %1157 = vmatpush.bf16.msra.mxu0 %v572
    %1158 = vmatpush.bf16.msra.mxu0 %v570
    %1159 = vmatpush.bf16.msra.mxu0 %v568
    %1160 = vmatmul.bf16.gmra.mxu0 %v1138
    %v1161 = vpop.f32.mrf.mxu0
    %v1162 = vadd.f32 %v516, %v1161
    %v1163 = vpop.f32.mrf.mxu0
    %1164 = vdwg.mxu0
    %1165 = vst [vmem:[%s1079] sm:$0xff] %v1149
    %1166 = vst [vmem:[%s1079 + $0x8] sm:$0xff] %v1162
    %s1167 = smul.u32 7, 2
    %s1168 = smul.addr %s1167, 8
    %s1169 = scalar_lea.vmem [#allocation2], %s1168
    %v1170 = vld [vmem:[%s1169] sm:$0xff]
    %v1171 = vld [vmem:[%s1169 + $0x8] sm:$0xff]
    %1172 = vmatpush.bf16.msra.mxu0 %v436
    %1173 = vmatpush.bf16.msra.mxu0 %v434
    %1174 = vmatpush.bf16.msra.mxu0 %v432
    %1175 = vmatpush.bf16.msra.mxu0 %v430
    %1176 = vmatpush.bf16.msra.mxu0 %v428
    %1177 = vmatpush.bf16.msra.mxu0 %v426
    %1178 = vmatpush.bf16.msra.mxu0 %v424
    %1179 = vmatpush.bf16.msra.mxu0 %v422
    %1180 = vmatmul.bf16.gmra.mxu0 %v1138
    %v1181 = vpop.f32.mrf.mxu0
    %v1182 = vadd.f32 0.0, %v1181
    %v1183 = vpop.f32.mrf.mxu0
    %1184 = vdwg.mxu0
    %1185 = vmatpush.bf16.msra.mxu0 %v437
    %1186 = vmatpush.bf16.msra.mxu0 %v435
    %1187 = vmatpush.bf16.msra.mxu0 %v433
    %1188 = vmatpush.bf16.msra.mxu0 %v431
    %1189 = vmatpush.bf16.msra.mxu0 %v429
    %1190 = vmatpush.bf16.msra.mxu0 %v427
    %1191 = vmatpush.bf16.msra.mxu0 %v425
    %1192 = vmatpush.bf16.msra.mxu0 %v423
    %1193 = vmatmul.bf16.gmra.mxu0 %v1138
    %v1194 = vpop.f32.mrf.mxu0
    %v1195 = vadd.f32 0.0, %v1194
    %v1196 = vpop.f32.mrf.mxu0
    %1197 = vdwg.mxu0
    %v1198 = vadd.f32 %v1170, %v1182
    %v1199 = vxor.u32 %v1198, 2147483648
    %v1200 = vmul.f32 %v1199, 1.442695
    %v1201 = vpow.pop %v1200
    %v1202 = vadd.f32 %v1201, 1.0
    %v1203 = vrcp.pop %v1202
    %v1204 = vmul.f32 %v1202, %v1203
    %v1205 = vsub.f32 1.0, %v1204
    %v1206 = vmul.f32 %v1203, %v1205
    %v1207 = vadd.f32 %v1203, %v1206
    %vm1208 = vweird.f32 %v1202
    %vm1209 = vweird.f32 %v1203
    %vm1210 = vmor %vm1208, %vm1209
    %v1211 = vsel %vm1210, %v1203, %v1207
    %v1212 = vand.u32 2147483647, %v1202
    %vm1213 = vcmp.eq.f32.partialorder %v1212, 8.507059e+37
    %v1214 = vand.u32 %v1202, 2147483648
    %v1215 = vor.u32 1.1754944e-38, %v1214
    %v1216 = vsel %vm1213, %v1215, %v1211
    %v1217 = vmul.f32 1.0, %v1216
    %1218 = vrot.lane.b32.xlu0 %v1217, 64
    %v1219 = vpop.permute.xlu0 %1218
    %v1220 = vadd.f32 %v1195, %v503
    %v1221 = vmul.f32 %v1217, %v1220
    %v1222 = vadd.f32 %v1171, %v1221
    %v1223 = vtanh.pop %v1222
    %v1224 = vsub.f32 1.0, %v1219
    %v1225 = vmul.f32 %v1224, %v1223
    %v1226 = vmul.f32 %v1219, %v1137
    %v1227 = vadd.f32 %v1225, %v1226
    %v1228 = vpack.c.bf16 %v1227, %v1227
    %1229 = vmatpush.bf16.msra.mxu0 %v581
    %1230 = vmatpush.bf16.msra.mxu0 %v579
    %1231 = vmatpush.bf16.msra.mxu0 %v577
    %1232 = vmatpush.bf16.msra.mxu0 %v575
    %1233 = vmatpush.bf16.msra.mxu0 %v573
    %1234 = vmatpush.bf16.msra.mxu0 %v571
    %1235 = vmatpush.bf16.msra.mxu0 %v569
    %1236 = vmatpush.bf16.msra.mxu0 %v567
    %1237 = vmatmul.bf16.gmra.mxu0 %v1228
    %v1238 = vpop.f32.mrf.mxu0
    %v1239 = vadd.f32 %v515, %v1238
    %v1240 = vpop.f32.mrf.mxu0
    %1241 = vdwg.mxu0
    %1242 = vmatpush.bf16.msra.mxu0 %v582
    %1243 = vmatpush.bf16.msra.mxu0 %v580
    %1244 = vmatpush.bf16.msra.mxu0 %v578
    %1245 = vmatpush.bf16.msra.mxu0 %v576
    %1246 = vmatpush.bf16.msra.mxu0 %v574
    %1247 = vmatpush.bf16.msra.mxu0 %v572
    %1248 = vmatpush.bf16.msra.mxu0 %v570
    %1249 = vmatpush.bf16.msra.mxu0 %v568
    %1250 = vmatmul.bf16.gmra.mxu0 %v1228
    %v1251 = vpop.f32.mrf.mxu0
    %v1252 = vadd.f32 %v516, %v1251
    %v1253 = vpop.f32.mrf.mxu0
    %1254 = vdwg.mxu0
    %1255 = vst [vmem:[%s1169] sm:$0xff] %v1239
    %1256 = vst [vmem:[%s1169 + $0x8] sm:$0xff] %v1252
    %v1257 = vld [vmem:[#allocation8] sm:$0xff]
    %v1258 = vld [vmem:[#allocation8 + $0x8] sm:$0xff]
    %v1259 = vld [vmem:[#allocation8 + $0x10] sm:$0xff]
    %v1260 = vld [vmem:[#allocation8 + $0x18] sm:$0xff]
    %v1261 = vld [vmem:[#allocation8 + $0x20] sm:$0xff]
    %v1262 = vld [vmem:[#allocation8 + $0x28] sm:$0xff]
    %v1263 = vld [vmem:[#allocation8 + $0x30] sm:$0xff]
    %v1264 = vld [vmem:[#allocation8 + $0x38] sm:$0xff]
    %v1265 = vld [vmem:[#allocation8 + $0x40] sm:$0xff]
    %v1266 = vld [vmem:[#allocation8 + $0x48] sm:$0xff]
    %v1267 = vld [vmem:[#allocation8 + $0x50] sm:$0xff]
    %v1268 = vld [vmem:[#allocation8 + $0x58] sm:$0xff]
    %v1269 = vld [vmem:[#allocation8 + $0x60] sm:$0xff]
    %v1270 = vld [vmem:[#allocation8 + $0x68] sm:$0xff]
    %v1271 = vld [vmem:[#allocation8 + $0x70] sm:$0xff]
    %v1272 = vld [vmem:[#allocation8 + $0x78] sm:$0xff]
    %v1273 = vld [vmem:[%s8] sm:$0x1]
    %v1274 = vld [vmem:[#allocation9] sm:$0xff]
    %v1275 = vld [vmem:[#allocation9 + $0x8] sm:$0xff]
    %v1276 = vld [vmem:[#allocation9 + $0x10] sm:$0xff]
    %v1277 = vld [vmem:[#allocation9 + $0x18] sm:$0xff]
    %v1278 = vld [vmem:[#allocation9 + $0x20] sm:$0xff]
    %v1279 = vld [vmem:[#allocation9 + $0x28] sm:$0xff]
    %v1280 = vld [vmem:[#allocation9 + $0x30] sm:$0xff]
    %v1281 = vld [vmem:[#allocation9 + $0x38] sm:$0xff]
    %v1282 = vld [vmem:[#allocation9 + $0x40] sm:$0xff]
    %v1283 = vld [vmem:[#allocation9 + $0x48] sm:$0xff]
    %v1284 = vld [vmem:[#allocation9 + $0x50] sm:$0xff]
    %v1285 = vld [vmem:[#allocation9 + $0x58] sm:$0xff]
    %v1286 = vld [vmem:[#allocation9 + $0x60] sm:$0xff]
    %v1287 = vld [vmem:[#allocation9 + $0x68] sm:$0xff]
    %v1288 = vld [vmem:[#allocation9 + $0x70] sm:$0xff]
    %v1289 = vld [vmem:[#allocation9 + $0x78] sm:$0xff]
    %v1290 = vld [vmem:[%s11] sm:$0x3]
    %v1291 = vld [vmem:[%s371] sm:$0xff]
    %v1292 = vld [vmem:[%s371 + $0x8] sm:$0xff]
    %v1309 = vunpack.c.l.b16 %v1257
    %v1310 = vunpack.c.h.b16 %v1257
    %v1311 = vunpack.c.l.b16 %v1258
    %v1312 = vunpack.c.h.b16 %v1258
    %v1313 = vunpack.c.l.b16 %v1259
    %v1314 = vunpack.c.h.b16 %v1259
    %v1315 = vunpack.c.l.b16 %v1260
    %v1316 = vunpack.c.h.b16 %v1260
    %v1317 = vunpack.c.l.b16 %v1261
    %v1318 = vunpack.c.h.b16 %v1261
    %v1319 = vunpack.c.l.b16 %v1262
    %v1320 = vunpack.c.h.b16 %v1262
    %v1321 = vunpack.c.l.b16 %v1263
    %v1322 = vunpack.c.h.b16 %v1263
    %v1323 = vunpack.c.l.b16 %v1264
    %v1324 = vunpack.c.h.b16 %v1264
    %v1325 = vunpack.c.l.b16 %v1265
    %v1326 = vunpack.c.h.b16 %v1265
    %v1327 = vunpack.c.l.b16 %v1266
    %v1328 = vunpack.c.h.b16 %v1266
    %v1329 = vunpack.c.l.b16 %v1267
    %v1330 = vunpack.c.h.b16 %v1267
    %v1331 = vunpack.c.l.b16 %v1268
    %v1332 = vunpack.c.h.b16 %v1268
    %v1333 = vunpack.c.l.b16 %v1269
    %v1334 = vunpack.c.h.b16 %v1269
    %v1335 = vunpack.c.l.b16 %v1270
    %v1336 = vunpack.c.h.b16 %v1270
    %v1337 = vunpack.c.l.b16 %v1271
    %v1338 = vunpack.c.h.b16 %v1271
    %v1339 = vunpack.c.l.b16 %v1272
    %v1340 = vunpack.c.h.b16 %v1272
    %v1341 = vpack.c.b16 %v1311, %v1309
    %v1342 = vpack.c.b16 %v1312, %v1310
    %v1343 = vpack.c.b16 %v1315, %v1313
    %v1344 = vpack.c.b16 %v1316, %v1314
    %v1345 = vpack.c.b16 %v1319, %v1317
    %v1346 = vpack.c.b16 %v1320, %v1318
    %v1347 = vpack.c.b16 %v1323, %v1321
    %v1348 = vpack.c.b16 %v1324, %v1322
    %v1349 = vpack.c.b16 %v1327, %v1325
    %v1350 = vpack.c.b16 %v1328, %v1326
    %v1351 = vpack.c.b16 %v1331, %v1329
    %v1352 = vpack.c.b16 %v1332, %v1330
    %v1353 = vpack.c.b16 %v1335, %v1333
    %v1354 = vpack.c.b16 %v1336, %v1334
    %v1355 = vpack.c.b16 %v1339, %v1337
    %v1356 = vpack.c.b16 %v1340, %v1338
    %1373 = vmatpush.bf16.msra.mxu0 %v1355
    %1374 = vmatpush.bf16.msra.mxu0 %v1353
    %1375 = vmatpush.bf16.msra.mxu0 %v1351
    %1376 = vmatpush.bf16.msra.mxu0 %v1349
    %1377 = vmatpush.bf16.msra.mxu0 %v1347
    %1378 = vmatpush.bf16.msra.mxu0 %v1345
    %1379 = vmatpush.bf16.msra.mxu0 %v1343
    %1380 = vmatpush.bf16.msra.mxu0 %v1341
    %1381 = vmatmul.bf16.gmra.mxu0 0
    %v1382 = vpop.f32.mrf.mxu0
    %v1383 = vadd.f32 0.0, %v1382
    %v1384 = vpop.f32.mrf.mxu0
    %1385 = vdwg.mxu0
    %1386 = vmatpush.bf16.msra.mxu0 %v1356
    %1387 = vmatpush.bf16.msra.mxu0 %v1354
    %1388 = vmatpush.bf16.msra.mxu0 %v1352
    %1389 = vmatpush.bf16.msra.mxu0 %v1350
    %1390 = vmatpush.bf16.msra.mxu0 %v1348
    %1391 = vmatpush.bf16.msra.mxu0 %v1346
    %1392 = vmatpush.bf16.msra.mxu0 %v1344
    %1393 = vmatpush.bf16.msra.mxu0 %v1342
    %1394 = vmatmul.bf16.gmra.mxu0 0
    %v1395 = vpop.f32.mrf.mxu0
    %v1396 = vadd.f32 0.0, %v1395
    %v1397 = vpop.f32.mrf.mxu0
    %1398 = vdwg.mxu0
    %v1399 = vadd.f32 %v1291, %v1383
    %v1400 = vxor.u32 %v1399, 2147483648
    %v1401 = vmul.f32 %v1400, 1.442695
    %v1402 = vpow.pop %v1401
    %v1403 = vadd.f32 %v1402, 1.0
    %v1404 = vrcp.pop %v1403
    %v1405 = vmul.f32 %v1403, %v1404
    %v1406 = vsub.f32 1.0, %v1405
    %v1407 = vmul.f32 %v1404, %v1406
    %v1408 = vadd.f32 %v1404, %v1407
    %vm1409 = vweird.f32 %v1403
    %vm1410 = vweird.f32 %v1404
    %vm1411 = vmor %vm1409, %vm1410
    %v1412 = vsel %vm1411, %v1404, %v1408
    %v1413 = vand.u32 2147483647, %v1403
    %vm1414 = vcmp.eq.f32.partialorder %v1413, 8.507059e+37
    %v1415 = vand.u32 %v1403, 2147483648
    %v1416 = vor.u32 1.1754944e-38, %v1415
    %v1417 = vsel %vm1414, %v1416, %v1412
    %v1418 = vmul.f32 1.0, %v1417
    %1419 = vrot.lane.b32.xlu0 %v1418, 64
    %v1420 = vpop.permute.xlu0 %1419
    %v1422 = vperm.slane %v1273, 0
    %v1424 = vadd.f32 %v1396, %v1422
    %v1425 = vmul.f32 %v1418, %v1424
    %v1426 = vadd.f32 %v1292, %v1425
    %v1427 = vtanh.pop %v1426
    %v1428 = vsub.f32 1.0, %v1420
    %v1429 = vmul.f32 %v1428, %v1427
    %v1430 = vmul.f32 %v1420, 0.0
    %v1431 = vadd.f32 %v1429, %v1430
    %v1432 = vpack.c.bf16 %v1431, %v1431
    %v1434 = vperm.slane %v1290, 0
    %v1435 = vperm.slane %v1290, 1
    %v1454 = vunpack.c.l.b16 %v1274
    %v1455 = vunpack.c.h.b16 %v1274
    %v1456 = vunpack.c.l.b16 %v1275
    %v1457 = vunpack.c.h.b16 %v1275
    %v1458 = vunpack.c.l.b16 %v1276
    %v1459 = vunpack.c.h.b16 %v1276
    %v1460 = vunpack.c.l.b16 %v1277
    %v1461 = vunpack.c.h.b16 %v1277
    %v1462 = vunpack.c.l.b16 %v1278
    %v1463 = vunpack.c.h.b16 %v1278
    %v1464 = vunpack.c.l.b16 %v1279
    %v1465 = vunpack.c.h.b16 %v1279
    %v1466 = vunpack.c.l.b16 %v1280
    %v1467 = vunpack.c.h.b16 %v1280
    %v1468 = vunpack.c.l.b16 %v1281
    %v1469 = vunpack.c.h.b16 %v1281
    %v1470 = vunpack.c.l.b16 %v1282
    %v1471 = vunpack.c.h.b16 %v1282
    %v1472 = vunpack.c.l.b16 %v1283
    %v1473 = vunpack.c.h.b16 %v1283
    %v1474 = vunpack.c.l.b16 %v1284
    %v1475 = vunpack.c.h.b16 %v1284
    %v1476 = vunpack.c.l.b16 %v1285
    %v1477 = vunpack.c.h.b16 %v1285
    %v1478 = vunpack.c.l.b16 %v1286
    %v1479 = vunpack.c.h.b16 %v1286
    %v1480 = vunpack.c.l.b16 %v1287
    %v1481 = vunpack.c.h.b16 %v1287
    %v1482 = vunpack.c.l.b16 %v1288
    %v1483 = vunpack.c.h.b16 %v1288
    %v1484 = vunpack.c.l.b16 %v1289
    %v1485 = vunpack.c.h.b16 %v1289
    %v1486 = vpack.c.b16 %v1456, %v1454
    %v1487 = vpack.c.b16 %v1457, %v1455
    %v1488 = vpack.c.b16 %v1460, %v1458
    %v1489 = vpack.c.b16 %v1461, %v1459
    %v1490 = vpack.c.b16 %v1464, %v1462
    %v1491 = vpack.c.b16 %v1465, %v1463
    %v1492 = vpack.c.b16 %v1468, %v1466
    %v1493 = vpack.c.b16 %v1469, %v1467
    %v1494 = vpack.c.b16 %v1472, %v1470
    %v1495 = vpack.c.b16 %v1473, %v1471
    %v1496 = vpack.c.b16 %v1476, %v1474
    %v1497 = vpack.c.b16 %v1477, %v1475
    %v1498 = vpack.c.b16 %v1480, %v1478
    %v1499 = vpack.c.b16 %v1481, %v1479
    %v1500 = vpack.c.b16 %v1484, %v1482
    %v1501 = vpack.c.b16 %v1485, %v1483
    %1518 = vmatpush.bf16.msra.mxu0 %v1500
    %1519 = vmatpush.bf16.msra.mxu0 %v1498
    %1520 = vmatpush.bf16.msra.mxu0 %v1496
    %1521 = vmatpush.bf16.msra.mxu0 %v1494
    %1522 = vmatpush.bf16.msra.mxu0 %v1492
    %1523 = vmatpush.bf16.msra.mxu0 %v1490
    %1524 = vmatpush.bf16.msra.mxu0 %v1488
    %1525 = vmatpush.bf16.msra.mxu0 %v1486
    %1526 = vmatmul.bf16.gmra.mxu0 %v1432
    %v1527 = vpop.f32.mrf.mxu0
    %v1528 = vadd.f32 %v1434, %v1527
    %v1529 = vpop.f32.mrf.mxu0
    %1530 = vdwg.mxu0
    %1531 = vmatpush.bf16.msra.mxu0 %v1501
    %1532 = vmatpush.bf16.msra.mxu0 %v1499
    %1533 = vmatpush.bf16.msra.mxu0 %v1497
    %1534 = vmatpush.bf16.msra.mxu0 %v1495
    %1535 = vmatpush.bf16.msra.mxu0 %v1493
    %1536 = vmatpush.bf16.msra.mxu0 %v1491
    %1537 = vmatpush.bf16.msra.mxu0 %v1489
    %1538 = vmatpush.bf16.msra.mxu0 %v1487
    %1539 = vmatmul.bf16.gmra.mxu0 %v1432
    %v1540 = vpop.f32.mrf.mxu0
    %v1541 = vadd.f32 %v1435, %v1540
    %v1542 = vpop.f32.mrf.mxu0
    %1543 = vdwg.mxu0
    %1544 = vst [vmem:[%s371] sm:$0xff] %v1528
    %1545 = vst [vmem:[%s371 + $0x8] sm:$0xff] %v1541
    %v1546 = vld [vmem:[%s629] sm:$0xff]
    %v1547 = vld [vmem:[%s629 + $0x8] sm:$0xff]
    %1548 = vmatpush.bf16.msra.mxu0 %v1355
    %1549 = vmatpush.bf16.msra.mxu0 %v1353
    %1550 = vmatpush.bf16.msra.mxu0 %v1351
    %1551 = vmatpush.bf16.msra.mxu0 %v1349
    %1552 = vmatpush.bf16.msra.mxu0 %v1347
    %1553 = vmatpush.bf16.msra.mxu0 %v1345
    %1554 = vmatpush.bf16.msra.mxu0 %v1343
    %1555 = vmatpush.bf16.msra.mxu0 %v1341
    %1556 = vmatmul.bf16.gmra.mxu0 %v1432
    %v1557 = vpop.f32.mrf.mxu0
    %v1558 = vadd.f32 0.0, %v1557
    %v1559 = vpop.f32.mrf.mxu0
    %1560 = vdwg.mxu0
    %1561 = vmatpush.bf16.msra.mxu0 %v1356
    %1562 = vmatpush.bf16.msra.mxu0 %v1354
    %1563 = vmatpush.bf16.msra.mxu0 %v1352
    %1564 = vmatpush.bf16.msra.mxu0 %v1350
    %1565 = vmatpush.bf16.msra.mxu0 %v1348
    %1566 = vmatpush.bf16.msra.mxu0 %v1346
    %1567 = vmatpush.bf16.msra.mxu0 %v1344
    %1568 = vmatpush.bf16.msra.mxu0 %v1342
    %1569 = vmatmul.bf16.gmra.mxu0 %v1432
    %v1570 = vpop.f32.mrf.mxu0
    %v1571 = vadd.f32 0.0, %v1570
    %v1572 = vpop.f32.mrf.mxu0
    %1573 = vdwg.mxu0
    %v1574 = vadd.f32 %v1546, %v1558
    %v1575 = vxor.u32 %v1574, 2147483648
    %v1576 = vmul.f32 %v1575, 1.442695
    %v1577 = vpow.pop %v1576
    %v1578 = vadd.f32 %v1577, 1.0
    %v1579 = vrcp.pop %v1578
    %v1580 = vmul.f32 %v1578, %v1579
    %v1581 = vsub.f32 1.0, %v1580
    %v1582 = vmul.f32 %v1579, %v1581
    %v1583 = vadd.f32 %v1579, %v1582
    %vm1584 = vweird.f32 %v1578
    %vm1585 = vweird.f32 %v1579
    %vm1586 = vmor %vm1584, %vm1585
    %v1587 = vsel %vm1586, %v1579, %v1583
    %v1588 = vand.u32 2147483647, %v1578
    %vm1589 = vcmp.eq.f32.partialorder %v1588, 8.507059e+37
    %v1590 = vand.u32 %v1578, 2147483648
    %v1591 = vor.u32 1.1754944e-38, %v1590
    %v1592 = vsel %vm1589, %v1591, %v1587
    %v1593 = vmul.f32 1.0, %v1592
    %1594 = vrot.lane.b32.xlu0 %v1593, 64
    %v1595 = vpop.permute.xlu0 %1594
    %v1596 = vadd.f32 %v1571, %v1422
    %v1597 = vmul.f32 %v1593, %v1596
    %v1598 = vadd.f32 %v1547, %v1597
    %v1599 = vtanh.pop %v1598
    %v1600 = vsub.f32 1.0, %v1595
    %v1601 = vmul.f32 %v1600, %v1599
    %v1602 = vmul.f32 %v1595, %v1431
    %v1603 = vadd.f32 %v1601, %v1602
    %v1604 = vpack.c.bf16 %v1603, %v1603
    %1605 = vmatpush.bf16.msra.mxu0 %v1500
    %1606 = vmatpush.bf16.msra.mxu0 %v1498
    %1607 = vmatpush.bf16.msra.mxu0 %v1496
    %1608 = vmatpush.bf16.msra.mxu0 %v1494
    %1609 = vmatpush.bf16.msra.mxu0 %v1492
    %1610 = vmatpush.bf16.msra.mxu0 %v1490
    %1611 = vmatpush.bf16.msra.mxu0 %v1488
    %1612 = vmatpush.bf16.msra.mxu0 %v1486
    %1613 = vmatmul.bf16.gmra.mxu0 %v1604
    %v1614 = vpop.f32.mrf.mxu0
    %v1615 = vadd.f32 %v1434, %v1614
    %v1616 = vpop.f32.mrf.mxu0
    %1617 = vdwg.mxu0
    %1618 = vmatpush.bf16.msra.mxu0 %v1501
    %1619 = vmatpush.bf16.msra.mxu0 %v1499
    %1620 = vmatpush.bf16.msra.mxu0 %v1497
    %1621 = vmatpush.bf16.msra.mxu0 %v1495
    %1622 = vmatpush.bf16.msra.mxu0 %v1493
    %1623 = vmatpush.bf16.msra.mxu0 %v1491
    %1624 = vmatpush.bf16.msra.mxu0 %v1489
    %1625 = vmatpush.bf16.msra.mxu0 %v1487
    %1626 = vmatmul.bf16.gmra.mxu0 %v1604
    %v1627 = vpop.f32.mrf.mxu0
    %v1628 = vadd.f32 %v1435, %v1627
    %v1629 = vpop.f32.mrf.mxu0
    %1630 = vdwg.mxu0
    %1631 = vst [vmem:[%s629] sm:$0xff] %v1615
    %1632 = vst [vmem:[%s629 + $0x8] sm:$0xff] %v1628
    %v1633 = vld [vmem:[%s719] sm:$0xff]
    %v1634 = vld [vmem:[%s719 + $0x8] sm:$0xff]
    %1635 = vmatpush.bf16.msra.mxu0 %v1355
    %1636 = vmatpush.bf16.msra.mxu0 %v1353
    %1637 = vmatpush.bf16.msra.mxu0 %v1351
    %1638 = vmatpush.bf16.msra.mxu0 %v1349
    %1639 = vmatpush.bf16.msra.mxu0 %v1347
    %1640 = vmatpush.bf16.msra.mxu0 %v1345
    %1641 = vmatpush.bf16.msra.mxu0 %v1343
    %1642 = vmatpush.bf16.msra.mxu0 %v1341
    %1643 = vmatmul.bf16.gmra.mxu0 %v1604
    %v1644 = vpop.f32.mrf.mxu0
    %v1645 = vadd.f32 0.0, %v1644
    %v1646 = vpop.f32.mrf.mxu0
    %1647 = vdwg.mxu0
    %1648 = vmatpush.bf16.msra.mxu0 %v1356
    %1649 = vmatpush.bf16.msra.mxu0 %v1354
    %1650 = vmatpush.bf16.msra.mxu0 %v1352
    %1651 = vmatpush.bf16.msra.mxu0 %v1350
    %1652 = vmatpush.bf16.msra.mxu0 %v1348
    %1653 = vmatpush.bf16.msra.mxu0 %v1346
    %1654 = vmatpush.bf16.msra.mxu0 %v1344
    %1655 = vmatpush.bf16.msra.mxu0 %v1342
    %1656 = vmatmul.bf16.gmra.mxu0 %v1604
    %v1657 = vpop.f32.mrf.mxu0
    %v1658 = vadd.f32 0.0, %v1657
    %v1659 = vpop.f32.mrf.mxu0
    %1660 = vdwg.mxu0
    %v1661 = vadd.f32 %v1633, %v1645
    %v1662 = vxor.u32 %v1661, 2147483648
    %v1663 = vmul.f32 %v1662, 1.442695
    %v1664 = vpow.pop %v1663
    %v1665 = vadd.f32 %v1664, 1.0
    %v1666 = vrcp.pop %v1665
    %v1667 = vmul.f32 %v1665, %v1666
    %v1668 = vsub.f32 1.0, %v1667
    %v1669 = vmul.f32 %v1666, %v1668
    %v1670 = vadd.f32 %v1666, %v1669
    %vm1671 = vweird.f32 %v1665
    %vm1672 = vweird.f32 %v1666
    %vm1673 = vmor %vm1671, %vm1672
    %v1674 = vsel %vm1673, %v1666, %v1670
    %v1675 = vand.u32 2147483647, %v1665
    %vm1676 = vcmp.eq.f32.partialorder %v1675, 8.507059e+37
    %v1677 = vand.u32 %v1665, 2147483648
    %v1678 = vor.u32 1.1754944e-38, %v1677
    %v1679 = vsel %vm1676, %v1678, %v1674
    %v1680 = vmul.f32 1.0, %v1679
    %1681 = vrot.lane.b32.xlu0 %v1680, 64
    %v1682 = vpop.permute.xlu0 %1681
    %v1683 = vadd.f32 %v1658, %v1422
    %v1684 = vmul.f32 %v1680, %v1683
    %v1685 = vadd.f32 %v1634, %v1684
    %v1686 = vtanh.pop %v1685
    %v1687 = vsub.f32 1.0, %v1682
    %v1688 = vmul.f32 %v1687, %v1686
    %v1689 = vmul.f32 %v1682, %v1603
    %v1690 = vadd.f32 %v1688, %v1689
    %v1691 = vpack.c.bf16 %v1690, %v1690
    %1692 = vmatpush.bf16.msra.mxu0 %v1500
    %1693 = vmatpush.bf16.msra.mxu0 %v1498
    %1694 = vmatpush.bf16.msra.mxu0 %v1496
    %1695 = vmatpush.bf16.msra.mxu0 %v1494
    %1696 = vmatpush.bf16.msra.mxu0 %v1492
    %1697 = vmatpush.bf16.msra.mxu0 %v1490
    %1698 = vmatpush.bf16.msra.mxu0 %v1488
    %1699 = vmatpush.bf16.msra.mxu0 %v1486
    %1700 = vmatmul.bf16.gmra.mxu0 %v1691
    %v1701 = vpop.f32.mrf.mxu0
    %v1702 = vadd.f32 %v1434, %v1701
    %v1703 = vpop.f32.mrf.mxu0
    %1704 = vdwg.mxu0
    %1705 = vmatpush.bf16.msra.mxu0 %v1501
    %1706 = vmatpush.bf16.msra.mxu0 %v1499
    %1707 = vmatpush.bf16.msra.mxu0 %v1497
    %1708 = vmatpush.bf16.msra.mxu0 %v1495
    %1709 = vmatpush.bf16.msra.mxu0 %v1493
    %1710 = vmatpush.bf16.msra.mxu0 %v1491
    %1711 = vmatpush.bf16.msra.mxu0 %v1489
    %1712 = vmatpush.bf16.msra.mxu0 %v1487
    %1713 = vmatmul.bf16.gmra.mxu0 %v1691
    %v1714 = vpop.f32.mrf.mxu0
    %v1715 = vadd.f32 %v1435, %v1714
    %v1716 = vpop.f32.mrf.mxu0
    %1717 = vdwg.mxu0
    %1718 = vst [vmem:[%s719] sm:$0xff] %v1702
    %1719 = vst [vmem:[%s719 + $0x8] sm:$0xff] %v1715
    %v1720 = vld [vmem:[%s809] sm:$0xff]
    %v1721 = vld [vmem:[%s809 + $0x8] sm:$0xff]
    %1722 = vmatpush.bf16.msra.mxu0 %v1355
    %1723 = vmatpush.bf16.msra.mxu0 %v1353
    %1724 = vmatpush.bf16.msra.mxu0 %v1351
    %1725 = vmatpush.bf16.msra.mxu0 %v1349
    %1726 = vmatpush.bf16.msra.mxu0 %v1347
    %1727 = vmatpush.bf16.msra.mxu0 %v1345
    %1728 = vmatpush.bf16.msra.mxu0 %v1343
    %1729 = vmatpush.bf16.msra.mxu0 %v1341
    %1730 = vmatmul.bf16.gmra.mxu0 %v1691
    %v1731 = vpop.f32.mrf.mxu0
    %v1732 = vadd.f32 0.0, %v1731
    %v1733 = vpop.f32.mrf.mxu0
    %1734 = vdwg.mxu0
    %1735 = vmatpush.bf16.msra.mxu0 %v1356
    %1736 = vmatpush.bf16.msra.mxu0 %v1354
    %1737 = vmatpush.bf16.msra.mxu0 %v1352
    %1738 = vmatpush.bf16.msra.mxu0 %v1350
    %1739 = vmatpush.bf16.msra.mxu0 %v1348
    %1740 = vmatpush.bf16.msra.mxu0 %v1346
    %1741 = vmatpush.bf16.msra.mxu0 %v1344
    %1742 = vmatpush.bf16.msra.mxu0 %v1342
    %1743 = vmatmul.bf16.gmra.mxu0 %v1691
    %v1744 = vpop.f32.mrf.mxu0
    %v1745 = vadd.f32 0.0, %v1744
    %v1746 = vpop.f32.mrf.mxu0
    %1747 = vdwg.mxu0
    %v1748 = vadd.f32 %v1720, %v1732
    %v1749 = vxor.u32 %v1748, 2147483648
    %v1750 = vmul.f32 %v1749, 1.442695
    %v1751 = vpow.pop %v1750
    %v1752 = vadd.f32 %v1751, 1.0
    %v1753 = vrcp.pop %v1752
    %v1754 = vmul.f32 %v1752, %v1753
    %v1755 = vsub.f32 1.0, %v1754
    %v1756 = vmul.f32 %v1753, %v1755
    %v1757 = vadd.f32 %v1753, %v1756
    %vm1758 = vweird.f32 %v1752
    %vm1759 = vweird.f32 %v1753
    %vm1760 = vmor %vm1758, %vm1759
    %v1761 = vsel %vm1760, %v1753, %v1757
    %v1762 = vand.u32 2147483647, %v1752
    %vm1763 = vcmp.eq.f32.partialorder %v1762, 8.507059e+37
    %v1764 = vand.u32 %v1752, 2147483648
    %v1765 = vor.u32 1.1754944e-38, %v1764
    %v1766 = vsel %vm1763, %v1765, %v1761
    %v1767 = vmul.f32 1.0, %v1766
    %1768 = vrot.lane.b32.xlu0 %v1767, 64
    %v1769 = vpop.permute.xlu0 %1768
    %v1770 = vadd.f32 %v1745, %v1422
    %v1771 = vmul.f32 %v1767, %v1770
    %v1772 = vadd.f32 %v1721, %v1771
    %v1773 = vtanh.pop %v1772
    %v1774 = vsub.f32 1.0, %v1769
    %v1775 = vmul.f32 %v1774, %v1773
    %v1776 = vmul.f32 %v1769, %v1690
    %v1777 = vadd.f32 %v1775, %v1776
    %v1778 = vpack.c.bf16 %v1777, %v1777
    %1779 = vmatpush.bf16.msra.mxu0 %v1500
    %1780 = vmatpush.bf16.msra.mxu0 %v1498
    %1781 = vmatpush.bf16.msra.mxu0 %v1496
    %1782 = vmatpush.bf16.msra.mxu0 %v1494
    %1783 = vmatpush.bf16.msra.mxu0 %v1492
    %1784 = vmatpush.bf16.msra.mxu0 %v1490
    %1785 = vmatpush.bf16.msra.mxu0 %v1488
    %1786 = vmatpush.bf16.msra.mxu0 %v1486
    %1787 = vmatmul.bf16.gmra.mxu0 %v1778
    %v1788 = vpop.f32.mrf.mxu0
    %v1789 = vadd.f32 %v1434, %v1788
    %v1790 = vpop.f32.mrf.mxu0
    %1791 = vdwg.mxu0
    %1792 = vmatpush.bf16.msra.mxu0 %v1501
    %1793 = vmatpush.bf16.msra.mxu0 %v1499
    %1794 = vmatpush.bf16.msra.mxu0 %v1497
    %1795 = vmatpush.bf16.msra.mxu0 %v1495
    %1796 = vmatpush.bf16.msra.mxu0 %v1493
    %1797 = vmatpush.bf16.msra.mxu0 %v1491
    %1798 = vmatpush.bf16.msra.mxu0 %v1489
    %1799 = vmatpush.bf16.msra.mxu0 %v1487
    %1800 = vmatmul.bf16.gmra.mxu0 %v1778
    %v1801 = vpop.f32.mrf.mxu0
    %v1802 = vadd.f32 %v1435, %v1801
    %v1803 = vpop.f32.mrf.mxu0
    %1804 = vdwg.mxu0
    %1805 = vst [vmem:[%s809] sm:$0xff] %v1789
    %1806 = vst [vmem:[%s809 + $0x8] sm:$0xff] %v1802
    %v1807 = vld [vmem:[%s899] sm:$0xff]
    %v1808 = vld [vmem:[%s899 + $0x8] sm:$0xff]
    %1809 = vmatpush.bf16.msra.mxu0 %v1355
    %1810 = vmatpush.bf16.msra.mxu0 %v1353
    %1811 = vmatpush.bf16.msra.mxu0 %v1351
    %1812 = vmatpush.bf16.msra.mxu0 %v1349
    %1813 = vmatpush.bf16.msra.mxu0 %v1347
    %1814 = vmatpush.bf16.msra.mxu0 %v1345
    %1815 = vmatpush.bf16.msra.mxu0 %v1343
    %1816 = vmatpush.bf16.msra.mxu0 %v1341
    %1817 = vmatmul.bf16.gmra.mxu0 %v1778
    %v1818 = vpop.f32.mrf.mxu0
    %v1819 = vadd.f32 0.0, %v1818
    %v1820 = vpop.f32.mrf.mxu0
    %1821 = vdwg.mxu0
    %1822 = vmatpush.bf16.msra.mxu0 %v1356
    %1823 = vmatpush.bf16.msra.mxu0 %v1354
    %1824 = vmatpush.bf16.msra.mxu0 %v1352
    %1825 = vmatpush.bf16.msra.mxu0 %v1350
    %1826 = vmatpush.bf16.msra.mxu0 %v1348
    %1827 = vmatpush.bf16.msra.mxu0 %v1346
    %1828 = vmatpush.bf16.msra.mxu0 %v1344
    %1829 = vmatpush.bf16.msra.mxu0 %v1342
    %1830 = vmatmul.bf16.gmra.mxu0 %v1778
    %v1831 = vpop.f32.mrf.mxu0
    %v1832 = vadd.f32 0.0, %v1831
    %v1833 = vpop.f32.mrf.mxu0
    %1834 = vdwg.mxu0
    %v1835 = vadd.f32 %v1807, %v1819
    %v1836 = vxor.u32 %v1835, 2147483648
    %v1837 = vmul.f32 %v1836, 1.442695
    %v1838 = vpow.pop %v1837
    %v1839 = vadd.f32 %v1838, 1.0
    %v1840 = vrcp.pop %v1839
    %v1841 = vmul.f32 %v1839, %v1840
    %v1842 = vsub.f32 1.0, %v1841
    %v1843 = vmul.f32 %v1840, %v1842
    %v1844 = vadd.f32 %v1840, %v1843
    %vm1845 = vweird.f32 %v1839
    %vm1846 = vweird.f32 %v1840
    %vm1847 = vmor %vm1845, %vm1846
    %v1848 = vsel %vm1847, %v1840, %v1844
    %v1849 = vand.u32 2147483647, %v1839
    %vm1850 = vcmp.eq.f32.partialorder %v1849, 8.507059e+37
    %v1851 = vand.u32 %v1839, 2147483648
    %v1852 = vor.u32 1.1754944e-38, %v1851
    %v1853 = vsel %vm1850, %v1852, %v1848
    %v1854 = vmul.f32 1.0, %v1853
    %1855 = vrot.lane.b32.xlu0 %v1854, 64
    %v1856 = vpop.permute.xlu0 %1855
    %v1857 = vadd.f32 %v1832, %v1422
    %v1858 = vmul.f32 %v1854, %v1857
    %v1859 = vadd.f32 %v1808, %v1858
    %v1860 = vtanh.pop %v1859
    %v1861 = vsub.f32 1.0, %v1856
    %v1862 = vmul.f32 %v1861, %v1860
    %v1863 = vmul.f32 %v1856, %v1777
    %v1864 = vadd.f32 %v1862, %v1863
    %v1865 = vpack.c.bf16 %v1864, %v1864
    %1866 = vmatpush.bf16.msra.mxu0 %v1500
    %1867 = vmatpush.bf16.msra.mxu0 %v1498
    %1868 = vmatpush.bf16.msra.mxu0 %v1496
    %1869 = vmatpush.bf16.msra.mxu0 %v1494
    %1870 = vmatpush.bf16.msra.mxu0 %v1492
    %1871 = vmatpush.bf16.msra.mxu0 %v1490
    %1872 = vmatpush.bf16.msra.mxu0 %v1488
    %1873 = vmatpush.bf16.msra.mxu0 %v1486
    %1874 = vmatmul.bf16.gmra.mxu0 %v1865
    %v1875 = vpop.f32.mrf.mxu0
    %v1876 = vadd.f32 %v1434, %v1875
    %v1877 = vpop.f32.mrf.mxu0
    %1878 = vdwg.mxu0
    %1879 = vmatpush.bf16.msra.mxu0 %v1501
    %1880 = vmatpush.bf16.msra.mxu0 %v1499
    %1881 = vmatpush.bf16.msra.mxu0 %v1497
    %1882 = vmatpush.bf16.msra.mxu0 %v1495
    %1883 = vmatpush.bf16.msra.mxu0 %v1493
    %1884 = vmatpush.bf16.msra.mxu0 %v1491
    %1885 = vmatpush.bf16.msra.mxu0 %v1489
    %1886 = vmatpush.bf16.msra.mxu0 %v1487
    %1887 = vmatmul.bf16.gmra.mxu0 %v1865
    %v1888 = vpop.f32.mrf.mxu0
    %v1889 = vadd.f32 %v1435, %v1888
    %v1890 = vpop.f32.mrf.mxu0
    %1891 = vdwg.mxu0
    %1892 = vst [vmem:[%s899] sm:$0xff] %v1876
    %1893 = vst [vmem:[%s899 + $0x8] sm:$0xff] %v1889
    %v1894 = vld [vmem:[%s989] sm:$0xff]
    %v1895 = vld [vmem:[%s989 + $0x8] sm:$0xff]
    %1896 = vmatpush.bf16.msra.mxu0 %v1355
    %1897 = vmatpush.bf16.msra.mxu0 %v1353
    %1898 = vmatpush.bf16.msra.mxu0 %v1351
    %1899 = vmatpush.bf16.msra.mxu0 %v1349
    %1900 = vmatpush.bf16.msra.mxu0 %v1347
    %1901 = vmatpush.bf16.msra.mxu0 %v1345
    %1902 = vmatpush.bf16.msra.mxu0 %v1343
    %1903 = vmatpush.bf16.msra.mxu0 %v1341
    %1904 = vmatmul.bf16.gmra.mxu0 %v1865
    %v1905 = vpop.f32.mrf.mxu0
    %v1906 = vadd.f32 0.0, %v1905
    %v1907 = vpop.f32.mrf.mxu0
    %1908 = vdwg.mxu0
    %1909 = vmatpush.bf16.msra.mxu0 %v1356
    %1910 = vmatpush.bf16.msra.mxu0 %v1354
    %1911 = vmatpush.bf16.msra.mxu0 %v1352
    %1912 = vmatpush.bf16.msra.mxu0 %v1350
    %1913 = vmatpush.bf16.msra.mxu0 %v1348
    %1914 = vmatpush.bf16.msra.mxu0 %v1346
    %1915 = vmatpush.bf16.msra.mxu0 %v1344
    %1916 = vmatpush.bf16.msra.mxu0 %v1342
    %1917 = vmatmul.bf16.gmra.mxu0 %v1865
    %v1918 = vpop.f32.mrf.mxu0
    %v1919 = vadd.f32 0.0, %v1918
    %v1920 = vpop.f32.mrf.mxu0
    %1921 = vdwg.mxu0
    %v1922 = vadd.f32 %v1894, %v1906
    %v1923 = vxor.u32 %v1922, 2147483648
    %v1924 = vmul.f32 %v1923, 1.442695
    %v1925 = vpow.pop %v1924
    %v1926 = vadd.f32 %v1925, 1.0
    %v1927 = vrcp.pop %v1926
    %v1928 = vmul.f32 %v1926, %v1927
    %v1929 = vsub.f32 1.0, %v1928
    %v1930 = vmul.f32 %v1927, %v1929
    %v1931 = vadd.f32 %v1927, %v1930
    %vm1932 = vweird.f32 %v1926
    %vm1933 = vweird.f32 %v1927
    %vm1934 = vmor %vm1932, %vm1933
    %v1935 = vsel %vm1934, %v1927, %v1931
    %v1936 = vand.u32 2147483647, %v1926
    %vm1937 = vcmp.eq.f32.partialorder %v1936, 8.507059e+37
    %v1938 = vand.u32 %v1926, 2147483648
    %v1939 = vor.u32 1.1754944e-38, %v1938
    %v1940 = vsel %vm1937, %v1939, %v1935
    %v1941 = vmul.f32 1.0, %v1940
    %1942 = vrot.lane.b32.xlu0 %v1941, 64
    %v1943 = vpop.permute.xlu0 %1942
    %v1944 = vadd.f32 %v1919, %v1422
    %v1945 = vmul.f32 %v1941, %v1944
    %v1946 = vadd.f32 %v1895, %v1945
    %v1947 = vtanh.pop %v1946
    %v1948 = vsub.f32 1.0, %v1943
    %v1949 = vmul.f32 %v1948, %v1947
    %v1950 = vmul.f32 %v1943, %v1864
    %v1951 = vadd.f32 %v1949, %v1950
    %v1952 = vpack.c.bf16 %v1951, %v1951
    %1953 = vmatpush.bf16.msra.mxu0 %v1500
    %1954 = vmatpush.bf16.msra.mxu0 %v1498
    %1955 = vmatpush.bf16.msra.mxu0 %v1496
    %1956 = vmatpush.bf16.msra.mxu0 %v1494
    %1957 = vmatpush.bf16.msra.mxu0 %v1492
    %1958 = vmatpush.bf16.msra.mxu0 %v1490
    %1959 = vmatpush.bf16.msra.mxu0 %v1488
    %1960 = vmatpush.bf16.msra.mxu0 %v1486
    %1961 = vmatmul.bf16.gmra.mxu0 %v1952
    %v1962 = vpop.f32.mrf.mxu0
    %v1963 = vadd.f32 %v1434, %v1962
    %v1964 = vpop.f32.mrf.mxu0
    %1965 = vdwg.mxu0
    %1966 = vmatpush.bf16.msra.mxu0 %v1501
    %1967 = vmatpush.bf16.msra.mxu0 %v1499
    %1968 = vmatpush.bf16.msra.mxu0 %v1497
    %1969 = vmatpush.bf16.msra.mxu0 %v1495
    %1970 = vmatpush.bf16.msra.mxu0 %v1493
    %1971 = vmatpush.bf16.msra.mxu0 %v1491
    %1972 = vmatpush.bf16.msra.mxu0 %v1489
    %1973 = vmatpush.bf16.msra.mxu0 %v1487
    %1974 = vmatmul.bf16.gmra.mxu0 %v1952
    %v1975 = vpop.f32.mrf.mxu0
    %v1976 = vadd.f32 %v1435, %v1975
    %v1977 = vpop.f32.mrf.mxu0
    %1978 = vdwg.mxu0
    %1979 = vst [vmem:[%s989] sm:$0xff] %v1963
    %1980 = vst [vmem:[%s989 + $0x8] sm:$0xff] %v1976
    %v1981 = vld [vmem:[%s1079] sm:$0xff]
    %v1982 = vld [vmem:[%s1079 + $0x8] sm:$0xff]
    %1983 = vmatpush.bf16.msra.mxu0 %v1355
    %1984 = vmatpush.bf16.msra.mxu0 %v1353
    %1985 = vmatpush.bf16.msra.mxu0 %v1351
    %1986 = vmatpush.bf16.msra.mxu0 %v1349
    %1987 = vmatpush.bf16.msra.mxu0 %v1347
    %1988 = vmatpush.bf16.msra.mxu0 %v1345
    %1989 = vmatpush.bf16.msra.mxu0 %v1343
    %1990 = vmatpush.bf16.msra.mxu0 %v1341
    %1991 = vmatmul.bf16.gmra.mxu0 %v1952
    %v1992 = vpop.f32.mrf.mxu0
    %v1993 = vadd.f32 0.0, %v1992
    %v1994 = vpop.f32.mrf.mxu0
    %1995 = vdwg.mxu0
    %1996 = vmatpush.bf16.msra.mxu0 %v1356
    %1997 = vmatpush.bf16.msra.mxu0 %v1354
    %1998 = vmatpush.bf16.msra.mxu0 %v1352
    %1999 = vmatpush.bf16.msra.mxu0 %v1350
    %2000 = vmatpush.bf16.msra.mxu0 %v1348
    %2001 = vmatpush.bf16.msra.mxu0 %v1346
    %2002 = vmatpush.bf16.msra.mxu0 %v1344
    %2003 = vmatpush.bf16.msra.mxu0 %v1342
    %2004 = vmatmul.bf16.gmra.mxu0 %v1952
    %v2005 = vpop.f32.mrf.mxu0
    %v2006 = vadd.f32 0.0, %v2005
    %v2007 = vpop.f32.mrf.mxu0
    %2008 = vdwg.mxu0
    %v2009 = vadd.f32 %v1981, %v1993
    %v2010 = vxor.u32 %v2009, 2147483648
    %v2011 = vmul.f32 %v2010, 1.442695
    %v2012 = vpow.pop %v2011
    %v2013 = vadd.f32 %v2012, 1.0
    %v2014 = vrcp.pop %v2013
    %v2015 = vmul.f32 %v2013, %v2014
    %v2016 = vsub.f32 1.0, %v2015
    %v2017 = vmul.f32 %v2014, %v2016
    %v2018 = vadd.f32 %v2014, %v2017
    %vm2019 = vweird.f32 %v2013
    %vm2020 = vweird.f32 %v2014
    %vm2021 = vmor %vm2019, %vm2020
    %v2022 = vsel %vm2021, %v2014, %v2018
    %v2023 = vand.u32 2147483647, %v2013
    %vm2024 = vcmp.eq.f32.partialorder %v2023, 8.507059e+37
    %v2025 = vand.u32 %v2013, 2147483648
    %v2026 = vor.u32 1.1754944e-38, %v2025
    %v2027 = vsel %vm2024, %v2026, %v2022
    %v2028 = vmul.f32 1.0, %v2027
    %2029 = vrot.lane.b32.xlu0 %v2028, 64
    %v2030 = vpop.permute.xlu0 %2029
    %v2031 = vadd.f32 %v2006, %v1422
    %v2032 = vmul.f32 %v2028, %v2031
    %v2033 = vadd.f32 %v1982, %v2032
    %v2034 = vtanh.pop %v2033
    %v2035 = vsub.f32 1.0, %v2030
    %v2036 = vmul.f32 %v2035, %v2034
    %v2037 = vmul.f32 %v2030, %v1951
    %v2038 = vadd.f32 %v2036, %v2037
    %v2039 = vpack.c.bf16 %v2038, %v2038
    %2040 = vmatpush.bf16.msra.mxu0 %v1500
    %2041 = vmatpush.bf16.msra.mxu0 %v1498
    %2042 = vmatpush.bf16.msra.mxu0 %v1496
    %2043 = vmatpush.bf16.msra.mxu0 %v1494
    %2044 = vmatpush.bf16.msra.mxu0 %v1492
    %2045 = vmatpush.bf16.msra.mxu0 %v1490
    %2046 = vmatpush.bf16.msra.mxu0 %v1488
    %2047 = vmatpush.bf16.msra.mxu0 %v1486
    %2048 = vmatmul.bf16.gmra.mxu0 %v2039
    %v2049 = vpop.f32.mrf.mxu0
    %v2050 = vadd.f32 %v1434, %v2049
    %v2051 = vpop.f32.mrf.mxu0
    %2052 = vdwg.mxu0
    %2053 = vmatpush.bf16.msra.mxu0 %v1501
    %2054 = vmatpush.bf16.msra.mxu0 %v1499
    %2055 = vmatpush.bf16.msra.mxu0 %v1497
    %2056 = vmatpush.bf16.msra.mxu0 %v1495
    %2057 = vmatpush.bf16.msra.mxu0 %v1493
    %2058 = vmatpush.bf16.msra.mxu0 %v1491
    %2059 = vmatpush.bf16.msra.mxu0 %v1489
    %2060 = vmatpush.bf16.msra.mxu0 %v1487
    %2061 = vmatmul.bf16.gmra.mxu0 %v2039
    %v2062 = vpop.f32.mrf.mxu0
    %v2063 = vadd.f32 %v1435, %v2062
    %v2064 = vpop.f32.mrf.mxu0
    %2065 = vdwg.mxu0
    %2066 = vst [vmem:[%s1079] sm:$0xff] %v2050
    %2067 = vst [vmem:[%s1079 + $0x8] sm:$0xff] %v2063
    %v2068 = vld [vmem:[%s1169] sm:$0xff]
    %v2069 = vld [vmem:[%s1169 + $0x8] sm:$0xff]
    %2070 = vmatpush.bf16.msra.mxu0 %v1355
    %2071 = vmatpush.bf16.msra.mxu0 %v1353
    %2072 = vmatpush.bf16.msra.mxu0 %v1351
    %2073 = vmatpush.bf16.msra.mxu0 %v1349
    %2074 = vmatpush.bf16.msra.mxu0 %v1347
    %2075 = vmatpush.bf16.msra.mxu0 %v1345
    %2076 = vmatpush.bf16.msra.mxu0 %v1343
    %2077 = vmatpush.bf16.msra.mxu0 %v1341
    %2078 = vmatmul.bf16.gmra.mxu0 %v2039
    %v2079 = vpop.f32.mrf.mxu0
    %v2080 = vadd.f32 0.0, %v2079
    %v2081 = vpop.f32.mrf.mxu0
    %2082 = vdwg.mxu0
    %2083 = vmatpush.bf16.msra.mxu0 %v1356
    %2084 = vmatpush.bf16.msra.mxu0 %v1354
    %2085 = vmatpush.bf16.msra.mxu0 %v1352
    %2086 = vmatpush.bf16.msra.mxu0 %v1350
    %2087 = vmatpush.bf16.msra.mxu0 %v1348
    %2088 = vmatpush.bf16.msra.mxu0 %v1346
    %2089 = vmatpush.bf16.msra.mxu0 %v1344
    %2090 = vmatpush.bf16.msra.mxu0 %v1342
    %2091 = vmatmul.bf16.gmra.mxu0 %v2039
    %v2092 = vpop.f32.mrf.mxu0
    %v2093 = vadd.f32 0.0, %v2092
    %v2094 = vpop.f32.mrf.mxu0
    %2095 = vdwg.mxu0
    %v2096 = vadd.f32 %v2068, %v2080
    %v2097 = vxor.u32 %v2096, 2147483648
    %v2098 = vmul.f32 %v2097, 1.442695
    %v2099 = vpow.pop %v2098
    %v2100 = vadd.f32 %v2099, 1.0
    %v2101 = vrcp.pop %v2100
    %v2102 = vmul.f32 %v2100, %v2101
    %v2103 = vsub.f32 1.0, %v2102
    %v2104 = vmul.f32 %v2101, %v2103
    %v2105 = vadd.f32 %v2101, %v2104
    %vm2106 = vweird.f32 %v2100
    %vm2107 = vweird.f32 %v2101
    %vm2108 = vmor %vm2106, %vm2107
    %v2109 = vsel %vm2108, %v2101, %v2105
    %v2110 = vand.u32 2147483647, %v2100
    %vm2111 = vcmp.eq.f32.partialorder %v2110, 8.507059e+37
    %v2112 = vand.u32 %v2100, 2147483648
    %v2113 = vor.u32 1.1754944e-38, %v2112
    %v2114 = vsel %vm2111, %v2113, %v2109
    %v2115 = vmul.f32 1.0, %v2114
    %2116 = vrot.lane.b32.xlu0 %v2115, 64
    %v2117 = vpop.permute.xlu0 %2116
    %v2118 = vadd.f32 %v2093, %v1422
    %v2119 = vmul.f32 %v2115, %v2118
    %v2120 = vadd.f32 %v2069, %v2119
    %v2121 = vtanh.pop %v2120
    %v2122 = vsub.f32 1.0, %v2117
    %v2123 = vmul.f32 %v2122, %v2121
    %v2124 = vmul.f32 %v2117, %v2038
    %v2125 = vadd.f32 %v2123, %v2124
    %v2126 = vpack.c.bf16 %v2125, %v2125
    %2127 = vmatpush.bf16.msra.mxu0 %v1500
    %2128 = vmatpush.bf16.msra.mxu0 %v1498
    %2129 = vmatpush.bf16.msra.mxu0 %v1496
    %2130 = vmatpush.bf16.msra.mxu0 %v1494
    %2131 = vmatpush.bf16.msra.mxu0 %v1492
    %2132 = vmatpush.bf16.msra.mxu0 %v1490
    %2133 = vmatpush.bf16.msra.mxu0 %v1488
    %2134 = vmatpush.bf16.msra.mxu0 %v1486
    %2135 = vmatmul.bf16.gmra.mxu0 %v2126
    %v2136 = vpop.f32.mrf.mxu0
    %v2137 = vadd.f32 %v1434, %v2136
    %v2138 = vpop.f32.mrf.mxu0
    %2139 = vdwg.mxu0
    %2140 = vmatpush.bf16.msra.mxu0 %v1501
    %2141 = vmatpush.bf16.msra.mxu0 %v1499
    %2142 = vmatpush.bf16.msra.mxu0 %v1497
    %2143 = vmatpush.bf16.msra.mxu0 %v1495
    %2144 = vmatpush.bf16.msra.mxu0 %v1493
    %2145 = vmatpush.bf16.msra.mxu0 %v1491
    %2146 = vmatpush.bf16.msra.mxu0 %v1489
    %2147 = vmatpush.bf16.msra.mxu0 %v1487
    %2148 = vmatmul.bf16.gmra.mxu0 %v2126
    %v2149 = vpop.f32.mrf.mxu0
    %v2150 = vadd.f32 %v1435, %v2149
    %v2151 = vpop.f32.mrf.mxu0
    %2152 = vdwg.mxu0
    %2153 = vst [vmem:[%s1169] sm:$0xff] %v2137
    %2154 = vst [vmem:[%s1169 + $0x8] sm:$0xff] %v2150
    %v2155 = vld [vmem:[#allocation11] sm:$0xff]
    %v2156 = vld [vmem:[#allocation11 + $0x8] sm:$0xff]
    %v2157 = vld [vmem:[#allocation11 + $0x10] sm:$0xff]
    %v2158 = vld [vmem:[#allocation11 + $0x18] sm:$0xff]
    %v2159 = vld [vmem:[#allocation11 + $0x20] sm:$0xff]
    %v2160 = vld [vmem:[#allocation11 + $0x28] sm:$0xff]
    %v2161 = vld [vmem:[#allocation11 + $0x30] sm:$0xff]
    %v2162 = vld [vmem:[#allocation11 + $0x38] sm:$0xff]
    %v2163 = vld [vmem:[#allocation11 + $0x40] sm:$0xff]
    %v2164 = vld [vmem:[#allocation11 + $0x48] sm:$0xff]
    %v2165 = vld [vmem:[#allocation11 + $0x50] sm:$0xff]
    %v2166 = vld [vmem:[#allocation11 + $0x58] sm:$0xff]
    %v2167 = vld [vmem:[#allocation11 + $0x60] sm:$0xff]
    %v2168 = vld [vmem:[#allocation11 + $0x68] sm:$0xff]
    %v2169 = vld [vmem:[#allocation11 + $0x70] sm:$0xff]
    %v2170 = vld [vmem:[#allocation11 + $0x78] sm:$0xff]
    %v2171 = vld [vmem:[%s12] sm:$0x1]
    %v2172 = vld [vmem:[%s371] sm:$0xff]
    %v2173 = vld [vmem:[%s371 + $0x8] sm:$0xff]
    %v2190 = vunpack.c.l.b16 %v2155
    %v2191 = vunpack.c.h.b16 %v2155
    %v2192 = vunpack.c.l.b16 %v2156
    %v2193 = vunpack.c.h.b16 %v2156
    %v2194 = vunpack.c.l.b16 %v2157
    %v2195 = vunpack.c.h.b16 %v2157
    %v2196 = vunpack.c.l.b16 %v2158
    %v2197 = vunpack.c.h.b16 %v2158
    %v2198 = vunpack.c.l.b16 %v2159
    %v2199 = vunpack.c.h.b16 %v2159
    %v2200 = vunpack.c.l.b16 %v2160
    %v2201 = vunpack.c.h.b16 %v2160
    %v2202 = vunpack.c.l.b16 %v2161
    %v2203 = vunpack.c.h.b16 %v2161
    %v2204 = vunpack.c.l.b16 %v2162
    %v2205 = vunpack.c.h.b16 %v2162
    %v2206 = vunpack.c.l.b16 %v2163
    %v2207 = vunpack.c.h.b16 %v2163
    %v2208 = vunpack.c.l.b16 %v2164
    %v2209 = vunpack.c.h.b16 %v2164
    %v2210 = vunpack.c.l.b16 %v2165
    %v2211 = vunpack.c.h.b16 %v2165
    %v2212 = vunpack.c.l.b16 %v2166
    %v2213 = vunpack.c.h.b16 %v2166
    %v2214 = vunpack.c.l.b16 %v2167
    %v2215 = vunpack.c.h.b16 %v2167
    %v2216 = vunpack.c.l.b16 %v2168
    %v2217 = vunpack.c.h.b16 %v2168
    %v2218 = vunpack.c.l.b16 %v2169
    %v2219 = vunpack.c.h.b16 %v2169
    %v2220 = vunpack.c.l.b16 %v2170
    %v2221 = vunpack.c.h.b16 %v2170
    %v2222 = vpack.c.b16 %v2192, %v2190
    %v2223 = vpack.c.b16 %v2193, %v2191
    %v2224 = vpack.c.b16 %v2196, %v2194
    %v2225 = vpack.c.b16 %v2197, %v2195
    %v2226 = vpack.c.b16 %v2200, %v2198
    %v2227 = vpack.c.b16 %v2201, %v2199
    %v2228 = vpack.c.b16 %v2204, %v2202
    %v2229 = vpack.c.b16 %v2205, %v2203
    %v2230 = vpack.c.b16 %v2208, %v2206
    %v2231 = vpack.c.b16 %v2209, %v2207
    %v2232 = vpack.c.b16 %v2212, %v2210
    %v2233 = vpack.c.b16 %v2213, %v2211
    %v2234 = vpack.c.b16 %v2216, %v2214
    %v2235 = vpack.c.b16 %v2217, %v2215
    %v2236 = vpack.c.b16 %v2220, %v2218
    %v2237 = vpack.c.b16 %v2221, %v2219
    %2254 = vmatpush.bf16.msra.mxu0 %v2236
    %2255 = vmatpush.bf16.msra.mxu0 %v2234
    %2256 = vmatpush.bf16.msra.mxu0 %v2232
    %2257 = vmatpush.bf16.msra.mxu0 %v2230
    %2258 = vmatpush.bf16.msra.mxu0 %v2228
    %2259 = vmatpush.bf16.msra.mxu0 %v2226
    %2260 = vmatpush.bf16.msra.mxu0 %v2224
    %2261 = vmatpush.bf16.msra.mxu0 %v2222
    %2262 = vmatmul.bf16.gmra.mxu0 0
    %v2263 = vpop.f32.mrf.mxu0
    %v2264 = vadd.f32 0.0, %v2263
    %v2265 = vpop.f32.mrf.mxu0
    %2266 = vdwg.mxu0
    %2267 = vmatpush.bf16.msra.mxu0 %v2237
    %2268 = vmatpush.bf16.msra.mxu0 %v2235
    %2269 = vmatpush.bf16.msra.mxu0 %v2233
    %2270 = vmatpush.bf16.msra.mxu0 %v2231
    %2271 = vmatpush.bf16.msra.mxu0 %v2229
    %2272 = vmatpush.bf16.msra.mxu0 %v2227
    %2273 = vmatpush.bf16.msra.mxu0 %v2225
    %2274 = vmatpush.bf16.msra.mxu0 %v2223
    %2275 = vmatmul.bf16.gmra.mxu0 0
    %v2276 = vpop.f32.mrf.mxu0
    %v2277 = vadd.f32 0.0, %v2276
    %v2278 = vpop.f32.mrf.mxu0
    %2279 = vdwg.mxu0
    %v2280 = vadd.f32 %v2172, %v2264
    %v2281 = vxor.u32 %v2280, 2147483648
    %v2282 = vmul.f32 %v2281, 1.442695
    %v2283 = vpow.pop %v2282
    %v2284 = vadd.f32 %v2283, 1.0
    %v2285 = vrcp.pop %v2284
    %v2286 = vmul.f32 %v2284, %v2285
    %v2287 = vsub.f32 1.0, %v2286
    %v2288 = vmul.f32 %v2285, %v2287
    %v2289 = vadd.f32 %v2285, %v2288
    %vm2290 = vweird.f32 %v2284
    %vm2291 = vweird.f32 %v2285
    %vm2292 = vmor %vm2290, %vm2291
    %v2293 = vsel %vm2292, %v2285, %v2289
    %v2294 = vand.u32 2147483647, %v2284
    %vm2295 = vcmp.eq.f32.partialorder %v2294, 8.507059e+37
    %v2296 = vand.u32 %v2284, 2147483648
    %v2297 = vor.u32 1.1754944e-38, %v2296
    %v2298 = vsel %vm2295, %v2297, %v2293
    %v2299 = vmul.f32 1.0, %v2298
    %2300 = vrot.lane.b32.xlu0 %v2299, 64
    %v2301 = vpop.permute.xlu0 %2300
    %v2303 = vperm.slane %v2171, 0
    %v2305 = vadd.f32 %v2277, %v2303
    %v2306 = vmul.f32 %v2299, %v2305
    %v2307 = vadd.f32 %v2173, %v2306
    %v2308 = vtanh.pop %v2307
    %v2309 = vsub.f32 1.0, %v2301
    %v2310 = vmul.f32 %v2309, %v2308
    %v2311 = vmul.f32 %v2301, 0.0
    %v2312 = vadd.f32 %v2310, %v2311
    %v2313 = vld [vmem:[%s629] sm:$0xff]
    %v2314 = vld [vmem:[%s629 + $0x8] sm:$0xff]
    %v2315 = vpack.c.bf16 %v2312, %v2312
    %2316 = vmatpush.bf16.msra.mxu0 %v2236
    %2317 = vmatpush.bf16.msra.mxu0 %v2234
    %2318 = vmatpush.bf16.msra.mxu0 %v2232
    %2319 = vmatpush.bf16.msra.mxu0 %v2230
    %2320 = vmatpush.bf16.msra.mxu0 %v2228
    %2321 = vmatpush.bf16.msra.mxu0 %v2226
    %2322 = vmatpush.bf16.msra.mxu0 %v2224
    %2323 = vmatpush.bf16.msra.mxu0 %v2222
    %2324 = vmatmul.bf16.gmra.mxu0 %v2315
    %v2325 = vpop.f32.mrf.mxu0
    %v2326 = vadd.f32 0.0, %v2325
    %v2327 = vpop.f32.mrf.mxu0
    %2328 = vdwg.mxu0
    %2329 = vmatpush.bf16.msra.mxu0 %v2237
    %2330 = vmatpush.bf16.msra.mxu0 %v2235
    %2331 = vmatpush.bf16.msra.mxu0 %v2233
    %2332 = vmatpush.bf16.msra.mxu0 %v2231
    %2333 = vmatpush.bf16.msra.mxu0 %v2229
    %2334 = vmatpush.bf16.msra.mxu0 %v2227
    %2335 = vmatpush.bf16.msra.mxu0 %v2225
    %2336 = vmatpush.bf16.msra.mxu0 %v2223
    %2337 = vmatmul.bf16.gmra.mxu0 %v2315
    %v2338 = vpop.f32.mrf.mxu0
    %v2339 = vadd.f32 0.0, %v2338
    %v2340 = vpop.f32.mrf.mxu0
    %2341 = vdwg.mxu0
    %v2342 = vadd.f32 %v2313, %v2326
    %v2343 = vxor.u32 %v2342, 2147483648
    %v2344 = vmul.f32 %v2343, 1.442695
    %v2345 = vpow.pop %v2344
    %v2346 = vadd.f32 %v2345, 1.0
    %v2347 = vrcp.pop %v2346
    %v2348 = vmul.f32 %v2346, %v2347
    %v2349 = vsub.f32 1.0, %v2348
    %v2350 = vmul.f32 %v2347, %v2349
    %v2351 = vadd.f32 %v2347, %v2350
    %vm2352 = vweird.f32 %v2346
    %vm2353 = vweird.f32 %v2347
    %vm2354 = vmor %vm2352, %vm2353
    %v2355 = vsel %vm2354, %v2347, %v2351
    %v2356 = vand.u32 2147483647, %v2346
    %vm2357 = vcmp.eq.f32.partialorder %v2356, 8.507059e+37
    %v2358 = vand.u32 %v2346, 2147483648
    %v2359 = vor.u32 1.1754944e-38, %v2358
    %v2360 = vsel %vm2357, %v2359, %v2355
    %v2361 = vmul.f32 1.0, %v2360
    %2362 = vrot.lane.b32.xlu0 %v2361, 64
    %v2363 = vpop.permute.xlu0 %2362
    %v2364 = vadd.f32 %v2339, %v2303
    %v2365 = vmul.f32 %v2361, %v2364
    %v2366 = vadd.f32 %v2314, %v2365
    %v2367 = vtanh.pop %v2366
    %v2368 = vsub.f32 1.0, %v2363
    %v2369 = vmul.f32 %v2368, %v2367
    %v2370 = vmul.f32 %v2363, %v2312
    %v2371 = vadd.f32 %v2369, %v2370
    %v2372 = vld [vmem:[%s719] sm:$0xff]
    %v2373 = vld [vmem:[%s719 + $0x8] sm:$0xff]
    %v2374 = vpack.c.bf16 %v2371, %v2371
    %2375 = vmatpush.bf16.msra.mxu0 %v2236
    %2376 = vmatpush.bf16.msra.mxu0 %v2234
    %2377 = vmatpush.bf16.msra.mxu0 %v2232
    %2378 = vmatpush.bf16.msra.mxu0 %v2230
    %2379 = vmatpush.bf16.msra.mxu0 %v2228
    %2380 = vmatpush.bf16.msra.mxu0 %v2226
    %2381 = vmatpush.bf16.msra.mxu0 %v2224
    %2382 = vmatpush.bf16.msra.mxu0 %v2222
    %2383 = vmatmul.bf16.gmra.mxu0 %v2374
    %v2384 = vpop.f32.mrf.mxu0
    %v2385 = vadd.f32 0.0, %v2384
    %v2386 = vpop.f32.mrf.mxu0
    %2387 = vdwg.mxu0
    %2388 = vmatpush.bf16.msra.mxu0 %v2237
    %2389 = vmatpush.bf16.msra.mxu0 %v2235
    %2390 = vmatpush.bf16.msra.mxu0 %v2233
    %2391 = vmatpush.bf16.msra.mxu0 %v2231
    %2392 = vmatpush.bf16.msra.mxu0 %v2229
    %2393 = vmatpush.bf16.msra.mxu0 %v2227
    %2394 = vmatpush.bf16.msra.mxu0 %v2225
    %2395 = vmatpush.bf16.msra.mxu0 %v2223
    %2396 = vmatmul.bf16.gmra.mxu0 %v2374
    %v2397 = vpop.f32.mrf.mxu0
    %v2398 = vadd.f32 0.0, %v2397
    %v2399 = vpop.f32.mrf.mxu0
    %2400 = vdwg.mxu0
    %v2401 = vadd.f32 %v2372, %v2385
    %v2402 = vxor.u32 %v2401, 2147483648
    %v2403 = vmul.f32 %v2402, 1.442695
    %v2404 = vpow.pop %v2403
    %v2405 = vadd.f32 %v2404, 1.0
    %v2406 = vrcp.pop %v2405
    %v2407 = vmul.f32 %v2405, %v2406
    %v2408 = vsub.f32 1.0, %v2407
    %v2409 = vmul.f32 %v2406, %v2408
    %v2410 = vadd.f32 %v2406, %v2409
    %vm2411 = vweird.f32 %v2405
    %vm2412 = vweird.f32 %v2406
    %vm2413 = vmor %vm2411, %vm2412
    %v2414 = vsel %vm2413, %v2406, %v2410
    %v2415 = vand.u32 2147483647, %v2405
    %vm2416 = vcmp.eq.f32.partialorder %v2415, 8.507059e+37
    %v2417 = vand.u32 %v2405, 2147483648
    %v2418 = vor.u32 1.1754944e-38, %v2417
    %v2419 = vsel %vm2416, %v2418, %v2414
    %v2420 = vmul.f32 1.0, %v2419
    %2421 = vrot.lane.b32.xlu0 %v2420, 64
    %v2422 = vpop.permute.xlu0 %2421
    %v2423 = vadd.f32 %v2398, %v2303
    %v2424 = vmul.f32 %v2420, %v2423
    %v2425 = vadd.f32 %v2373, %v2424
    %v2426 = vtanh.pop %v2425
    %v2427 = vsub.f32 1.0, %v2422
    %v2428 = vmul.f32 %v2427, %v2426
    %v2429 = vmul.f32 %v2422, %v2371
    %v2430 = vadd.f32 %v2428, %v2429
    %v2431 = vld [vmem:[%s809] sm:$0xff]
    %v2432 = vld [vmem:[%s809 + $0x8] sm:$0xff]
    %v2433 = vpack.c.bf16 %v2430, %v2430
    %2434 = vmatpush.bf16.msra.mxu0 %v2236
    %2435 = vmatpush.bf16.msra.mxu0 %v2234
    %2436 = vmatpush.bf16.msra.mxu0 %v2232
    %2437 = vmatpush.bf16.msra.mxu0 %v2230
    %2438 = vmatpush.bf16.msra.mxu0 %v2228
    %2439 = vmatpush.bf16.msra.mxu0 %v2226
    %2440 = vmatpush.bf16.msra.mxu0 %v2224
    %2441 = vmatpush.bf16.msra.mxu0 %v2222
    %2442 = vmatmul.bf16.gmra.mxu0 %v2433
    %v2443 = vpop.f32.mrf.mxu0
    %v2444 = vadd.f32 0.0, %v2443
    %v2445 = vpop.f32.mrf.mxu0
    %2446 = vdwg.mxu0
    %2447 = vmatpush.bf16.msra.mxu0 %v2237
    %2448 = vmatpush.bf16.msra.mxu0 %v2235
    %2449 = vmatpush.bf16.msra.mxu0 %v2233
    %2450 = vmatpush.bf16.msra.mxu0 %v2231
    %2451 = vmatpush.bf16.msra.mxu0 %v2229
    %2452 = vmatpush.bf16.msra.mxu0 %v2227
    %2453 = vmatpush.bf16.msra.mxu0 %v2225
    %2454 = vmatpush.bf16.msra.mxu0 %v2223
    %2455 = vmatmul.bf16.gmra.mxu0 %v2433
    %v2456 = vpop.f32.mrf.mxu0
    %v2457 = vadd.f32 0.0, %v2456
    %v2458 = vpop.f32.mrf.mxu0
    %2459 = vdwg.mxu0
    %v2460 = vadd.f32 %v2431, %v2444
    %v2461 = vxor.u32 %v2460, 2147483648
    %v2462 = vmul.f32 %v2461, 1.442695
    %v2463 = vpow.pop %v2462
    %v2464 = vadd.f32 %v2463, 1.0
    %v2465 = vrcp.pop %v2464
    %v2466 = vmul.f32 %v2464, %v2465
    %v2467 = vsub.f32 1.0, %v2466
    %v2468 = vmul.f32 %v2465, %v2467
    %v2469 = vadd.f32 %v2465, %v2468
    %vm2470 = vweird.f32 %v2464
    %vm2471 = vweird.f32 %v2465
    %vm2472 = vmor %vm2470, %vm2471
    %v2473 = vsel %vm2472, %v2465, %v2469
    %v2474 = vand.u32 2147483647, %v2464
    %vm2475 = vcmp.eq.f32.partialorder %v2474, 8.507059e+37
    %v2476 = vand.u32 %v2464, 2147483648
    %v2477 = vor.u32 1.1754944e-38, %v2476
    %v2478 = vsel %vm2475, %v2477, %v2473
    %v2479 = vmul.f32 1.0, %v2478
    %2480 = vrot.lane.b32.xlu0 %v2479, 64
    %v2481 = vpop.permute.xlu0 %2480
    %v2482 = vadd.f32 %v2457, %v2303
    %v2483 = vmul.f32 %v2479, %v2482
    %v2484 = vadd.f32 %v2432, %v2483
    %v2485 = vtanh.pop %v2484
    %v2486 = vsub.f32 1.0, %v2481
    %v2487 = vmul.f32 %v2486, %v2485
    %v2488 = vmul.f32 %v2481, %v2430
    %v2489 = vadd.f32 %v2487, %v2488
    %v2490 = vld [vmem:[%s899] sm:$0xff]
    %v2491 = vld [vmem:[%s899 + $0x8] sm:$0xff]
    %v2492 = vpack.c.bf16 %v2489, %v2489
    %2493 = vmatpush.bf16.msra.mxu0 %v2236
    %2494 = vmatpush.bf16.msra.mxu0 %v2234
    %2495 = vmatpush.bf16.msra.mxu0 %v2232
    %2496 = vmatpush.bf16.msra.mxu0 %v2230
    %2497 = vmatpush.bf16.msra.mxu0 %v2228
    %2498 = vmatpush.bf16.msra.mxu0 %v2226
    %2499 = vmatpush.bf16.msra.mxu0 %v2224
    %2500 = vmatpush.bf16.msra.mxu0 %v2222
    %2501 = vmatmul.bf16.gmra.mxu0 %v2492
    %v2502 = vpop.f32.mrf.mxu0
    %v2503 = vadd.f32 0.0, %v2502
    %v2504 = vpop.f32.mrf.mxu0
    %2505 = vdwg.mxu0
    %2506 = vmatpush.bf16.msra.mxu0 %v2237
    %2507 = vmatpush.bf16.msra.mxu0 %v2235
    %2508 = vmatpush.bf16.msra.mxu0 %v2233
    %2509 = vmatpush.bf16.msra.mxu0 %v2231
    %2510 = vmatpush.bf16.msra.mxu0 %v2229
    %2511 = vmatpush.bf16.msra.mxu0 %v2227
    %2512 = vmatpush.bf16.msra.mxu0 %v2225
    %2513 = vmatpush.bf16.msra.mxu0 %v2223
    %2514 = vmatmul.bf16.gmra.mxu0 %v2492
    %v2515 = vpop.f32.mrf.mxu0
    %v2516 = vadd.f32 0.0, %v2515
    %v2517 = vpop.f32.mrf.mxu0
    %2518 = vdwg.mxu0
    %v2519 = vadd.f32 %v2490, %v2503
    %v2520 = vxor.u32 %v2519, 2147483648
    %v2521 = vmul.f32 %v2520, 1.442695
    %v2522 = vpow.pop %v2521
    %v2523 = vadd.f32 %v2522, 1.0
    %v2524 = vrcp.pop %v2523
    %v2525 = vmul.f32 %v2523, %v2524
    %v2526 = vsub.f32 1.0, %v2525
    %v2527 = vmul.f32 %v2524, %v2526
    %v2528 = vadd.f32 %v2524, %v2527
    %vm2529 = vweird.f32 %v2523
    %vm2530 = vweird.f32 %v2524
    %vm2531 = vmor %vm2529, %vm2530
    %v2532 = vsel %vm2531, %v2524, %v2528
    %v2533 = vand.u32 2147483647, %v2523
    %vm2534 = vcmp.eq.f32.partialorder %v2533, 8.507059e+37
    %v2535 = vand.u32 %v2523, 2147483648
    %v2536 = vor.u32 1.1754944e-38, %v2535
    %v2537 = vsel %vm2534, %v2536, %v2532
    %v2538 = vmul.f32 1.0, %v2537
    %2539 = vrot.lane.b32.xlu0 %v2538, 64
    %v2540 = vpop.permute.xlu0 %2539
    %v2541 = vadd.f32 %v2516, %v2303
    %v2542 = vmul.f32 %v2538, %v2541
    %v2543 = vadd.f32 %v2491, %v2542
    %v2544 = vtanh.pop %v2543
    %v2545 = vsub.f32 1.0, %v2540
    %v2546 = vmul.f32 %v2545, %v2544
    %v2547 = vmul.f32 %v2540, %v2489
    %v2548 = vadd.f32 %v2546, %v2547
    %v2549 = vld [vmem:[%s989] sm:$0xff]
    %v2550 = vld [vmem:[%s989 + $0x8] sm:$0xff]
    %v2551 = vpack.c.bf16 %v2548, %v2548
    %2552 = vmatpush.bf16.msra.mxu0 %v2236
    %2553 = vmatpush.bf16.msra.mxu0 %v2234
    %2554 = vmatpush.bf16.msra.mxu0 %v2232
    %2555 = vmatpush.bf16.msra.mxu0 %v2230
    %2556 = vmatpush.bf16.msra.mxu0 %v2228
    %2557 = vmatpush.bf16.msra.mxu0 %v2226
    %2558 = vmatpush.bf16.msra.mxu0 %v2224
    %2559 = vmatpush.bf16.msra.mxu0 %v2222
    %2560 = vmatmul.bf16.gmra.mxu0 %v2551
    %v2561 = vpop.f32.mrf.mxu0
    %v2562 = vadd.f32 0.0, %v2561
    %v2563 = vpop.f32.mrf.mxu0
    %2564 = vdwg.mxu0
    %2565 = vmatpush.bf16.msra.mxu0 %v2237
    %2566 = vmatpush.bf16.msra.mxu0 %v2235
    %2567 = vmatpush.bf16.msra.mxu0 %v2233
    %2568 = vmatpush.bf16.msra.mxu0 %v2231
    %2569 = vmatpush.bf16.msra.mxu0 %v2229
    %2570 = vmatpush.bf16.msra.mxu0 %v2227
    %2571 = vmatpush.bf16.msra.mxu0 %v2225
    %2572 = vmatpush.bf16.msra.mxu0 %v2223
    %2573 = vmatmul.bf16.gmra.mxu0 %v2551
    %v2574 = vpop.f32.mrf.mxu0
    %v2575 = vadd.f32 0.0, %v2574
    %v2576 = vpop.f32.mrf.mxu0
    %2577 = vdwg.mxu0
    %v2578 = vadd.f32 %v2549, %v2562
    %v2579 = vxor.u32 %v2578, 2147483648
    %v2580 = vmul.f32 %v2579, 1.442695
    %v2581 = vpow.pop %v2580
    %v2582 = vadd.f32 %v2581, 1.0
    %v2583 = vrcp.pop %v2582
    %v2584 = vmul.f32 %v2582, %v2583
    %v2585 = vsub.f32 1.0, %v2584
    %v2586 = vmul.f32 %v2583, %v2585
    %v2587 = vadd.f32 %v2583, %v2586
    %vm2588 = vweird.f32 %v2582
    %vm2589 = vweird.f32 %v2583
    %vm2590 = vmor %vm2588, %vm2589
    %v2591 = vsel %vm2590, %v2583, %v2587
    %v2592 = vand.u32 2147483647, %v2582
    %vm2593 = vcmp.eq.f32.partialorder %v2592, 8.507059e+37
    %v2594 = vand.u32 %v2582, 2147483648
    %v2595 = vor.u32 1.1754944e-38, %v2594
    %v2596 = vsel %vm2593, %v2595, %v2591
    %v2597 = vmul.f32 1.0, %v2596
    %2598 = vrot.lane.b32.xlu0 %v2597, 64
    %v2599 = vpop.permute.xlu0 %2598
    %v2600 = vadd.f32 %v2575, %v2303
    %v2601 = vmul.f32 %v2597, %v2600
    %v2602 = vadd.f32 %v2550, %v2601
    %v2603 = vtanh.pop %v2602
    %v2604 = vsub.f32 1.0, %v2599
    %v2605 = vmul.f32 %v2604, %v2603
    %v2606 = vmul.f32 %v2599, %v2548
    %v2607 = vadd.f32 %v2605, %v2606
    %v2608 = vld [vmem:[%s1079] sm:$0xff]
    %v2609 = vld [vmem:[%s1079 + $0x8] sm:$0xff]
    %v2610 = vpack.c.bf16 %v2607, %v2607
    %2611 = vmatpush.bf16.msra.mxu0 %v2236
    %2612 = vmatpush.bf16.msra.mxu0 %v2234
    %2613 = vmatpush.bf16.msra.mxu0 %v2232
    %2614 = vmatpush.bf16.msra.mxu0 %v2230
    %2615 = vmatpush.bf16.msra.mxu0 %v2228
    %2616 = vmatpush.bf16.msra.mxu0 %v2226
    %2617 = vmatpush.bf16.msra.mxu0 %v2224
    %2618 = vmatpush.bf16.msra.mxu0 %v2222
    %2619 = vmatmul.bf16.gmra.mxu0 %v2610
    %v2620 = vpop.f32.mrf.mxu0
    %v2621 = vadd.f32 0.0, %v2620
    %v2622 = vpop.f32.mrf.mxu0
    %2623 = vdwg.mxu0
    %2624 = vmatpush.bf16.msra.mxu0 %v2237
    %2625 = vmatpush.bf16.msra.mxu0 %v2235
    %2626 = vmatpush.bf16.msra.mxu0 %v2233
    %2627 = vmatpush.bf16.msra.mxu0 %v2231
    %2628 = vmatpush.bf16.msra.mxu0 %v2229
    %2629 = vmatpush.bf16.msra.mxu0 %v2227
    %2630 = vmatpush.bf16.msra.mxu0 %v2225
    %2631 = vmatpush.bf16.msra.mxu0 %v2223
    %2632 = vmatmul.bf16.gmra.mxu0 %v2610
    %v2633 = vpop.f32.mrf.mxu0
    %v2634 = vadd.f32 0.0, %v2633
    %v2635 = vpop.f32.mrf.mxu0
    %2636 = vdwg.mxu0
    %v2637 = vadd.f32 %v2608, %v2621
    %v2638 = vxor.u32 %v2637, 2147483648
    %v2639 = vmul.f32 %v2638, 1.442695
    %v2640 = vpow.pop %v2639
    %v2641 = vadd.f32 %v2640, 1.0
    %v2642 = vrcp.pop %v2641
    %v2643 = vmul.f32 %v2641, %v2642
    %v2644 = vsub.f32 1.0, %v2643
    %v2645 = vmul.f32 %v2642, %v2644
    %v2646 = vadd.f32 %v2642, %v2645
    %vm2647 = vweird.f32 %v2641
    %vm2648 = vweird.f32 %v2642
    %vm2649 = vmor %vm2647, %vm2648
    %v2650 = vsel %vm2649, %v2642, %v2646
    %v2651 = vand.u32 2147483647, %v2641
    %vm2652 = vcmp.eq.f32.partialorder %v2651, 8.507059e+37
    %v2653 = vand.u32 %v2641, 2147483648
    %v2654 = vor.u32 1.1754944e-38, %v2653
    %v2655 = vsel %vm2652, %v2654, %v2650
    %v2656 = vmul.f32 1.0, %v2655
    %2657 = vrot.lane.b32.xlu0 %v2656, 64
    %v2658 = vpop.permute.xlu0 %2657
    %v2659 = vadd.f32 %v2634, %v2303
    %v2660 = vmul.f32 %v2656, %v2659
    %v2661 = vadd.f32 %v2609, %v2660
    %v2662 = vtanh.pop %v2661
    %v2663 = vsub.f32 1.0, %v2658
    %v2664 = vmul.f32 %v2663, %v2662
    %v2665 = vmul.f32 %v2658, %v2607
    %v2666 = vadd.f32 %v2664, %v2665
    %v2667 = vld [vmem:[%s1169] sm:$0xff]
    %v2668 = vld [vmem:[%s1169 + $0x8] sm:$0xff]
    %v2669 = vpack.c.bf16 %v2666, %v2666
    %2670 = vmatpush.bf16.msra.mxu0 %v2236
    %2671 = vmatpush.bf16.msra.mxu0 %v2234
    %2672 = vmatpush.bf16.msra.mxu0 %v2232
    %2673 = vmatpush.bf16.msra.mxu0 %v2230
    %2674 = vmatpush.bf16.msra.mxu0 %v2228
    %2675 = vmatpush.bf16.msra.mxu0 %v2226
    %2676 = vmatpush.bf16.msra.mxu0 %v2224
    %2677 = vmatpush.bf16.msra.mxu0 %v2222
    %2678 = vmatmul.bf16.gmra.mxu0 %v2669
    %v2679 = vpop.f32.mrf.mxu0
    %v2680 = vadd.f32 0.0, %v2679
    %v2681 = vpop.f32.mrf.mxu0
    %2682 = vdwg.mxu0
    %2683 = vmatpush.bf16.msra.mxu0 %v2237
    %2684 = vmatpush.bf16.msra.mxu0 %v2235
    %2685 = vmatpush.bf16.msra.mxu0 %v2233
    %2686 = vmatpush.bf16.msra.mxu0 %v2231
    %2687 = vmatpush.bf16.msra.mxu0 %v2229
    %2688 = vmatpush.bf16.msra.mxu0 %v2227
    %2689 = vmatpush.bf16.msra.mxu0 %v2225
    %2690 = vmatpush.bf16.msra.mxu0 %v2223
    %2691 = vmatmul.bf16.gmra.mxu0 %v2669
    %v2692 = vpop.f32.mrf.mxu0
    %v2693 = vadd.f32 0.0, %v2692
    %v2694 = vpop.f32.mrf.mxu0
    %2695 = vdwg.mxu0
    %v2696 = vadd.f32 %v2667, %v2680
    %v2697 = vxor.u32 %v2696, 2147483648
    %v2698 = vmul.f32 %v2697, 1.442695
    %v2699 = vpow.pop %v2698
    %v2700 = vadd.f32 %v2699, 1.0
    %v2701 = vrcp.pop %v2700
    %v2702 = vmul.f32 %v2700, %v2701
    %v2703 = vsub.f32 1.0, %v2702
    %v2704 = vmul.f32 %v2701, %v2703
    %v2705 = vadd.f32 %v2701, %v2704
    %vm2706 = vweird.f32 %v2700
    %vm2707 = vweird.f32 %v2701
    %vm2708 = vmor %vm2706, %vm2707
    %v2709 = vsel %vm2708, %v2701, %v2705
    %v2710 = vand.u32 2147483647, %v2700
    %vm2711 = vcmp.eq.f32.partialorder %v2710, 8.507059e+37
    %v2712 = vand.u32 %v2700, 2147483648
    %v2713 = vor.u32 1.1754944e-38, %v2712
    %v2714 = vsel %vm2711, %v2713, %v2709
    %v2715 = vmul.f32 1.0, %v2714
    %2716 = vrot.lane.b32.xlu0 %v2715, 64
    %v2717 = vpop.permute.xlu0 %2716
    %v2718 = vadd.f32 %v2693, %v2303
    %v2719 = vmul.f32 %v2715, %v2718
    %v2720 = vadd.f32 %v2668, %v2719
    %v2721 = vtanh.pop %v2720
    %v2722 = vsub.f32 1.0, %v2717
    %v2723 = vmul.f32 %v2722, %v2721
    %v2724 = vmul.f32 %v2717, %v2666
    %v2725 = vadd.f32 %v2723, %v2724
    %v2726 = vpack.c.bf16 %v2725, %v2725
    %v2727 = vld [vmem:[#allocation12] sm:$0xf]
    %v2728 = vld [vmem:[#allocation12 + $0x4] sm:$0xf]
    %v2729 = vld [vmem:[#allocation12 + $0x8] sm:$0xf]
    %v2730 = vld [vmem:[#allocation12 + $0xc] sm:$0xf]
    %v2731 = vld [vmem:[#allocation12 + $0x10] sm:$0xf]
    %v2732 = vld [vmem:[#allocation12 + $0x14] sm:$0xf]
    %v2733 = vld [vmem:[#allocation12 + $0x18] sm:$0xf]
    %v2734 = vld [vmem:[#allocation12 + $0x1c] sm:$0xf]
    %v2735 = vld [vmem:[#allocation12 + $0x20] sm:$0xf]
    %v2736 = vld [vmem:[#allocation12 + $0x24] sm:$0xf]
    %v2737 = vld [vmem:[#allocation12 + $0x28] sm:$0xf]
    %v2738 = vld [vmem:[#allocation12 + $0x2c] sm:$0xf]
    %v2739 = vld [vmem:[#allocation12 + $0x30] sm:$0xf]
    %v2740 = vld [vmem:[#allocation12 + $0x34] sm:$0xf]
    %v2741 = vld [vmem:[#allocation12 + $0x38] sm:$0xf]
    %v2742 = vld [vmem:[#allocation12 + $0x3c] sm:$0xf]
    %v2743 = vld [vmem:[%s14] sm:$0x1]
    %v2745 = vperm.slane %v2743, 0
    %v2763 = vunpack.c.l.b16 %v2727
    %v2764 = vunpack.c.l.b16 %v2728
    %v2765 = vunpack.c.l.b16 %v2729
    %v2766 = vunpack.c.l.b16 %v2730
    %v2767 = vunpack.c.l.b16 %v2731
    %v2768 = vunpack.c.l.b16 %v2732
    %v2769 = vunpack.c.l.b16 %v2733
    %v2770 = vunpack.c.l.b16 %v2734
    %v2771 = vunpack.c.l.b16 %v2735
    %v2772 = vunpack.c.l.b16 %v2736
    %v2773 = vunpack.c.l.b16 %v2737
    %v2774 = vunpack.c.l.b16 %v2738
    %v2775 = vunpack.c.l.b16 %v2739
    %v2776 = vunpack.c.l.b16 %v2740
    %v2777 = vunpack.c.l.b16 %v2741
    %v2778 = vunpack.c.l.b16 %v2742
    %v2779 = vpack.c.b16 %v2764, %v2763
    %v2780 = vpack.c.b16 %v2766, %v2765
    %v2781 = vpack.c.b16 %v2768, %v2767
    %v2782 = vpack.c.b16 %v2770, %v2769
    %v2783 = vpack.c.b16 %v2772, %v2771
    %v2784 = vpack.c.b16 %v2774, %v2773
    %v2785 = vpack.c.b16 %v2776, %v2775
    %v2786 = vpack.c.b16 %v2778, %v2777
    %2795 = vmatpush.bf16.msra.mxu0 %v2786
    %2796 = vmatpush.bf16.msra.mxu0 %v2785
    %2797 = vmatpush.bf16.msra.mxu0 %v2784
    %2798 = vmatpush.bf16.msra.mxu0 %v2783
    %2799 = vmatpush.bf16.msra.mxu0 %v2782
    %2800 = vmatpush.bf16.msra.mxu0 %v2781
    %2801 = vmatpush.bf16.msra.mxu0 %v2780
    %2802 = vmatpush.bf16.msra.mxu0 %v2779
    %2803 = vmatmul.bf16.gmra.mxu0 %v2726
    %v2804 = vpop.f32.mrf.mxu0
    %v2805 = vadd.f32 %v2745, %v2804
    %v2806 = vpop.f32.mrf.mxu0
    %2807 = vdwg.mxu0
    %v2808 = vmax.f32 %v2805, 0.0
    %v2809 = vpack.c.bf16 %v2808, %v2808
    %v2810 = vld [vmem:[#allocation14] sm:$0xf]
    %v2811 = vld [vmem:[#allocation14 + $0x4] sm:$0xf]
    %v2812 = vld [vmem:[#allocation14 + $0x8] sm:$0xf]
    %v2813 = vld [vmem:[#allocation14 + $0xc] sm:$0xf]
    %v2814 = vld [vmem:[#allocation14 + $0x10] sm:$0xf]
    %v2815 = vld [vmem:[#allocation14 + $0x14] sm:$0xf]
    %v2816 = vld [vmem:[#allocation14 + $0x18] sm:$0xf]
    %v2817 = vld [vmem:[#allocation14 + $0x1c] sm:$0xf]
    %v2818 = vld [vmem:[#allocation14 + $0x20] sm:$0xf]
    %v2819 = vld [vmem:[#allocation14 + $0x24] sm:$0xf]
    %v2820 = vld [vmem:[#allocation14 + $0x28] sm:$0xf]
    %v2821 = vld [vmem:[#allocation14 + $0x2c] sm:$0xf]
    %v2822 = vld [vmem:[#allocation14 + $0x30] sm:$0xf]
    %v2823 = vld [vmem:[#allocation14 + $0x34] sm:$0xf]
    %v2824 = vld [vmem:[#allocation14 + $0x38] sm:$0xf]
    %v2825 = vld [vmem:[#allocation14 + $0x3c] sm:$0xf]
    %v2826 = vld [vmem:[%s16] sm:$0x1]
    %v2828 = vperm.slane %v2826, 0
    %v2846 = vunpack.c.l.b16 %v2810
    %v2847 = vunpack.c.l.b16 %v2811
    %v2848 = vunpack.c.l.b16 %v2812
    %v2849 = vunpack.c.l.b16 %v2813
    %v2850 = vunpack.c.l.b16 %v2814
    %v2851 = vunpack.c.l.b16 %v2815
    %v2852 = vunpack.c.l.b16 %v2816
    %v2853 = vunpack.c.l.b16 %v2817
    %v2854 = vunpack.c.l.b16 %v2818
    %v2855 = vunpack.c.l.b16 %v2819
    %v2856 = vunpack.c.l.b16 %v2820
    %v2857 = vunpack.c.l.b16 %v2821
    %v2858 = vunpack.c.l.b16 %v2822
    %v2859 = vunpack.c.l.b16 %v2823
    %v2860 = vunpack.c.l.b16 %v2824
    %v2861 = vunpack.c.l.b16 %v2825
    %v2862 = vpack.c.b16 %v2847, %v2846
    %v2863 = vpack.c.b16 %v2849, %v2848
    %v2864 = vpack.c.b16 %v2851, %v2850
    %v2865 = vpack.c.b16 %v2853, %v2852
    %v2866 = vpack.c.b16 %v2855, %v2854
    %v2867 = vpack.c.b16 %v2857, %v2856
    %v2868 = vpack.c.b16 %v2859, %v2858
    %v2869 = vpack.c.b16 %v2861, %v2860
    %2878 = vmatpush.bf16.msra.mxu0 %v2869
    %2879 = vmatpush.bf16.msra.mxu0 %v2868
    %2880 = vmatpush.bf16.msra.mxu0 %v2867
    %2881 = vmatpush.bf16.msra.mxu0 %v2866
    %2882 = vmatpush.bf16.msra.mxu0 %v2865
    %2883 = vmatpush.bf16.msra.mxu0 %v2864
    %2884 = vmatpush.bf16.msra.mxu0 %v2863
    %2885 = vmatpush.bf16.msra.mxu0 %v2862
    %2886 = vmatmul.bf16.gmra.mxu0 %v2809
    %v2887 = vpop.f32.mrf.mxu0
    %v2888 = vadd.f32 %v2828, %v2887
    %v2889 = vpop.f32.mrf.mxu0
    %2890 = vdwg.mxu0
    %v2891 = vmax.f32 %v2888, 0.0
    %v2892 = vpack.c.bf16 %v2891, %v2891
    %v2893 = vld [vmem:[#allocation15] sm:$0xf]
    %v2894 = vld [vmem:[#allocation15 + $0x4] sm:$0xf]
    %v2895 = vld [vmem:[#allocation15 + $0x8] sm:$0xf]
    %v2896 = vld [vmem:[#allocation15 + $0xc] sm:$0xf]
    %v2897 = vld [vmem:[#allocation15 + $0x10] sm:$0xf]
    %v2898 = vld [vmem:[#allocation15 + $0x14] sm:$0xf]
    %v2899 = vld [vmem:[#allocation15 + $0x18] sm:$0xf]
    %v2900 = vld [vmem:[#allocation15 + $0x1c] sm:$0xf]
    %v2901 = vld [vmem:[#allocation15 + $0x20] sm:$0xf]
    %v2902 = vld [vmem:[#allocation15 + $0x24] sm:$0xf]
    %v2903 = vld [vmem:[#allocation15 + $0x28] sm:$0xf]
    %v2904 = vld [vmem:[#allocation15 + $0x2c] sm:$0xf]
    %v2905 = vld [vmem:[#allocation15 + $0x30] sm:$0xf]
    %v2906 = vld [vmem:[#allocation15 + $0x34] sm:$0xf]
    %v2907 = vld [vmem:[#allocation15 + $0x38] sm:$0xf]
    %v2908 = vld [vmem:[#allocation15 + $0x3c] sm:$0xf]
    %v2909 = vld [vmem:[%s18] sm:$0x1]
    %v2911 = vperm.slane %v2909, 0
    %v2929 = vunpack.c.l.b16 %v2893
    %v2930 = vunpack.c.l.b16 %v2894
    %v2931 = vunpack.c.l.b16 %v2895
    %v2932 = vunpack.c.l.b16 %v2896
    %v2933 = vunpack.c.l.b16 %v2897
    %v2934 = vunpack.c.l.b16 %v2898
    %v2935 = vunpack.c.l.b16 %v2899
    %v2936 = vunpack.c.l.b16 %v2900
    %v2937 = vunpack.c.l.b16 %v2901
    %v2938 = vunpack.c.l.b16 %v2902
    %v2939 = vunpack.c.l.b16 %v2903
    %v2940 = vunpack.c.l.b16 %v2904
    %v2941 = vunpack.c.l.b16 %v2905
    %v2942 = vunpack.c.l.b16 %v2906
    %v2943 = vunpack.c.l.b16 %v2907
    %v2944 = vunpack.c.l.b16 %v2908
    %v2945 = vpack.c.b16 %v2930, %v2929
    %v2946 = vpack.c.b16 %v2932, %v2931
    %v2947 = vpack.c.b16 %v2934, %v2933
    %v2948 = vpack.c.b16 %v2936, %v2935
    %v2949 = vpack.c.b16 %v2938, %v2937
    %v2950 = vpack.c.b16 %v2940, %v2939
    %v2951 = vpack.c.b16 %v2942, %v2941
    %v2952 = vpack.c.b16 %v2944, %v2943
    %2961 = vmatpush.bf16.msra.mxu0 %v2952
    %2962 = vmatpush.bf16.msra.mxu0 %v2951
    %2963 = vmatpush.bf16.msra.mxu0 %v2950
    %2964 = vmatpush.bf16.msra.mxu0 %v2949
    %2965 = vmatpush.bf16.msra.mxu0 %v2948
    %2966 = vmatpush.bf16.msra.mxu0 %v2947
    %2967 = vmatpush.bf16.msra.mxu0 %v2946
    %2968 = vmatpush.bf16.msra.mxu0 %v2945
    %2969 = vmatmul.bf16.gmra.mxu0 %v2892
    %v2970 = vpop.f32.mrf.mxu0
    %v2971 = vadd.f32 %v2911, %v2970
    %v2972 = vpop.f32.mrf.mxu0
    %2973 = vdwg.mxu0
    %2974 = vst [vmem:[#allocation17] sm:$0xff] %v2971
    // Predicated region
    $region110: #{tpu_custom_call.1} parent=1 // pred_check
      _
    $region111: #{tpu_custom_call.1} parent=1 // pred_check_branch
      %2976 = sbr.rel (0) target = $region113
    $region112: #{tpu_custom_call.1} parent=1 // pred_region
      %2978 = vsyncadd [#allocation5], 0
      %s2980 = sshll.u32 [#allocation17], 4
      %s2981 = int_to_ptr.vmem [resolvable:$true] %s2980
      %s2982 = sshll.u32 %s19, 4
      %s2983 = int_to_ptr.hbm [resolvable:$true] %s2982
      %2985 = dma.vmem_to_hbm [thread:$0]  %s2981, 128, %s2983, [#allocation5]
    $region113: #{tpu_custom_call.1} parent=1 // pred_fallthru
      _
    // Predicated region
    $region114: #{tpu_custom_call.1} parent=1 // pred_check
      _
    $region115: #{tpu_custom_call.1} parent=1 // pred_check_branch
      %2987 = sbr.rel (0) target = $region117
    $region116: #{tpu_custom_call.1} parent=1 // pred_region
      %2989 = dma.done [#allocation5], 128
    $region117: #{tpu_custom_call.1} parent=1 // pred_fallthru
      _
    %2990 = vsyncpa [#allocation4], 1
    %2991 = vsyncpa [#allocation7], 1
    %2992 = vsyncpa [#allocation10], 1
    %2993 = vsyncpa [#allocation13], 1
    %2994 = vsyncpa [#allocation16], 1
    %2995 = vsyncpa [#allocation5], 1

</llo_original>
